<compile_context>
chip_gen: v7x
topology: tpu7x:2x2x1
jax: 0.10.0
libtpu: 0.0.40
codegen_flags: <defaults>
</compile_context>

<pallas_src>
import functools

import jax
import jax.numpy as jnp
from jax.experimental import pallas as pl
from jax.experimental.pallas import tpu as pltpu

LAYER_DIMS = [1568, 256, 128, 64, 128, 256, 1568]
IN_F = LAYER_DIMS[0]


def _round_up(n, m):
    return ((n + m - 1) // m) * m


def _denoiser_kernel(x_ref,
                     w1, b1, w2, b2, w3, b3,
                     w4, b4, w5, b5, w6, b6,
                     o_ref):
    """Full autoencoder forward on one (tb, 1568) batch tile.

    The f32 input tile is cast to bf16 in-kernel (MXU-native operands); all
    matmuls accumulate in f32; bias add, ReLU and sigmoid stay in f32
    (v5e's VPU/EUP have no bf16 path).
    """
    h = x_ref[...].astype(jnp.bfloat16)

    def linear(h, w_ref, b_ref):
        return jnp.dot(h, w_ref[...], preferred_element_type=jnp.float32) + b_ref[...]

    def relu_bf16(z):
        # ReLU in f32, cast back to bf16 for the next MXU matmul.
        return jnp.maximum(z, 0.0).astype(jnp.bfloat16)

    # Encoder
    h = relu_bf16(linear(h, w1, b1))
    h = relu_bf16(linear(h, w2, b2))
    h = relu_bf16(linear(h, w3, b3))
    # Decoder
    h = relu_bf16(linear(h, w4, b4))
    h = relu_bf16(linear(h, w5, b5))
    z = linear(h, w6, b6)
    # sigmoid(z) == 0.5*tanh(z/2)+0.5: single EUP push per element on the
    # 1568-wide final layer and exact (no approx reciprocal in the output).
    o_ref[...] = (0.5 * jnp.tanh(0.5 * z) + 0.5).astype(o_ref.dtype)


def init_params(key):
    """f32 params mimicking nn.Linear's U(-1/sqrt(in), 1/sqrt(in)) init.

    Weights are stored as [in, out] (transposed vs PyTorch's [out, in]);
    biases are stored as [1, out] for clean in-kernel broadcasting.
    """
    params = []
    for i in range(len(LAYER_DIMS) - 1):
        fan_in, fan_out = LAYER_DIMS[i], LAYER_DIMS[i + 1]
        key, kw, kb = jax.random.split(key, 3)
        bound = 1.0 / jnp.sqrt(fan_in)
        w = jax.random.uniform(kw, (fan_in, fan_out), jnp.float32, -bound, bound)
        b = jax.random.uniform(kb, (1, fan_out), jnp.float32, -bound, bound)
        params.append((w, b))
    return params


def prepare_params(params):
    """Kernel-ready params: bf16 weights (MXU-native), f32 biases. No padding —
    the 1568 feature dim is handled directly (full-dim blocks)."""
    return [(w.astype(jnp.bfloat16), b.astype(jnp.float32)) for w, b in params]


def _pick_tb(batch, tb):
    """Round tb to the bf16 sublane multiple and guarantee >= 2 grid steps
    whenever the batch can be split, so both v7x TensorCores get work."""
    tb = _round_up(max(tb, 16), 16)
    tb = min(tb, max(16, _round_up((batch + 1) // 2, 16)))
    return tb


@functools.partial(jax.jit, static_argnames=("tb",))
def denoiser_forward(x, prepped_params, *, tb=512):
    """y = sigmoid(decoder(relu(encoder(x)))) for x: [B, 1568] f32 -> [B, 1568] f32."""
    B = x.shape[0]
    tb = _pick_tb(B, tb)
    grid = (pl.cdiv(B, tb),)
    flat = [p for wb in prepped_params for p in wb]

    # IO blocks: last dim == full array dim (1568), so the (8,128) rule is
    # satisfied; Pallas masks the ragged last batch tile (padded rows are
    # computed on and then discarded on store).
    io_spec = pl.BlockSpec((tb, IN_F), lambda i: (i, 0))
    # Constant index_map => each weight/bias is DMA'd exactly once and stays
    # VMEM-resident across all batch tiles.
    w_specs = [pl.BlockSpec(p.shape, lambda i: (0, 0)) for p in flat]

    # VMEM footprint (double-buffered f32 in/out tiles + ~3.5 MiB weights +
    # intermediates) is ~24 MiB at tb=512, fitting the 32 MiB default on every
    # generation (incl. v7x's 64 MiB physical). tb up to 1024 is for
    # v5e/v6e (128 MiB physical) and needs a raised scoped limit.
    vmem_limit = (32 << 20) if tb <= 512 else (80 << 20)

    return pl.pallas_call(
        _denoiser_kernel,
        out_shape=jax.ShapeDtypeStruct((B, IN_F), jnp.float32),
        grid=grid,
        in_specs=[io_spec] + w_specs,
        out_specs=io_spec,
        compiler_params=pltpu.CompilerParams(
            dimension_semantics=("parallel",),   # megacore sharding on v7x
            vmem_limit_bytes=vmem_limit,
        ),
    )(x, *flat)


def denoiser_reference_f32(x, params):
    """Exact f32 forward (the original module's semantics)."""
    h = x
    n = len(params)
    for i, (w, b) in enumerate(params):
        h = h @ w + b
        h = jnp.maximum(h, 0.0) if i < n - 1 else jax.nn.sigmoid(h)
    return h


def denoiser_reference_bf16(x, prepped_params):
    """Reference matching the kernel's numerics (bf16 matmul operands, f32 accum,
    tanh-form sigmoid)."""
    h = x.astype(jnp.bfloat16)
    n = len(prepped_params)
    for i, (w, b) in enumerate(prepped_params):
        z = jnp.dot(h, w, preferred_element_type=jnp.float32) + b
        if i < n - 1:
            h = jnp.maximum(z, 0.0).astype(jnp.bfloat16)
        else:
            h = 0.5 * jnp.tanh(0.5 * z) + 0.5
    return h


if __name__ == "__main__":
    key = jax.random.PRNGKey(0)
    key, kx = jax.random.split(key)
    params = init_params(key)
    prepped = prepare_params(params)

    # Deliberately not a tile multiple so the ragged (masked) last batch tile
    # and the multi-step pipelined grid are both exercised.
    B = 30
    x = jax.random.uniform(kx, (B, IN_F), jnp.float32)

    # Heuristic picks tb=16 here -> grid=(2,), resident weights, masked last tile.
    out = jax.block_until_ready(denoiser_forward(x, prepped))

    assert out.shape == (B, IN_F)
    ref_bf16 = jax.block_until_ready(denoiser_reference_bf16(x, prepped))
    ref_f32 = jax.block_until_ready(denoiser_reference_f32(x, params))
    # Tight check vs. a numerics-matched (bf16-matmul) reference; loose check vs.
    # the exact f32 module forward to confirm semantic fidelity.
    assert jnp.allclose(out, ref_bf16, atol=2e-3, rtol=2e-3)
    assert jnp.allclose(out, ref_f32, atol=5e-2, rtol=5e-2)
    print("KERNEL_OK")
</pallas_src>

<mosaic_0001>
module attributes {stable_mosaic.version = 11 : i64} {
  func.func @_denoiser_kernel(%arg0: i32, %arg1: memref<16x1568xf32, #tpu.memory_space<vmem>>, %arg2: memref<1568x256xbf16, #tpu.memory_space<vmem>>, %arg3: memref<1x256xf32, #tpu.memory_space<vmem>>, %arg4: memref<256x128xbf16, #tpu.memory_space<vmem>>, %arg5: memref<1x128xf32, #tpu.memory_space<vmem>>, %arg6: memref<128x64xbf16, #tpu.memory_space<vmem>>, %arg7: memref<1x64xf32, #tpu.memory_space<vmem>>, %arg8: memref<64x128xbf16, #tpu.memory_space<vmem>>, %arg9: memref<1x128xf32, #tpu.memory_space<vmem>>, %arg10: memref<128x256xbf16, #tpu.memory_space<vmem>>, %arg11: memref<1x256xf32, #tpu.memory_space<vmem>>, %arg12: memref<256x1568xbf16, #tpu.memory_space<vmem>>, %arg13: memref<1x1568xf32, #tpu.memory_space<vmem>>, %arg14: memref<16x1568xf32, #tpu.memory_space<vmem>>) attributes {dimension_semantics = [#tpu.dimension_semantics<parallel>], iteration_bounds = array<i64: 2>, scalar_prefetch = 0 : i64, scratch_operands = 0 : i64, tpu.core_type = #tpu.core_type<tc>, window_params = [{transform_indices = @transform_0, window_bounds = array<i64: 16, 1568>}, {pipeline_mode = #tpu.pipeline_mode<synchronous>, transform_indices = @transform_1, window_bounds = array<i64: 1568, 256>}, {pipeline_mode = #tpu.pipeline_mode<synchronous>, transform_indices = @transform_2, window_bounds = array<i64: 1, 256>}, {pipeline_mode = #tpu.pipeline_mode<synchronous>, transform_indices = @transform_3, window_bounds = array<i64: 256, 128>}, {pipeline_mode = #tpu.pipeline_mode<synchronous>, transform_indices = @transform_4, window_bounds = array<i64: 1, 128>}, {pipeline_mode = #tpu.pipeline_mode<synchronous>, transform_indices = @transform_5, window_bounds = array<i64: 128, 64>}, {pipeline_mode = #tpu.pipeline_mode<synchronous>, transform_indices = @transform_6, window_bounds = array<i64: 1, 64>}, {pipeline_mode = #tpu.pipeline_mode<synchronous>, transform_indices = @transform_7, window_bounds = array<i64: 64, 128>}, {pipeline_mode = #tpu.pipeline_mode<synchronous>, transform_indices = @transform_8, window_bounds = array<i64: 1, 128>}, {pipeline_mode = #tpu.pipeline_mode<synchronous>, transform_indices = @transform_9, window_bounds = array<i64: 128, 256>}, {pipeline_mode = #tpu.pipeline_mode<synchronous>, transform_indices = @transform_10, window_bounds = array<i64: 1, 256>}, {pipeline_mode = #tpu.pipeline_mode<synchronous>, transform_indices = @transform_11, window_bounds = array<i64: 256, 1568>}, {pipeline_mode = #tpu.pipeline_mode<synchronous>, transform_indices = @transform_12, window_bounds = array<i64: 1, 1568>}, {transform_indices = @transform_13, window_bounds = array<i64: 16, 1568>}]} {
    %c0 = arith.constant 0 : index
    %c0_0 = arith.constant 0 : index
    %0 = vector.load %arg1[%c0, %c0_0] : memref<16x1568xf32, #tpu.memory_space<vmem>>, vector<16x1568xf32>
    %1 = arith.truncf %0 : vector<16x1568xf32> to vector<16x1568xbf16>
    %c0_1 = arith.constant 0 : index
    %c0_2 = arith.constant 0 : index
    %2 = vector.load %arg2[%c0_1, %c0_2] : memref<1568x256xbf16, #tpu.memory_space<vmem>>, vector<1568x256xbf16>
    %cst = arith.constant dense<0.000000e+00> : vector<16x256xf32>
    %3 = tpu.matmul %1, %2, %cst {dimension_numbers = #tpu.dot_dimension_numbers<[1], [0], [0], [1], [0, 0, 1, 1], [], []>} : vector<16x1568xbf16>, vector<1568x256xbf16>, vector<16x256xf32> -> vector<16x256xf32>
    %c0_3 = arith.constant 0 : index
    %c0_4 = arith.constant 0 : index
    %4 = vector.load %arg3[%c0_3, %c0_4] : memref<1x256xf32, #tpu.memory_space<vmem>>, vector<1x256xf32>
    %5 = vector.broadcast %4 : vector<1x256xf32> to vector<16x256xf32>
    %6 = arith.addf %3, %5 : vector<16x256xf32>
    %cst_5 = arith.constant 0.000000e+00 : f32
    %7 = vector.broadcast %cst_5 : f32 to vector<16x256xf32>
    %8 = arith.maximumf %6, %7 : vector<16x256xf32>
    %9 = arith.truncf %8 : vector<16x256xf32> to vector<16x256xbf16>
    %c0_6 = arith.constant 0 : index
    %c0_7 = arith.constant 0 : index
    %10 = vector.load %arg4[%c0_6, %c0_7] : memref<256x128xbf16, #tpu.memory_space<vmem>>, vector<256x128xbf16>
    %cst_8 = arith.constant dense<0.000000e+00> : vector<16x128xf32>
    %11 = tpu.matmul %9, %10, %cst_8 {dimension_numbers = #tpu.dot_dimension_numbers<[1], [0], [0], [1], [0, 0, 1, 1], [], []>} : vector<16x256xbf16>, vector<256x128xbf16>, vector<16x128xf32> -> vector<16x128xf32>
    %c0_9 = arith.constant 0 : index
    %c0_10 = arith.constant 0 : index
    %12 = vector.load %arg5[%c0_9, %c0_10] : memref<1x128xf32, #tpu.memory_space<vmem>>, vector<1x128xf32>
    %13 = vector.broadcast %12 : vector<1x128xf32> to vector<16x128xf32>
    %14 = arith.addf %11, %13 : vector<16x128xf32>
    %cst_11 = arith.constant 0.000000e+00 : f32
    %15 = vector.broadcast %cst_11 : f32 to vector<16x128xf32>
    %16 = arith.maximumf %14, %15 : vector<16x128xf32>
    %17 = arith.truncf %16 : vector<16x128xf32> to vector<16x128xbf16>
    %c0_12 = arith.constant 0 : index
    %c0_13 = arith.constant 0 : index
    %18 = vector.load %arg6[%c0_12, %c0_13] : memref<128x64xbf16, #tpu.memory_space<vmem>>, vector<128x64xbf16>
    %cst_14 = arith.constant dense<0.000000e+00> : vector<16x64xf32>
    %19 = tpu.matmul %17, %18, %cst_14 {dimension_numbers = #tpu.dot_dimension_numbers<[1], [0], [0], [1], [0, 0, 1, 1], [], []>} : vector<16x128xbf16>, vector<128x64xbf16>, vector<16x64xf32> -> vector<16x64xf32>
    %c0_15 = arith.constant 0 : index
    %c0_16 = arith.constant 0 : index
    %20 = vector.load %arg7[%c0_15, %c0_16] : memref<1x64xf32, #tpu.memory_space<vmem>>, vector<1x64xf32>
    %21 = vector.broadcast %20 : vector<1x64xf32> to vector<16x64xf32>
    %22 = arith.addf %19, %21 : vector<16x64xf32>
    %cst_17 = arith.constant 0.000000e+00 : f32
    %23 = vector.broadcast %cst_17 : f32 to vector<16x64xf32>
    %24 = arith.maximumf %22, %23 : vector<16x64xf32>
    %25 = arith.truncf %24 : vector<16x64xf32> to vector<16x64xbf16>
    %c0_18 = arith.constant 0 : index
    %c0_19 = arith.constant 0 : index
    %26 = vector.load %arg8[%c0_18, %c0_19] : memref<64x128xbf16, #tpu.memory_space<vmem>>, vector<64x128xbf16>
    %cst_20 = arith.constant dense<0.000000e+00> : vector<16x128xf32>
    %27 = tpu.matmul %25, %26, %cst_20 {dimension_numbers = #tpu.dot_dimension_numbers<[1], [0], [0], [1], [0, 0, 1, 1], [], []>} : vector<16x64xbf16>, vector<64x128xbf16>, vector<16x128xf32> -> vector<16x128xf32>
    %c0_21 = arith.constant 0 : index
    %c0_22 = arith.constant 0 : index
    %28 = vector.load %arg9[%c0_21, %c0_22] : memref<1x128xf32, #tpu.memory_space<vmem>>, vector<1x128xf32>
    %29 = vector.broadcast %28 : vector<1x128xf32> to vector<16x128xf32>
    %30 = arith.addf %27, %29 : vector<16x128xf32>
    %cst_23 = arith.constant 0.000000e+00 : f32
    %31 = vector.broadcast %cst_23 : f32 to vector<16x128xf32>
    %32 = arith.maximumf %30, %31 : vector<16x128xf32>
    %33 = arith.truncf %32 : vector<16x128xf32> to vector<16x128xbf16>
    %c0_24 = arith.constant 0 : index
    %c0_25 = arith.constant 0 : index
    %34 = vector.load %arg10[%c0_24, %c0_25] : memref<128x256xbf16, #tpu.memory_space<vmem>>, vector<128x256xbf16>
    %cst_26 = arith.constant dense<0.000000e+00> : vector<16x256xf32>
    %35 = tpu.matmul %33, %34, %cst_26 {dimension_numbers = #tpu.dot_dimension_numbers<[1], [0], [0], [1], [0, 0, 1, 1], [], []>} : vector<16x128xbf16>, vector<128x256xbf16>, vector<16x256xf32> -> vector<16x256xf32>
    %c0_27 = arith.constant 0 : index
    %c0_28 = arith.constant 0 : index
    %36 = vector.load %arg11[%c0_27, %c0_28] : memref<1x256xf32, #tpu.memory_space<vmem>>, vector<1x256xf32>
    %37 = vector.broadcast %36 : vector<1x256xf32> to vector<16x256xf32>
    %38 = arith.addf %35, %37 : vector<16x256xf32>
    %cst_29 = arith.constant 0.000000e+00 : f32
    %39 = vector.broadcast %cst_29 : f32 to vector<16x256xf32>
    %40 = arith.maximumf %38, %39 : vector<16x256xf32>
    %41 = arith.truncf %40 : vector<16x256xf32> to vector<16x256xbf16>
    %c0_30 = arith.constant 0 : index
    %c0_31 = arith.constant 0 : index
    %42 = vector.load %arg12[%c0_30, %c0_31] : memref<256x1568xbf16, #tpu.memory_space<vmem>>, vector<256x1568xbf16>
    %cst_32 = arith.constant dense<0.000000e+00> : vector<16x1568xf32>
    %43 = tpu.matmul %41, %42, %cst_32 {dimension_numbers = #tpu.dot_dimension_numbers<[1], [0], [0], [1], [0, 0, 1, 1], [], []>} : vector<16x256xbf16>, vector<256x1568xbf16>, vector<16x1568xf32> -> vector<16x1568xf32>
    %c0_33 = arith.constant 0 : index
    %c0_34 = arith.constant 0 : index
    %44 = vector.load %arg13[%c0_33, %c0_34] : memref<1x1568xf32, #tpu.memory_space<vmem>>, vector<1x1568xf32>
    %45 = vector.broadcast %44 : vector<1x1568xf32> to vector<16x1568xf32>
    %46 = arith.addf %43, %45 : vector<16x1568xf32>
    %cst_35 = arith.constant 5.000000e-01 : f32
    %47 = vector.broadcast %cst_35 : f32 to vector<16x1568xf32>
    %48 = arith.mulf %47, %46 : vector<16x1568xf32>
    %49 = math.tanh %48 : vector<16x1568xf32>
    %cst_36 = arith.constant 5.000000e-01 : f32
    %50 = vector.broadcast %cst_36 : f32 to vector<16x1568xf32>
    %51 = arith.mulf %50, %49 : vector<16x1568xf32>
    %cst_37 = arith.constant 5.000000e-01 : f32
    %52 = vector.broadcast %cst_37 : f32 to vector<16x1568xf32>
    %53 = arith.addf %51, %52 : vector<16x1568xf32>
    %c0_38 = arith.constant 0 : index
    %c0_39 = arith.constant 0 : index
    %54 = vector.load %arg14[%c0_38, %c0_39] : memref<16x1568xf32, #tpu.memory_space<vmem>>, vector<16x1568xf32>
    tpu.vector_store %arg14[%c0_38, %c0_39], %53 {strides = array<i32>} : memref<16x1568xf32, #tpu.memory_space<vmem>>, vector<16x1568xf32>,
    return
  }
  func.func @transform_0(%arg0: i32) -> (i32, i32) {
    %c0_i32 = arith.constant 0 : i32
    %c0_i32_0 = arith.constant 0 : i32
    return %arg0, %c0_i32 : i32, i32
  }
  func.func @transform_1(%arg0: i32) -> (i32, i32) {
    %c0_i32 = arith.constant 0 : i32
    %c0_i32_0 = arith.constant 0 : i32
    %c0_i32_1 = arith.constant 0 : i32
    return %c0_i32, %c0_i32_0 : i32, i32
  }
  func.func @transform_2(%arg0: i32) -> (i32, i32) {
    %c0_i32 = arith.constant 0 : i32
    %c0_i32_0 = arith.constant 0 : i32
    %c0_i32_1 = arith.constant 0 : i32
    return %c0_i32, %c0_i32_0 : i32, i32
  }
  func.func @transform_3(%arg0: i32) -> (i32, i32) {
    %c0_i32 = arith.constant 0 : i32
    %c0_i32_0 = arith.constant 0 : i32
    %c0_i32_1 = arith.constant 0 : i32
    return %c0_i32, %c0_i32_0 : i32, i32
  }
  func.func @transform_4(%arg0: i32) -> (i32, i32) {
    %c0_i32 = arith.constant 0 : i32
    %c0_i32_0 = arith.constant 0 : i32
    %c0_i32_1 = arith.constant 0 : i32
    return %c0_i32, %c0_i32_0 : i32, i32
  }
  func.func @transform_5(%arg0: i32) -> (i32, i32) {
    %c0_i32 = arith.constant 0 : i32
    %c0_i32_0 = arith.constant 0 : i32
    %c0_i32_1 = arith.constant 0 : i32
    return %c0_i32, %c0_i32_0 : i32, i32
  }
  func.func @transform_6(%arg0: i32) -> (i32, i32) {
    %c0_i32 = arith.constant 0 : i32
    %c0_i32_0 = arith.constant 0 : i32
    %c0_i32_1 = arith.constant 0 : i32
    return %c0_i32, %c0_i32_0 : i32, i32
  }
  func.func @transform_7(%arg0: i32) -> (i32, i32) {
    %c0_i32 = arith.constant 0 : i32
    %c0_i32_0 = arith.constant 0 : i32
    %c0_i32_1 = arith.constant 0 : i32
    return %c0_i32, %c0_i32_0 : i32, i32
  }
  func.func @transform_8(%arg0: i32) -> (i32, i32) {
    %c0_i32 = arith.constant 0 : i32
    %c0_i32_0 = arith.constant 0 : i32
    %c0_i32_1 = arith.constant 0 : i32
    return %c0_i32, %c0_i32_0 : i32, i32
  }
  func.func @transform_9(%arg0: i32) -> (i32, i32) {
    %c0_i32 = arith.constant 0 : i32
    %c0_i32_0 = arith.constant 0 : i32
    %c0_i32_1 = arith.constant 0 : i32
    return %c0_i32, %c0_i32_0 : i32, i32
  }
  func.func @transform_10(%arg0: i32) -> (i32, i32) {
    %c0_i32 = arith.constant 0 : i32
    %c0_i32_0 = arith.constant 0 : i32
    %c0_i32_1 = arith.constant 0 : i32
    return %c0_i32, %c0_i32_0 : i32, i32
  }
  func.func @transform_11(%arg0: i32) -> (i32, i32) {
    %c0_i32 = arith.constant 0 : i32
    %c0_i32_0 = arith.constant 0 : i32
    %c0_i32_1 = arith.constant 0 : i32
    return %c0_i32, %c0_i32_0 : i32, i32
  }
  func.func @transform_12(%arg0: i32) -> (i32, i32) {
    %c0_i32 = arith.constant 0 : i32
    %c0_i32_0 = arith.constant 0 : i32
    %c0_i32_1 = arith.constant 0 : i32
    return %c0_i32, %c0_i32_0 : i32, i32
  }
  func.func @transform_13(%arg0: i32) -> (i32, i32) {
    %c0_i32 = arith.constant 0 : i32
    %c0_i32_0 = arith.constant 0 : i32
    return %arg0, %c0_i32 : i32, i32
  }
}

</mosaic_0001>

<llo_original>
// kernel: denoiser_forward.1
$region0: #{denoiser_forward.1}
  #allocation0 [shape = 'u32[]', space=smem, size = 0x4, offset = 0x4, fixed_abs, tag = 'smem constant byte address 0x4 - core index']
  #allocation1 [shape = 'u32[144,128]{1,0:T(1,128)}', space=vmem, size = 0x12000, scoped, tag = 'internal scratch']
  %s0 = inlined_call_operand.vmem [shape: f32[30,1568], index: 0, kind: input, shape index: {}]
  %s1 = inlined_call_operand.vmem [shape: bf16[1568,256], index: 1, kind: input, shape index: {}]
  %s2 = inlined_call_operand.vmem [shape: f32[1,256], index: 2, kind: input, shape index: {}]
  %s3 = inlined_call_operand.vmem [shape: bf16[256,128], index: 3, kind: input, shape index: {}]
  %s4 = inlined_call_operand.vmem [shape: f32[1,128], index: 4, kind: input, shape index: {}]
  %s5 = inlined_call_operand.vmem [shape: bf16[128,64], index: 5, kind: input, shape index: {}]
  %s6 = inlined_call_operand.vmem [shape: f32[1,64], index: 6, kind: input, shape index: {}]
  %s7 = inlined_call_operand.vmem [shape: bf16[64,128], index: 7, kind: input, shape index: {}]
  %s8 = inlined_call_operand.vmem [shape: f32[1,128], index: 8, kind: input, shape index: {}]
  %s9 = inlined_call_operand.vmem [shape: bf16[128,256], index: 9, kind: input, shape index: {}]
  %s10 = inlined_call_operand.vmem [shape: f32[1,256], index: 10, kind: input, shape index: {}]
  %s11 = inlined_call_operand.vmem [shape: bf16[256,1568], index: 11, kind: input, shape index: {}]
  %s12 = inlined_call_operand.vmem [shape: f32[1,1568], index: 12, kind: input, shape index: {}]
  %s13 = inlined_call_operand.hbm [shape: f32[30,1568], index: 13, kind: output, shape index: {}]
  %s14 = sld [smem:[#allocation0]]
  $region85: #{denoiser_forward.1} parent=0
    _
  %s16 = ssub.s32 1, %s14
  %s17 = scalar_select 0, %s16, %s14
  $region1: #{denoiser_forward.1} parent=0
    #allocation2 [shape = 'u8[212992]{0}', space=vmem, size = 0x34000, scoped, tag = 'output window, operand 0']
    #allocation3 [shape = 's32[2]{0}', space=sflag, size = 0x8, scoped, tag = 'scoped memory for denoiser_forward.1']
    %18 = vsyncpa [#allocation3], 0
    %s19 = scalar_lea.sflag [#allocation3], 1
    %20 = vsyncpa %s19, 0
    loop: start=0, step=1, limit=4
    $region2: #{denoiser_forward.1} parent=1 // loop_pre_header
      _
    $region3: #{denoiser_forward.1} parent=1 // loop_header
      %s22 = sphi 0, %s26
      %p23 = scmp.ge.s32.totalorder %s22, 4
      %s32 = sphi 0, %s34
      %s35 = sphi 0, %s32
      %s36 = sphi 0, %s35
      %s52 = sphi 0, %s36
      %s56 = sphi 0, %s56
      %s58 = sphi 0, %s56
      %s59 = sphi 0, %s58
      %s73 = sphi 0, %s59
      %s77 = sphi 0, %s77
      %s79 = sphi 0, %s77
      %s80 = sphi 0, %s79
      %s94 = sphi 0, %s80
      %s98 = sphi 0, %s98
      %s100 = sphi 0, %s98
      %s101 = sphi 0, %s100
      %s115 = sphi 0, %s101
      %s119 = sphi 0, %s119
      %s121 = sphi 0, %s119
      %s122 = sphi 0, %s121
      %s136 = sphi 0, %s122
      %s140 = sphi 0, %s140
      %s142 = sphi 0, %s140
      %s143 = sphi 0, %s142
      %s157 = sphi 0, %s143
      %s161 = sphi 0, %s161
      %s163 = sphi 0, %s161
      %s164 = sphi 0, %s163
      %s178 = sphi 0, %s164
      %s182 = sphi 0, %s182
      %s184 = sphi 0, %s182
      %s185 = sphi 0, %s184
      %s199 = sphi 0, %s185
      %s203 = sphi 0, %s203
      %s205 = sphi 0, %s203
      %s206 = sphi 0, %s205
      %s220 = sphi 0, %s206
      %s224 = sphi 0, %s224
      %s226 = sphi 0, %s224
      %s227 = sphi 0, %s226
      %s241 = sphi 0, %s227
      %s245 = sphi 0, %s245
      %s247 = sphi 0, %s245
      %s248 = sphi 0, %s247
      %s262 = sphi 0, %s248
      %s266 = sphi 0, %s266
      %s268 = sphi 0, %s266
      %s269 = sphi 0, %s268
      %s283 = sphi 0, %s269
      %s287 = sphi 0, %s287
      %s289 = sphi 0, %s287
      %s290 = sphi 0, %s289
      %s304 = sphi 0, %s290
      %s310 = sphi 0, %s312
      %s313 = sphi 0, %s310
      %s314 = sphi 0, %s313
      %s330 = sphi 0, %s314
    $region4: #{denoiser_forward.1} parent=1 // loop_header_branch
      %25 = sbr.rel (%p23) target = $region8
    $region5: #{denoiser_forward.1} parent=1 // loop_body
      %s27 = ssub.s32 %s22, 1
      %s28 = ssub.s32 %s22, 2
      %s29 = sadd.s32 %s22, 1
      %s30 = ssub.s32 %s22, %s29
      %p31 = scmp.eq.s32.totalorder %s30, 0
      %s33 = sadd.s32 %s32, 1
      %s34 = scalar_select %p31, %s32, %s33
      %p37 = pneg %p31
      %p38 = scmp.eq.s32.totalorder %s22, 1
      %p39 = por %p37, %p38
      %p40 = scmp.ne.s32.totalorder %s32, %s35
      %p41 = scmp.eq.s32.totalorder %s22, 0
      %p42 = por %p40, %p41
      %p43 = scmp.ne.s32.totalorder %s32, %s35
      %p44 = scmp.eq.s32.totalorder %s27, 1
      %p45 = por %p43, %p44
      %p46 = scmp.ne.s32.totalorder %s35, %s36
      %p47 = scmp.eq.s32.totalorder %s27, 0
      %p48 = por %p46, %p47
      %p49 = scmp.ne.s32.totalorder %s35, %s36
      %p50 = scmp.eq.s32.totalorder %s28, 1
      %p51 = por %p49, %p50
      %p53 = scmp.ne.s32.totalorder %s36, %s52
      %p54 = scmp.eq.s32.totalorder %s28, 0
      %p55 = por %p53, %p54
      %s57 = sadd.s32 %s56, 1
      %p60 = scmp.eq.s32.totalorder %s22, 1
      %p61 = scmp.ne.s32.totalorder %s56, %s58
      %p62 = scmp.eq.s32.totalorder %s22, 0
      %p63 = por %p61, %p62
      %p64 = scmp.ne.s32.totalorder %s56, %s58
      %p65 = scmp.eq.s32.totalorder %s27, 1
      %p66 = por %p64, %p65
      %p67 = scmp.ne.s32.totalorder %s58, %s59
      %p68 = scmp.eq.s32.totalorder %s27, 0
      %p69 = por %p67, %p68
      %p70 = scmp.ne.s32.totalorder %s58, %s59
      %p71 = scmp.eq.s32.totalorder %s28, 1
      %p72 = por %p70, %p71
      %p74 = scmp.ne.s32.totalorder %s59, %s73
      %p75 = scmp.eq.s32.totalorder %s28, 0
      %p76 = por %p74, %p75
      %s78 = sadd.s32 %s77, 1
      %p81 = scmp.eq.s32.totalorder %s22, 1
      %p82 = scmp.ne.s32.totalorder %s77, %s79
      %p83 = scmp.eq.s32.totalorder %s22, 0
      %p84 = por %p82, %p83
      %p85 = scmp.ne.s32.totalorder %s77, %s79
      %p86 = scmp.eq.s32.totalorder %s27, 1
      %p87 = por %p85, %p86
      %p88 = scmp.ne.s32.totalorder %s79, %s80
      %p89 = scmp.eq.s32.totalorder %s27, 0
      %p90 = por %p88, %p89
      %p91 = scmp.ne.s32.totalorder %s79, %s80
      %p92 = scmp.eq.s32.totalorder %s28, 1
      %p93 = por %p91, %p92
      %p95 = scmp.ne.s32.totalorder %s80, %s94
      %p96 = scmp.eq.s32.totalorder %s28, 0
      %p97 = por %p95, %p96
      %s99 = sadd.s32 %s98, 1
      %p102 = scmp.eq.s32.totalorder %s22, 1
      %p103 = scmp.ne.s32.totalorder %s98, %s100
      %p104 = scmp.eq.s32.totalorder %s22, 0
      %p105 = por %p103, %p104
      %p106 = scmp.ne.s32.totalorder %s98, %s100
      %p107 = scmp.eq.s32.totalorder %s27, 1
      %p108 = por %p106, %p107
      %p109 = scmp.ne.s32.totalorder %s100, %s101
      %p110 = scmp.eq.s32.totalorder %s27, 0
      %p111 = por %p109, %p110
      %p112 = scmp.ne.s32.totalorder %s100, %s101
      %p113 = scmp.eq.s32.totalorder %s28, 1
      %p114 = por %p112, %p113
      %p116 = scmp.ne.s32.totalorder %s101, %s115
      %p117 = scmp.eq.s32.totalorder %s28, 0
      %p118 = por %p116, %p117
      %s120 = sadd.s32 %s119, 1
      %p123 = scmp.eq.s32.totalorder %s22, 1
      %p124 = scmp.ne.s32.totalorder %s119, %s121
      %p125 = scmp.eq.s32.totalorder %s22, 0
      %p126 = por %p124, %p125
      %p127 = scmp.ne.s32.totalorder %s119, %s121
      %p128 = scmp.eq.s32.totalorder %s27, 1
      %p129 = por %p127, %p128
      %p130 = scmp.ne.s32.totalorder %s121, %s122
      %p131 = scmp.eq.s32.totalorder %s27, 0
      %p132 = por %p130, %p131
      %p133 = scmp.ne.s32.totalorder %s121, %s122
      %p134 = scmp.eq.s32.totalorder %s28, 1
      %p135 = por %p133, %p134
      %p137 = scmp.ne.s32.totalorder %s122, %s136
      %p138 = scmp.eq.s32.totalorder %s28, 0
      %p139 = por %p137, %p138
      %s141 = sadd.s32 %s140, 1
      %p144 = scmp.eq.s32.totalorder %s22, 1
      %p145 = scmp.ne.s32.totalorder %s140, %s142
      %p146 = scmp.eq.s32.totalorder %s22, 0
      %p147 = por %p145, %p146
      %p148 = scmp.ne.s32.totalorder %s140, %s142
      %p149 = scmp.eq.s32.totalorder %s27, 1
      %p150 = por %p148, %p149
      %p151 = scmp.ne.s32.totalorder %s142, %s143
      %p152 = scmp.eq.s32.totalorder %s27, 0
      %p153 = por %p151, %p152
      %p154 = scmp.ne.s32.totalorder %s142, %s143
      %p155 = scmp.eq.s32.totalorder %s28, 1
      %p156 = por %p154, %p155
      %p158 = scmp.ne.s32.totalorder %s143, %s157
      %p159 = scmp.eq.s32.totalorder %s28, 0
      %p160 = por %p158, %p159
      %s162 = sadd.s32 %s161, 1
      %p165 = scmp.eq.s32.totalorder %s22, 1
      %p166 = scmp.ne.s32.totalorder %s161, %s163
      %p167 = scmp.eq.s32.totalorder %s22, 0
      %p168 = por %p166, %p167
      %p169 = scmp.ne.s32.totalorder %s161, %s163
      %p170 = scmp.eq.s32.totalorder %s27, 1
      %p171 = por %p169, %p170
      %p172 = scmp.ne.s32.totalorder %s163, %s164
      %p173 = scmp.eq.s32.totalorder %s27, 0
      %p174 = por %p172, %p173
      %p175 = scmp.ne.s32.totalorder %s163, %s164
      %p176 = scmp.eq.s32.totalorder %s28, 1
      %p177 = por %p175, %p176
      %p179 = scmp.ne.s32.totalorder %s164, %s178
      %p180 = scmp.eq.s32.totalorder %s28, 0
      %p181 = por %p179, %p180
      %s183 = sadd.s32 %s182, 1
      %p186 = scmp.eq.s32.totalorder %s22, 1
      %p187 = scmp.ne.s32.totalorder %s182, %s184
      %p188 = scmp.eq.s32.totalorder %s22, 0
      %p189 = por %p187, %p188
      %p190 = scmp.ne.s32.totalorder %s182, %s184
      %p191 = scmp.eq.s32.totalorder %s27, 1
      %p192 = por %p190, %p191
      %p193 = scmp.ne.s32.totalorder %s184, %s185
      %p194 = scmp.eq.s32.totalorder %s27, 0
      %p195 = por %p193, %p194
      %p196 = scmp.ne.s32.totalorder %s184, %s185
      %p197 = scmp.eq.s32.totalorder %s28, 1
      %p198 = por %p196, %p197
      %p200 = scmp.ne.s32.totalorder %s185, %s199
      %p201 = scmp.eq.s32.totalorder %s28, 0
      %p202 = por %p200, %p201
      %s204 = sadd.s32 %s203, 1
      %p207 = scmp.eq.s32.totalorder %s22, 1
      %p208 = scmp.ne.s32.totalorder %s203, %s205
      %p209 = scmp.eq.s32.totalorder %s22, 0
      %p210 = por %p208, %p209
      %p211 = scmp.ne.s32.totalorder %s203, %s205
      %p212 = scmp.eq.s32.totalorder %s27, 1
      %p213 = por %p211, %p212
      %p214 = scmp.ne.s32.totalorder %s205, %s206
      %p215 = scmp.eq.s32.totalorder %s27, 0
      %p216 = por %p214, %p215
      %p217 = scmp.ne.s32.totalorder %s205, %s206
      %p218 = scmp.eq.s32.totalorder %s28, 1
      %p219 = por %p217, %p218
      %p221 = scmp.ne.s32.totalorder %s206, %s220
      %p222 = scmp.eq.s32.totalorder %s28, 0
      %p223 = por %p221, %p222
      %s225 = sadd.s32 %s224, 1
      %p228 = scmp.eq.s32.totalorder %s22, 1
      %p229 = scmp.ne.s32.totalorder %s224, %s226
      %p230 = scmp.eq.s32.totalorder %s22, 0
      %p231 = por %p229, %p230
      %p232 = scmp.ne.s32.totalorder %s224, %s226
      %p233 = scmp.eq.s32.totalorder %s27, 1
      %p234 = por %p232, %p233
      %p235 = scmp.ne.s32.totalorder %s226, %s227
      %p236 = scmp.eq.s32.totalorder %s27, 0
      %p237 = por %p235, %p236
      %p238 = scmp.ne.s32.totalorder %s226, %s227
      %p239 = scmp.eq.s32.totalorder %s28, 1
      %p240 = por %p238, %p239
      %p242 = scmp.ne.s32.totalorder %s227, %s241
      %p243 = scmp.eq.s32.totalorder %s28, 0
      %p244 = por %p242, %p243
      %s246 = sadd.s32 %s245, 1
      %p249 = scmp.eq.s32.totalorder %s22, 1
      %p250 = scmp.ne.s32.totalorder %s245, %s247
      %p251 = scmp.eq.s32.totalorder %s22, 0
      %p252 = por %p250, %p251
      %p253 = scmp.ne.s32.totalorder %s245, %s247
      %p254 = scmp.eq.s32.totalorder %s27, 1
      %p255 = por %p253, %p254
      %p256 = scmp.ne.s32.totalorder %s247, %s248
      %p257 = scmp.eq.s32.totalorder %s27, 0
      %p258 = por %p256, %p257
      %p259 = scmp.ne.s32.totalorder %s247, %s248
      %p260 = scmp.eq.s32.totalorder %s28, 1
      %p261 = por %p259, %p260
      %p263 = scmp.ne.s32.totalorder %s248, %s262
      %p264 = scmp.eq.s32.totalorder %s28, 0
      %p265 = por %p263, %p264
      %s267 = sadd.s32 %s266, 1
      %p270 = scmp.eq.s32.totalorder %s22, 1
      %p271 = scmp.ne.s32.totalorder %s266, %s268
      %p272 = scmp.eq.s32.totalorder %s22, 0
      %p273 = por %p271, %p272
      %p274 = scmp.ne.s32.totalorder %s266, %s268
      %p275 = scmp.eq.s32.totalorder %s27, 1
      %p276 = por %p274, %p275
      %p277 = scmp.ne.s32.totalorder %s268, %s269
      %p278 = scmp.eq.s32.totalorder %s27, 0
      %p279 = por %p277, %p278
      %p280 = scmp.ne.s32.totalorder %s268, %s269
      %p281 = scmp.eq.s32.totalorder %s28, 1
      %p282 = por %p280, %p281
      %p284 = scmp.ne.s32.totalorder %s269, %s283
      %p285 = scmp.eq.s32.totalorder %s28, 0
      %p286 = por %p284, %p285
      %s288 = sadd.s32 %s287, 1
      %p291 = scmp.eq.s32.totalorder %s22, 1
      %p292 = scmp.ne.s32.totalorder %s287, %s289
      %p293 = scmp.eq.s32.totalorder %s22, 0
      %p294 = por %p292, %p293
      %p295 = scmp.ne.s32.totalorder %s287, %s289
      %p296 = scmp.eq.s32.totalorder %s27, 1
      %p297 = por %p295, %p296
      %p298 = scmp.ne.s32.totalorder %s289, %s290
      %p299 = scmp.eq.s32.totalorder %s27, 0
      %p300 = por %p298, %p299
      %p301 = scmp.ne.s32.totalorder %s289, %s290
      %p302 = scmp.eq.s32.totalorder %s28, 1
      %p303 = por %p301, %p302
      %p305 = scmp.ne.s32.totalorder %s290, %s304
      %p306 = scmp.eq.s32.totalorder %s28, 0
      %p307 = por %p305, %p306
      %s308 = ssub.s32 %s22, %s29
      %p309 = scmp.eq.s32.totalorder %s308, 0
      %s311 = sadd.s32 %s310, 1
      %s312 = scalar_select %p309, %s310, %s311
      %p315 = pneg %p309
      %p316 = scmp.eq.s32.totalorder %s22, 1
      %p317 = por %p315, %p316
      %p318 = scmp.ne.s32.totalorder %s310, %s313
      %p319 = scmp.eq.s32.totalorder %s22, 0
      %p320 = por %p318, %p319
      %p321 = scmp.ne.s32.totalorder %s310, %s313
      %p322 = scmp.eq.s32.totalorder %s27, 1
      %p323 = por %p321, %p322
      %p324 = scmp.ne.s32.totalorder %s313, %s314
      %p325 = scmp.eq.s32.totalorder %s27, 0
      %p326 = por %p324, %p325
      %p327 = scmp.ne.s32.totalorder %s313, %s314
      %p328 = scmp.eq.s32.totalorder %s28, 1
      %p329 = por %p327, %p328
      %p331 = scmp.ne.s32.totalorder %s314, %s330
      %p332 = scmp.eq.s32.totalorder %s28, 0
      %p333 = por %p331, %p332
      %p334 = scmp.le.s32.totalorder 1, %s22
      %p335 = scmp.lt.s32.totalorder %s22, 3
      %p336 = pnand %p334, %p335
      %p337 = pneg %p336
      // Predicated region
      $region9: #{denoiser_forward.1} parent=5 // pred_check
        _
      $region10: #{denoiser_forward.1} parent=5 // pred_check_branch
        %339 = sbr.rel (%p336) target = $region12
      $region11: #{denoiser_forward.1} parent=5 // pred_region
        %s340 = ssub.s32 %s22, 1
        // Predicated region
        $region13: #{denoiser_forward.1} parent=11 // pred_check
          %p341 = pneg %p69
        $region14: #{denoiser_forward.1} parent=11 // pred_check_branch
          %343 = sbr.rel (%p341) target = $region16
        $region15: #{denoiser_forward.1} parent=11 // pred_region
          _
        $region16: #{denoiser_forward.1} parent=11 // pred_fallthru
          _
        // Predicated region
        $region17: #{denoiser_forward.1} parent=11 // pred_check
          %p344 = pneg %p90
        $region18: #{denoiser_forward.1} parent=11 // pred_check_branch
          %346 = sbr.rel (%p344) target = $region20
        $region19: #{denoiser_forward.1} parent=11 // pred_region
          _
        $region20: #{denoiser_forward.1} parent=11 // pred_fallthru
          _
        // Predicated region
        $region21: #{denoiser_forward.1} parent=11 // pred_check
          %p347 = pneg %p111
        $region22: #{denoiser_forward.1} parent=11 // pred_check_branch
          %349 = sbr.rel (%p347) target = $region24
        $region23: #{denoiser_forward.1} parent=11 // pred_region
          _
        $region24: #{denoiser_forward.1} parent=11 // pred_fallthru
          _
        // Predicated region
        $region25: #{denoiser_forward.1} parent=11 // pred_check
          %p350 = pneg %p132
        $region26: #{denoiser_forward.1} parent=11 // pred_check_branch
          %352 = sbr.rel (%p350) target = $region28
        $region27: #{denoiser_forward.1} parent=11 // pred_region
          _
        $region28: #{denoiser_forward.1} parent=11 // pred_fallthru
          _
        // Predicated region
        $region29: #{denoiser_forward.1} parent=11 // pred_check
          %p353 = pneg %p153
        $region30: #{denoiser_forward.1} parent=11 // pred_check_branch
          %355 = sbr.rel (%p353) target = $region32
        $region31: #{denoiser_forward.1} parent=11 // pred_region
          _
        $region32: #{denoiser_forward.1} parent=11 // pred_fallthru
          _
        // Predicated region
        $region33: #{denoiser_forward.1} parent=11 // pred_check
          %p356 = pneg %p174
        $region34: #{denoiser_forward.1} parent=11 // pred_check_branch
          %358 = sbr.rel (%p356) target = $region36
        $region35: #{denoiser_forward.1} parent=11 // pred_region
          _
        $region36: #{denoiser_forward.1} parent=11 // pred_fallthru
          _
        // Predicated region
        $region37: #{denoiser_forward.1} parent=11 // pred_check
          %p359 = pneg %p195
        $region38: #{denoiser_forward.1} parent=11 // pred_check_branch
          %361 = sbr.rel (%p359) target = $region40
        $region39: #{denoiser_forward.1} parent=11 // pred_region
          _
        $region40: #{denoiser_forward.1} parent=11 // pred_fallthru
          _
        // Predicated region
        $region41: #{denoiser_forward.1} parent=11 // pred_check
          %p362 = pneg %p216
        $region42: #{denoiser_forward.1} parent=11 // pred_check_branch
          %364 = sbr.rel (%p362) target = $region44
        $region43: #{denoiser_forward.1} parent=11 // pred_region
          _
        $region44: #{denoiser_forward.1} parent=11 // pred_fallthru
          _
        // Predicated region
        $region45: #{denoiser_forward.1} parent=11 // pred_check
          %p365 = pneg %p237
        $region46: #{denoiser_forward.1} parent=11 // pred_check_branch
          %367 = sbr.rel (%p365) target = $region48
        $region47: #{denoiser_forward.1} parent=11 // pred_region
          _
        $region48: #{denoiser_forward.1} parent=11 // pred_fallthru
          _
        // Predicated region
        $region49: #{denoiser_forward.1} parent=11 // pred_check
          %p368 = pneg %p258
        $region50: #{denoiser_forward.1} parent=11 // pred_check_branch
          %370 = sbr.rel (%p368) target = $region52
        $region51: #{denoiser_forward.1} parent=11 // pred_region
          _
        $region52: #{denoiser_forward.1} parent=11 // pred_fallthru
          _
        // Predicated region
        $region53: #{denoiser_forward.1} parent=11 // pred_check
          %p371 = pneg %p279
        $region54: #{denoiser_forward.1} parent=11 // pred_check_branch
          %373 = sbr.rel (%p371) target = $region56
        $region55: #{denoiser_forward.1} parent=11 // pred_region
          _
        $region56: #{denoiser_forward.1} parent=11 // pred_fallthru
          _
        // Predicated region
        $region57: #{denoiser_forward.1} parent=11 // pred_check
          %p374 = pneg %p300
        $region58: #{denoiser_forward.1} parent=11 // pred_check_branch
          %376 = sbr.rel (%p374) target = $region60
        $region59: #{denoiser_forward.1} parent=11 // pred_region
          _
        $region60: #{denoiser_forward.1} parent=11 // pred_fallthru
          _
      $region12: #{denoiser_forward.1} parent=5 // pred_fallthru
        _
      %p377 = scmp.lt.s32.totalorder %s22, 2
      // Predicated region
      $region61: #{denoiser_forward.1} parent=5 // pred_check
        %p378 = pneg %p377
      $region62: #{denoiser_forward.1} parent=5 // pred_check_branch
        %380 = sbr.rel (%p378) target = $region64
      $region63: #{denoiser_forward.1} parent=5 // pred_region
        // Predicated region
        $region65: #{denoiser_forward.1} parent=63 // pred_check
          %p381 = pneg %p42
        $region66: #{denoiser_forward.1} parent=63 // pred_check_branch
          %383 = sbr.rel (%p381) target = $region68
        $region67: #{denoiser_forward.1} parent=63 // pred_region
          %s384 = smul.u32 2, %s22
          %p385 = scmp.lt.s32.totalorder %s384, 3
          %s386 = scalar_select %p385, %s384, 3
          %s387 = smul.addr %s386, 13
          %s388 = smul.addr %s387, 8
          %s389 = scalar_lea.vmem %s0, %s388
          %s390 = smul.u32 2, %s22
        $region68: #{denoiser_forward.1} parent=63 // pred_fallthru
          _
      $region64: #{denoiser_forward.1} parent=5 // pred_fallthru
        _
      %p391 = scmp.le.s32.totalorder 1, %s22
      %p392 = scmp.lt.s32.totalorder %s22, 3
      %p393 = pnand %p391, %p392
      %p394 = pneg %p393
      // Predicated region
      $region69: #{denoiser_forward.1} parent=5 // pred_check
        _
      $region70: #{denoiser_forward.1} parent=5 // pred_check_branch
        %396 = sbr.rel (%p393) target = $region72
      $region71: #{denoiser_forward.1} parent=5 // pred_region
        %s397 = ssub.s32 %s22, 1
        %s398 = smul.u32 2, %s27
        %p399 = scmp.lt.s32.totalorder %s398, 3
        %s400 = scalar_select %p399, %s398, 3
        %s401 = smul.addr %s400, 13
        %s402 = smul.addr %s401, 8
        %s403 = scalar_lea.vmem %s0, %s402
        %p404 = pneg %p48
        %p405 = pneg %p45
        %p406 = pneg %p69
        %p407 = pneg %p66
        %p408 = pneg %p90
        %p409 = pneg %p87
        %p410 = pneg %p111
        %p411 = pneg %p108
        %p412 = pneg %p132
        %p413 = pneg %p129
        %p414 = pneg %p153
        %p415 = pneg %p150
        %p416 = pneg %p174
        %p417 = pneg %p171
        %p418 = pneg %p195
        %p419 = pneg %p192
        %p420 = pneg %p216
        %p421 = pneg %p213
        %p422 = pneg %p237
        %p423 = pneg %p234
        %p424 = pneg %p258
        %p425 = pneg %p255
        %p426 = pneg %p279
        %p427 = pneg %p276
        %p428 = pneg %p300
        %p429 = pneg %p297
        %p430 = pneg %p326
        %p431 = pneg %p323
        %s432 = sand.u32 %s313, 1
        %s433 = scalar_lea.sflag [#allocation3], %s432
        %s434 = sand.u32 %s313, 1
        %s435 = smul.addr %s434, 208
        %s436 = scalar_lea.vmem [#allocation2], %s435
        %s437 = smul.u32 2, %s27
        %p438 = scmp.lt.s32.totalorder %s437, 3
        %s439 = scalar_select %p438, %s437, 3
        %s440 = smul.addr %s439, 13
        %s441 = smul.addr %s440, 8
        %s442 = scalar_lea.vmem %s0, %s441
        %s443 = smul.u32 2, %s27
        %s444 = smul.u32 2, %s27
        %v446 = vld [vmem:[%s442] sm:$0xff]
        %v447 = vld [vmem:[%s442 + $0x8] sm:$0xff]
        %v448 = vld [vmem:[%s442 + $0x10] sm:$0xff]
        %v449 = vld [vmem:[%s442 + $0x18] sm:$0xff]
        %v450 = vld [vmem:[%s442 + $0x20] sm:$0xff]
        %v451 = vld [vmem:[%s442 + $0x28] sm:$0xff]
        %v452 = vld [vmem:[%s442 + $0x30] sm:$0xff]
        %v453 = vld [vmem:[%s442 + $0x38] sm:$0xff]
        %v454 = vld [vmem:[%s442 + $0x40] sm:$0xff]
        %v455 = vld [vmem:[%s442 + $0x48] sm:$0xff]
        %v456 = vld [vmem:[%s442 + $0x50] sm:$0xff]
        %v457 = vld [vmem:[%s442 + $0x58] sm:$0xff]
        %v458 = vld [vmem:[%s442 + $0x60] sm:$0xff]
        %v459 = vld [vmem:[%s442 + $0x68] sm:$0xff]
        %v460 = vld [vmem:[%s442 + $0x70] sm:$0xff]
        %v461 = vld [vmem:[%s442 + $0x78] sm:$0xff]
        %v462 = vld [vmem:[%s442 + $0x80] sm:$0xff]
        %v463 = vld [vmem:[%s442 + $0x88] sm:$0xff]
        %v464 = vld [vmem:[%s442 + $0x90] sm:$0xff]
        %v465 = vld [vmem:[%s442 + $0x98] sm:$0xff]
        %v466 = vld [vmem:[%s442 + $0xa0] sm:$0xff]
        %v467 = vld [vmem:[%s442 + $0xa8] sm:$0xff]
        %v468 = vld [vmem:[%s442 + $0xb0] sm:$0xff]
        %v469 = vld [vmem:[%s442 + $0xb8] sm:$0xff]
        %v470 = vld [vmem:[%s442 + $0xc0] sm:$0xff]
        %v471 = vld [vmem:[%s442 + $0xc8] sm:$0xff]
        %v472 = vpack.c.bf16 %v459, %v446
        %v473 = vpack.c.bf16 %v460, %v447
        %v474 = vpack.c.bf16 %v461, %v448
        %v475 = vpack.c.bf16 %v462, %v449
        %v476 = vpack.c.bf16 %v463, %v450
        %v477 = vpack.c.bf16 %v464, %v451
        %v478 = vpack.c.bf16 %v465, %v452
        %v479 = vpack.c.bf16 %v466, %v453
        %v480 = vpack.c.bf16 %v467, %v454
        %v481 = vpack.c.bf16 %v468, %v455
        %v482 = vpack.c.bf16 %v469, %v456
        %v483 = vpack.c.bf16 %v470, %v457
        %v484 = vpack.c.bf16 %v471, %v458
        %v485 = vld [vmem:[%s1] sm:$0xff]
        %v486 = vld [vmem:[%s1 + $0x8] sm:$0xff]
        %v487 = vld [vmem:[%s1 + $0x10] sm:$0xff]
        %v488 = vld [vmem:[%s1 + $0x18] sm:$0xff]
        %v489 = vld [vmem:[%s1 + $0x20] sm:$0xff]
        %v490 = vld [vmem:[%s1 + $0x28] sm:$0xff]
        %v491 = vld [vmem:[%s1 + $0x30] sm:$0xff]
        %v492 = vld [vmem:[%s1 + $0x38] sm:$0xff]
        %v493 = vld [vmem:[%s1 + $0x40] sm:$0xff]
        %v494 = vld [vmem:[%s1 + $0x48] sm:$0xff]
        %v495 = vld [vmem:[%s1 + $0x50] sm:$0xff]
        %v496 = vld [vmem:[%s1 + $0x58] sm:$0xff]
        %v497 = vld [vmem:[%s1 + $0x60] sm:$0xff]
        %v498 = vld [vmem:[%s1 + $0x68] sm:$0xff]
        %v499 = vld [vmem:[%s1 + $0x70] sm:$0xff]
        %v500 = vld [vmem:[%s1 + $0x78] sm:$0xff]
        %v501 = vld [vmem:[%s1 + $0x80] sm:$0xff]
        %v502 = vld [vmem:[%s1 + $0x88] sm:$0xff]
        %v503 = vld [vmem:[%s1 + $0x90] sm:$0xff]
        %v504 = vld [vmem:[%s1 + $0x98] sm:$0xff]
        %v505 = vld [vmem:[%s1 + $0xa0] sm:$0xff]
        %v506 = vld [vmem:[%s1 + $0xa8] sm:$0xff]
        %v507 = vld [vmem:[%s1 + $0xb0] sm:$0xff]
        %v508 = vld [vmem:[%s1 + $0xb8] sm:$0xff]
        %v509 = vld [vmem:[%s1 + $0xc0] sm:$0xff]
        %v510 = vld [vmem:[%s1 + $0xc8] sm:$0xff]
        %v511 = vld [vmem:[%s1 + $0xd0] sm:$0xff]
        %v512 = vld [vmem:[%s1 + $0xd8] sm:$0xff]
        %v513 = vld [vmem:[%s1 + $0xe0] sm:$0xff]
        %v514 = vld [vmem:[%s1 + $0xe8] sm:$0xff]
        %v515 = vld [vmem:[%s1 + $0xf0] sm:$0xff]
        %v516 = vld [vmem:[%s1 + $0xf8] sm:$0xff]
        %v517 = vld [vmem:[%s1 + $0x100] sm:$0xff]
        %v518 = vld [vmem:[%s1 + $0x108] sm:$0xff]
        %v519 = vld [vmem:[%s1 + $0x110] sm:$0xff]
        %v520 = vld [vmem:[%s1 + $0x118] sm:$0xff]
        %v521 = vld [vmem:[%s1 + $0x120] sm:$0xff]
        %v522 = vld [vmem:[%s1 + $0x128] sm:$0xff]
        %v523 = vld [vmem:[%s1 + $0x130] sm:$0xff]
        %v524 = vld [vmem:[%s1 + $0x138] sm:$0xff]
        %v525 = vld [vmem:[%s1 + $0x140] sm:$0xff]
        %v526 = vld [vmem:[%s1 + $0x148] sm:$0xff]
        %v527 = vld [vmem:[%s1 + $0x150] sm:$0xff]
        %v528 = vld [vmem:[%s1 + $0x158] sm:$0xff]
        %v529 = vld [vmem:[%s1 + $0x160] sm:$0xff]
        %v530 = vld [vmem:[%s1 + $0x168] sm:$0xff]
        %v531 = vld [vmem:[%s1 + $0x170] sm:$0xff]
        %v532 = vld [vmem:[%s1 + $0x178] sm:$0xff]
        %v533 = vld [vmem:[%s1 + $0x180] sm:$0xff]
        %v534 = vld [vmem:[%s1 + $0x188] sm:$0xff]
        %v535 = vld [vmem:[%s1 + $0x190] sm:$0xff]
        %v536 = vld [vmem:[%s1 + $0x198] sm:$0xff]
        %v537 = vld [vmem:[%s1 + $0x1a0] sm:$0xff]
        %v538 = vld [vmem:[%s1 + $0x1a8] sm:$0xff]
        %v539 = vld [vmem:[%s1 + $0x1b0] sm:$0xff]
        %v540 = vld [vmem:[%s1 + $0x1b8] sm:$0xff]
        %v541 = vld [vmem:[%s1 + $0x1c0] sm:$0xff]
        %v542 = vld [vmem:[%s1 + $0x1c8] sm:$0xff]
        %v543 = vld [vmem:[%s1 + $0x1d0] sm:$0xff]
        %v544 = vld [vmem:[%s1 + $0x1d8] sm:$0xff]
        %v545 = vld [vmem:[%s1 + $0x1e0] sm:$0xff]
        %v546 = vld [vmem:[%s1 + $0x1e8] sm:$0xff]
        %v547 = vld [vmem:[%s1 + $0x1f0] sm:$0xff]
        %v548 = vld [vmem:[%s1 + $0x1f8] sm:$0xff]
        %v549 = vld [vmem:[%s1 + $0x200] sm:$0xff]
        %v550 = vld [vmem:[%s1 + $0x208] sm:$0xff]
        %v551 = vld [vmem:[%s1 + $0x210] sm:$0xff]
        %v552 = vld [vmem:[%s1 + $0x218] sm:$0xff]
        %v553 = vld [vmem:[%s1 + $0x220] sm:$0xff]
        %v554 = vld [vmem:[%s1 + $0x228] sm:$0xff]
        %v555 = vld [vmem:[%s1 + $0x230] sm:$0xff]
        %v556 = vld [vmem:[%s1 + $0x238] sm:$0xff]
        %v557 = vld [vmem:[%s1 + $0x240] sm:$0xff]
        %v558 = vld [vmem:[%s1 + $0x248] sm:$0xff]
        %v559 = vld [vmem:[%s1 + $0x250] sm:$0xff]
        %v560 = vld [vmem:[%s1 + $0x258] sm:$0xff]
        %v561 = vld [vmem:[%s1 + $0x260] sm:$0xff]
        %v562 = vld [vmem:[%s1 + $0x268] sm:$0xff]
        %v563 = vld [vmem:[%s1 + $0x270] sm:$0xff]
        %v564 = vld [vmem:[%s1 + $0x278] sm:$0xff]
        %v565 = vld [vmem:[%s1 + $0x280] sm:$0xff]
        %v566 = vld [vmem:[%s1 + $0x288] sm:$0xff]
        %v567 = vld [vmem:[%s1 + $0x290] sm:$0xff]
        %v568 = vld [vmem:[%s1 + $0x298] sm:$0xff]
        %v569 = vld [vmem:[%s1 + $0x2a0] sm:$0xff]
        %v570 = vld [vmem:[%s1 + $0x2a8] sm:$0xff]
        %v571 = vld [vmem:[%s1 + $0x2b0] sm:$0xff]
        %v572 = vld [vmem:[%s1 + $0x2b8] sm:$0xff]
        %v573 = vld [vmem:[%s1 + $0x2c0] sm:$0xff]
        %v574 = vld [vmem:[%s1 + $0x2c8] sm:$0xff]
        %v575 = vld [vmem:[%s1 + $0x2d0] sm:$0xff]
        %v576 = vld [vmem:[%s1 + $0x2d8] sm:$0xff]
        %v577 = vld [vmem:[%s1 + $0x2e0] sm:$0xff]
        %v578 = vld [vmem:[%s1 + $0x2e8] sm:$0xff]
        %v579 = vld [vmem:[%s1 + $0x2f0] sm:$0xff]
        %v580 = vld [vmem:[%s1 + $0x2f8] sm:$0xff]
        %v581 = vld [vmem:[%s1 + $0x300] sm:$0xff]
        %v582 = vld [vmem:[%s1 + $0x308] sm:$0xff]
        %v583 = vld [vmem:[%s1 + $0x310] sm:$0xff]
        %v584 = vld [vmem:[%s1 + $0x318] sm:$0xff]
        %v585 = vld [vmem:[%s1 + $0x320] sm:$0xff]
        %v586 = vld [vmem:[%s1 + $0x328] sm:$0xff]
        %v587 = vld [vmem:[%s1 + $0x330] sm:$0xff]
        %v588 = vld [vmem:[%s1 + $0x338] sm:$0xff]
        %v589 = vld [vmem:[%s1 + $0x340] sm:$0xff]
        %v590 = vld [vmem:[%s1 + $0x348] sm:$0xff]
        %v591 = vld [vmem:[%s1 + $0x350] sm:$0xff]
        %v592 = vld [vmem:[%s1 + $0x358] sm:$0xff]
        %v593 = vld [vmem:[%s1 + $0x360] sm:$0xff]
        %v594 = vld [vmem:[%s1 + $0x368] sm:$0xff]
        %v595 = vld [vmem:[%s1 + $0x370] sm:$0xff]
        %v596 = vld [vmem:[%s1 + $0x378] sm:$0xff]
        %v597 = vld [vmem:[%s1 + $0x380] sm:$0xff]
        %v598 = vld [vmem:[%s1 + $0x388] sm:$0xff]
        %v599 = vld [vmem:[%s1 + $0x390] sm:$0xff]
        %v600 = vld [vmem:[%s1 + $0x398] sm:$0xff]
        %v601 = vld [vmem:[%s1 + $0x3a0] sm:$0xff]
        %v602 = vld [vmem:[%s1 + $0x3a8] sm:$0xff]
        %v603 = vld [vmem:[%s1 + $0x3b0] sm:$0xff]
        %v604 = vld [vmem:[%s1 + $0x3b8] sm:$0xff]
        %v605 = vld [vmem:[%s1 + $0x3c0] sm:$0xff]
        %v606 = vld [vmem:[%s1 + $0x3c8] sm:$0xff]
        %v607 = vld [vmem:[%s1 + $0x3d0] sm:$0xff]
        %v608 = vld [vmem:[%s1 + $0x3d8] sm:$0xff]
        %v609 = vld [vmem:[%s1 + $0x3e0] sm:$0xff]
        %v610 = vld [vmem:[%s1 + $0x3e8] sm:$0xff]
        %v611 = vld [vmem:[%s1 + $0x3f0] sm:$0xff]
        %v612 = vld [vmem:[%s1 + $0x3f8] sm:$0xff]
        %v613 = vld [vmem:[%s1 + $0x400] sm:$0xff]
        %v614 = vld [vmem:[%s1 + $0x408] sm:$0xff]
        %v615 = vld [vmem:[%s1 + $0x410] sm:$0xff]
        %v616 = vld [vmem:[%s1 + $0x418] sm:$0xff]
        %v617 = vld [vmem:[%s1 + $0x420] sm:$0xff]
        %v618 = vld [vmem:[%s1 + $0x428] sm:$0xff]
        %v619 = vld [vmem:[%s1 + $0x430] sm:$0xff]
        %v620 = vld [vmem:[%s1 + $0x438] sm:$0xff]
        %v621 = vld [vmem:[%s1 + $0x440] sm:$0xff]
        %v622 = vld [vmem:[%s1 + $0x448] sm:$0xff]
        %v623 = vld [vmem:[%s1 + $0x450] sm:$0xff]
        %v624 = vld [vmem:[%s1 + $0x458] sm:$0xff]
        %v625 = vld [vmem:[%s1 + $0x460] sm:$0xff]
        %v626 = vld [vmem:[%s1 + $0x468] sm:$0xff]
        %v627 = vld [vmem:[%s1 + $0x470] sm:$0xff]
        %v628 = vld [vmem:[%s1 + $0x478] sm:$0xff]
        %v629 = vld [vmem:[%s1 + $0x480] sm:$0xff]
        %v630 = vld [vmem:[%s1 + $0x488] sm:$0xff]
        %v631 = vld [vmem:[%s1 + $0x490] sm:$0xff]
        %v632 = vld [vmem:[%s1 + $0x498] sm:$0xff]
        %v633 = vld [vmem:[%s1 + $0x4a0] sm:$0xff]
        %v634 = vld [vmem:[%s1 + $0x4a8] sm:$0xff]
        %v635 = vld [vmem:[%s1 + $0x4b0] sm:$0xff]
        %v636 = vld [vmem:[%s1 + $0x4b8] sm:$0xff]
        %v637 = vld [vmem:[%s1 + $0x4c0] sm:$0xff]
        %v638 = vld [vmem:[%s1 + $0x4c8] sm:$0xff]
        %v639 = vld [vmem:[%s1 + $0x4d0] sm:$0xff]
        %v640 = vld [vmem:[%s1 + $0x4d8] sm:$0xff]
        %v641 = vld [vmem:[%s1 + $0x4e0] sm:$0xff]
        %v642 = vld [vmem:[%s1 + $0x4e8] sm:$0xff]
        %v643 = vld [vmem:[%s1 + $0x4f0] sm:$0xff]
        %v644 = vld [vmem:[%s1 + $0x4f8] sm:$0xff]
        %v645 = vld [vmem:[%s1 + $0x500] sm:$0xff]
        %v646 = vld [vmem:[%s1 + $0x508] sm:$0xff]
        %v647 = vld [vmem:[%s1 + $0x510] sm:$0xff]
        %v648 = vld [vmem:[%s1 + $0x518] sm:$0xff]
        %v649 = vld [vmem:[%s1 + $0x520] sm:$0xff]
        %v650 = vld [vmem:[%s1 + $0x528] sm:$0xff]
        %v651 = vld [vmem:[%s1 + $0x530] sm:$0xff]
        %v652 = vld [vmem:[%s1 + $0x538] sm:$0xff]
        %v653 = vld [vmem:[%s1 + $0x540] sm:$0xff]
        %v654 = vld [vmem:[%s1 + $0x548] sm:$0xff]
        %v655 = vld [vmem:[%s1 + $0x550] sm:$0xff]
        %v656 = vld [vmem:[%s1 + $0x558] sm:$0xff]
        %v657 = vld [vmem:[%s1 + $0x560] sm:$0xff]
        %v658 = vld [vmem:[%s1 + $0x568] sm:$0xff]
        %v659 = vld [vmem:[%s1 + $0x570] sm:$0xff]
        %v660 = vld [vmem:[%s1 + $0x578] sm:$0xff]
        %v661 = vld [vmem:[%s1 + $0x580] sm:$0xff]
        %v662 = vld [vmem:[%s1 + $0x588] sm:$0xff]
        %v663 = vld [vmem:[%s1 + $0x590] sm:$0xff]
        %v664 = vld [vmem:[%s1 + $0x598] sm:$0xff]
        %v665 = vld [vmem:[%s1 + $0x5a0] sm:$0xff]
        %v666 = vld [vmem:[%s1 + $0x5a8] sm:$0xff]
        %v667 = vld [vmem:[%s1 + $0x5b0] sm:$0xff]
        %v668 = vld [vmem:[%s1 + $0x5b8] sm:$0xff]
        %v669 = vld [vmem:[%s1 + $0x5c0] sm:$0xff]
        %v670 = vld [vmem:[%s1 + $0x5c8] sm:$0xff]
        %v671 = vld [vmem:[%s1 + $0x5d0] sm:$0xff]
        %v672 = vld [vmem:[%s1 + $0x5d8] sm:$0xff]
        %v673 = vld [vmem:[%s1 + $0x5e0] sm:$0xff]
        %v674 = vld [vmem:[%s1 + $0x5e8] sm:$0xff]
        %v675 = vld [vmem:[%s1 + $0x5f0] sm:$0xff]
        %v676 = vld [vmem:[%s1 + $0x5f8] sm:$0xff]
        %v677 = vld [vmem:[%s1 + $0x600] sm:$0xff]
        %v678 = vld [vmem:[%s1 + $0x608] sm:$0xff]
        %v679 = vld [vmem:[%s1 + $0x610] sm:$0xff]
        %v680 = vld [vmem:[%s1 + $0x618] sm:$0xff]
        %v681 = vld [vmem:[%s2] sm:$0x3]
        %v683 = vlaneseq
        %v684 = vshrl.u32 %v683, 7
        %v685 = vsub.s32 0, %v684
        %v686 = vrot.slane %v681, %v685
        %v687 = vlaneseq
        %v688 = vshrl.u32 %v687, 7
        %v689 = vsub.s32 1, %v688
        %v690 = vrot.slane %v681, %v689
        %v889 = vunpack.c.l.b16 %v485
        %v890 = vunpack.c.h.b16 %v485
        %v891 = vunpack.c.l.b16 %v486
        %v892 = vunpack.c.h.b16 %v486
        %v893 = vunpack.c.l.b16 %v487
        %v894 = vunpack.c.h.b16 %v487
        %v895 = vunpack.c.l.b16 %v488
        %v896 = vunpack.c.h.b16 %v488
        %v897 = vunpack.c.l.b16 %v489
        %v898 = vunpack.c.h.b16 %v489
        %v899 = vunpack.c.l.b16 %v490
        %v900 = vunpack.c.h.b16 %v490
        %v901 = vunpack.c.l.b16 %v491
        %v902 = vunpack.c.h.b16 %v491
        %v903 = vunpack.c.l.b16 %v492
        %v904 = vunpack.c.h.b16 %v492
        %v905 = vunpack.c.l.b16 %v493
        %v906 = vunpack.c.h.b16 %v493
        %v907 = vunpack.c.l.b16 %v494
        %v908 = vunpack.c.h.b16 %v494
        %v909 = vunpack.c.l.b16 %v495
        %v910 = vunpack.c.h.b16 %v495
        %v911 = vunpack.c.l.b16 %v496
        %v912 = vunpack.c.h.b16 %v496
        %v913 = vunpack.c.l.b16 %v497
        %v914 = vunpack.c.h.b16 %v497
        %v915 = vunpack.c.l.b16 %v498
        %v916 = vunpack.c.h.b16 %v498
        %v917 = vunpack.c.l.b16 %v499
        %v918 = vunpack.c.h.b16 %v499
        %v919 = vunpack.c.l.b16 %v500
        %v920 = vunpack.c.h.b16 %v500
        %v921 = vunpack.c.l.b16 %v501
        %v922 = vunpack.c.h.b16 %v501
        %v923 = vunpack.c.l.b16 %v502
        %v924 = vunpack.c.h.b16 %v502
        %v925 = vunpack.c.l.b16 %v503
        %v926 = vunpack.c.h.b16 %v503
        %v927 = vunpack.c.l.b16 %v504
        %v928 = vunpack.c.h.b16 %v504
        %v929 = vunpack.c.l.b16 %v505
        %v930 = vunpack.c.h.b16 %v505
        %v931 = vunpack.c.l.b16 %v506
        %v932 = vunpack.c.h.b16 %v506
        %v933 = vunpack.c.l.b16 %v507
        %v934 = vunpack.c.h.b16 %v507
        %v935 = vunpack.c.l.b16 %v508
        %v936 = vunpack.c.h.b16 %v508
        %v937 = vunpack.c.l.b16 %v509
        %v938 = vunpack.c.h.b16 %v509
        %v939 = vunpack.c.l.b16 %v510
        %v940 = vunpack.c.h.b16 %v510
        %v941 = vunpack.c.l.b16 %v511
        %v942 = vunpack.c.h.b16 %v511
        %v943 = vunpack.c.l.b16 %v512
        %v944 = vunpack.c.h.b16 %v512
        %v945 = vunpack.c.l.b16 %v513
        %v946 = vunpack.c.h.b16 %v513
        %v947 = vunpack.c.l.b16 %v514
        %v948 = vunpack.c.h.b16 %v514
        %v949 = vunpack.c.l.b16 %v515
        %v950 = vunpack.c.h.b16 %v515
        %v951 = vunpack.c.l.b16 %v516
        %v952 = vunpack.c.h.b16 %v516
        %v953 = vunpack.c.l.b16 %v517
        %v954 = vunpack.c.h.b16 %v517
        %v955 = vunpack.c.l.b16 %v518
        %v956 = vunpack.c.h.b16 %v518
        %v957 = vunpack.c.l.b16 %v519
        %v958 = vunpack.c.h.b16 %v519
        %v959 = vunpack.c.l.b16 %v520
        %v960 = vunpack.c.h.b16 %v520
        %v961 = vunpack.c.l.b16 %v521
        %v962 = vunpack.c.h.b16 %v521
        %v963 = vunpack.c.l.b16 %v522
        %v964 = vunpack.c.h.b16 %v522
        %v965 = vunpack.c.l.b16 %v523
        %v966 = vunpack.c.h.b16 %v523
        %v967 = vunpack.c.l.b16 %v524
        %v968 = vunpack.c.h.b16 %v524
        %v969 = vunpack.c.l.b16 %v525
        %v970 = vunpack.c.h.b16 %v525
        %v971 = vunpack.c.l.b16 %v526
        %v972 = vunpack.c.h.b16 %v526
        %v973 = vunpack.c.l.b16 %v527
        %v974 = vunpack.c.h.b16 %v527
        %v975 = vunpack.c.l.b16 %v528
        %v976 = vunpack.c.h.b16 %v528
        %v977 = vunpack.c.l.b16 %v529
        %v978 = vunpack.c.h.b16 %v529
        %v979 = vunpack.c.l.b16 %v530
        %v980 = vunpack.c.h.b16 %v530
        %v981 = vunpack.c.l.b16 %v531
        %v982 = vunpack.c.h.b16 %v531
        %v983 = vunpack.c.l.b16 %v532
        %v984 = vunpack.c.h.b16 %v532
        %v985 = vunpack.c.l.b16 %v533
        %v986 = vunpack.c.h.b16 %v533
        %v987 = vunpack.c.l.b16 %v534
        %v988 = vunpack.c.h.b16 %v534
        %v989 = vunpack.c.l.b16 %v535
        %v990 = vunpack.c.h.b16 %v535
        %v991 = vunpack.c.l.b16 %v536
        %v992 = vunpack.c.h.b16 %v536
        %v993 = vunpack.c.l.b16 %v537
        %v994 = vunpack.c.h.b16 %v537
        %v995 = vunpack.c.l.b16 %v538
        %v996 = vunpack.c.h.b16 %v538
        %v997 = vunpack.c.l.b16 %v539
        %v998 = vunpack.c.h.b16 %v539
        %v999 = vunpack.c.l.b16 %v540
        %v1000 = vunpack.c.h.b16 %v540
        %v1001 = vunpack.c.l.b16 %v541
        %v1002 = vunpack.c.h.b16 %v541
        %v1003 = vunpack.c.l.b16 %v542
        %v1004 = vunpack.c.h.b16 %v542
        %v1005 = vunpack.c.l.b16 %v543
        %v1006 = vunpack.c.h.b16 %v543
        %v1007 = vunpack.c.l.b16 %v544
        %v1008 = vunpack.c.h.b16 %v544
        %v1009 = vunpack.c.l.b16 %v545
        %v1010 = vunpack.c.h.b16 %v545
        %v1011 = vunpack.c.l.b16 %v546
        %v1012 = vunpack.c.h.b16 %v546
        %v1013 = vunpack.c.l.b16 %v547
        %v1014 = vunpack.c.h.b16 %v547
        %v1015 = vunpack.c.l.b16 %v548
        %v1016 = vunpack.c.h.b16 %v548
        %v1017 = vunpack.c.l.b16 %v549
        %v1018 = vunpack.c.h.b16 %v549
        %v1019 = vunpack.c.l.b16 %v550
        %v1020 = vunpack.c.h.b16 %v550
        %v1021 = vunpack.c.l.b16 %v551
        %v1022 = vunpack.c.h.b16 %v551
        %v1023 = vunpack.c.l.b16 %v552
        %v1024 = vunpack.c.h.b16 %v552
        %v1025 = vunpack.c.l.b16 %v553
        %v1026 = vunpack.c.h.b16 %v553
        %v1027 = vunpack.c.l.b16 %v554
        %v1028 = vunpack.c.h.b16 %v554
        %v1029 = vunpack.c.l.b16 %v555
        %v1030 = vunpack.c.h.b16 %v555
        %v1031 = vunpack.c.l.b16 %v556
        %v1032 = vunpack.c.h.b16 %v556
        %v1033 = vunpack.c.l.b16 %v557
        %v1034 = vunpack.c.h.b16 %v557
        %v1035 = vunpack.c.l.b16 %v558
        %v1036 = vunpack.c.h.b16 %v558
        %v1037 = vunpack.c.l.b16 %v559
        %v1038 = vunpack.c.h.b16 %v559
        %v1039 = vunpack.c.l.b16 %v560
        %v1040 = vunpack.c.h.b16 %v560
        %v1041 = vunpack.c.l.b16 %v561
        %v1042 = vunpack.c.h.b16 %v561
        %v1043 = vunpack.c.l.b16 %v562
        %v1044 = vunpack.c.h.b16 %v562
        %v1045 = vunpack.c.l.b16 %v563
        %v1046 = vunpack.c.h.b16 %v563
        %v1047 = vunpack.c.l.b16 %v564
        %v1048 = vunpack.c.h.b16 %v564
        %v1049 = vunpack.c.l.b16 %v565
        %v1050 = vunpack.c.h.b16 %v565
        %v1051 = vunpack.c.l.b16 %v566
        %v1052 = vunpack.c.h.b16 %v566
        %v1053 = vunpack.c.l.b16 %v567
        %v1054 = vunpack.c.h.b16 %v567
        %v1055 = vunpack.c.l.b16 %v568
        %v1056 = vunpack.c.h.b16 %v568
        %v1057 = vunpack.c.l.b16 %v569
        %v1058 = vunpack.c.h.b16 %v569
        %v1059 = vunpack.c.l.b16 %v570
        %v1060 = vunpack.c.h.b16 %v570
        %v1061 = vunpack.c.l.b16 %v571
        %v1062 = vunpack.c.h.b16 %v571
        %v1063 = vunpack.c.l.b16 %v572
        %v1064 = vunpack.c.h.b16 %v572
        %v1065 = vunpack.c.l.b16 %v573
        %v1066 = vunpack.c.h.b16 %v573
        %v1067 = vunpack.c.l.b16 %v574
        %v1068 = vunpack.c.h.b16 %v574
        %v1069 = vunpack.c.l.b16 %v575
        %v1070 = vunpack.c.h.b16 %v575
        %v1071 = vunpack.c.l.b16 %v576
        %v1072 = vunpack.c.h.b16 %v576
        %v1073 = vunpack.c.l.b16 %v577
        %v1074 = vunpack.c.h.b16 %v577
        %v1075 = vunpack.c.l.b16 %v578
        %v1076 = vunpack.c.h.b16 %v578
        %v1077 = vunpack.c.l.b16 %v579
        %v1078 = vunpack.c.h.b16 %v579
        %v1079 = vunpack.c.l.b16 %v580
        %v1080 = vunpack.c.h.b16 %v580
        %v1081 = vunpack.c.l.b16 %v581
        %v1082 = vunpack.c.h.b16 %v581
        %v1083 = vunpack.c.l.b16 %v582
        %v1084 = vunpack.c.h.b16 %v582
        %v1085 = vunpack.c.l.b16 %v583
        %v1086 = vunpack.c.h.b16 %v583
        %v1087 = vunpack.c.l.b16 %v584
        %v1088 = vunpack.c.h.b16 %v584
        %v1089 = vunpack.c.l.b16 %v585
        %v1090 = vunpack.c.h.b16 %v585
        %v1091 = vunpack.c.l.b16 %v586
        %v1092 = vunpack.c.h.b16 %v586
        %v1093 = vunpack.c.l.b16 %v587
        %v1094 = vunpack.c.h.b16 %v587
        %v1095 = vunpack.c.l.b16 %v588
        %v1096 = vunpack.c.h.b16 %v588
        %v1097 = vunpack.c.l.b16 %v589
        %v1098 = vunpack.c.h.b16 %v589
        %v1099 = vunpack.c.l.b16 %v590
        %v1100 = vunpack.c.h.b16 %v590
        %v1101 = vunpack.c.l.b16 %v591
        %v1102 = vunpack.c.h.b16 %v591
        %v1103 = vunpack.c.l.b16 %v592
        %v1104 = vunpack.c.h.b16 %v592
        %v1105 = vunpack.c.l.b16 %v593
        %v1106 = vunpack.c.h.b16 %v593
        %v1107 = vunpack.c.l.b16 %v594
        %v1108 = vunpack.c.h.b16 %v594
        %v1109 = vunpack.c.l.b16 %v595
        %v1110 = vunpack.c.h.b16 %v595
        %v1111 = vunpack.c.l.b16 %v596
        %v1112 = vunpack.c.h.b16 %v596
        %v1113 = vunpack.c.l.b16 %v597
        %v1114 = vunpack.c.h.b16 %v597
        %v1115 = vunpack.c.l.b16 %v598
        %v1116 = vunpack.c.h.b16 %v598
        %v1117 = vunpack.c.l.b16 %v599
        %v1118 = vunpack.c.h.b16 %v599
        %v1119 = vunpack.c.l.b16 %v600
        %v1120 = vunpack.c.h.b16 %v600
        %v1121 = vunpack.c.l.b16 %v601
        %v1122 = vunpack.c.h.b16 %v601
        %v1123 = vunpack.c.l.b16 %v602
        %v1124 = vunpack.c.h.b16 %v602
        %v1125 = vunpack.c.l.b16 %v603
        %v1126 = vunpack.c.h.b16 %v603
        %v1127 = vunpack.c.l.b16 %v604
        %v1128 = vunpack.c.h.b16 %v604
        %v1129 = vunpack.c.l.b16 %v605
        %v1130 = vunpack.c.h.b16 %v605
        %v1131 = vunpack.c.l.b16 %v606
        %v1132 = vunpack.c.h.b16 %v606
        %v1133 = vunpack.c.l.b16 %v607
        %v1134 = vunpack.c.h.b16 %v607
        %v1135 = vunpack.c.l.b16 %v608
        %v1136 = vunpack.c.h.b16 %v608
        %v1137 = vunpack.c.l.b16 %v609
        %v1138 = vunpack.c.h.b16 %v609
        %v1139 = vunpack.c.l.b16 %v610
        %v1140 = vunpack.c.h.b16 %v610
        %v1141 = vunpack.c.l.b16 %v611
        %v1142 = vunpack.c.h.b16 %v611
        %v1143 = vunpack.c.l.b16 %v612
        %v1144 = vunpack.c.h.b16 %v612
        %v1145 = vunpack.c.l.b16 %v613
        %v1146 = vunpack.c.h.b16 %v613
        %v1147 = vunpack.c.l.b16 %v614
        %v1148 = vunpack.c.h.b16 %v614
        %v1149 = vunpack.c.l.b16 %v615
        %v1150 = vunpack.c.h.b16 %v615
        %v1151 = vunpack.c.l.b16 %v616
        %v1152 = vunpack.c.h.b16 %v616
        %v1153 = vunpack.c.l.b16 %v617
        %v1154 = vunpack.c.h.b16 %v617
        %v1155 = vunpack.c.l.b16 %v618
        %v1156 = vunpack.c.h.b16 %v618
        %v1157 = vunpack.c.l.b16 %v619
        %v1158 = vunpack.c.h.b16 %v619
        %v1159 = vunpack.c.l.b16 %v620
        %v1160 = vunpack.c.h.b16 %v620
        %v1161 = vunpack.c.l.b16 %v621
        %v1162 = vunpack.c.h.b16 %v621
        %v1163 = vunpack.c.l.b16 %v622
        %v1164 = vunpack.c.h.b16 %v622
        %v1165 = vunpack.c.l.b16 %v623
        %v1166 = vunpack.c.h.b16 %v623
        %v1167 = vunpack.c.l.b16 %v624
        %v1168 = vunpack.c.h.b16 %v624
        %v1169 = vunpack.c.l.b16 %v625
        %v1170 = vunpack.c.h.b16 %v625
        %v1171 = vunpack.c.l.b16 %v626
        %v1172 = vunpack.c.h.b16 %v626
        %v1173 = vunpack.c.l.b16 %v627
        %v1174 = vunpack.c.h.b16 %v627
        %v1175 = vunpack.c.l.b16 %v628
        %v1176 = vunpack.c.h.b16 %v628
        %v1177 = vunpack.c.l.b16 %v629
        %v1178 = vunpack.c.h.b16 %v629
        %v1179 = vunpack.c.l.b16 %v630
        %v1180 = vunpack.c.h.b16 %v630
        %v1181 = vunpack.c.l.b16 %v631
        %v1182 = vunpack.c.h.b16 %v631
        %v1183 = vunpack.c.l.b16 %v632
        %v1184 = vunpack.c.h.b16 %v632
        %v1185 = vunpack.c.l.b16 %v633
        %v1186 = vunpack.c.h.b16 %v633
        %v1187 = vunpack.c.l.b16 %v634
        %v1188 = vunpack.c.h.b16 %v634
        %v1189 = vunpack.c.l.b16 %v635
        %v1190 = vunpack.c.h.b16 %v635
        %v1191 = vunpack.c.l.b16 %v636
        %v1192 = vunpack.c.h.b16 %v636
        %v1193 = vunpack.c.l.b16 %v637
        %v1194 = vunpack.c.h.b16 %v637
        %v1195 = vunpack.c.l.b16 %v638
        %v1196 = vunpack.c.h.b16 %v638
        %v1197 = vunpack.c.l.b16 %v639
        %v1198 = vunpack.c.h.b16 %v639
        %v1199 = vunpack.c.l.b16 %v640
        %v1200 = vunpack.c.h.b16 %v640
        %v1201 = vunpack.c.l.b16 %v641
        %v1202 = vunpack.c.h.b16 %v641
        %v1203 = vunpack.c.l.b16 %v642
        %v1204 = vunpack.c.h.b16 %v642
        %v1205 = vunpack.c.l.b16 %v643
        %v1206 = vunpack.c.h.b16 %v643
        %v1207 = vunpack.c.l.b16 %v644
        %v1208 = vunpack.c.h.b16 %v644
        %v1209 = vunpack.c.l.b16 %v645
        %v1210 = vunpack.c.h.b16 %v645
        %v1211 = vunpack.c.l.b16 %v646
        %v1212 = vunpack.c.h.b16 %v646
        %v1213 = vunpack.c.l.b16 %v647
        %v1214 = vunpack.c.h.b16 %v647
        %v1215 = vunpack.c.l.b16 %v648
        %v1216 = vunpack.c.h.b16 %v648
        %v1217 = vunpack.c.l.b16 %v649
        %v1218 = vunpack.c.h.b16 %v649
        %v1219 = vunpack.c.l.b16 %v650
        %v1220 = vunpack.c.h.b16 %v650
        %v1221 = vunpack.c.l.b16 %v651
        %v1222 = vunpack.c.h.b16 %v651
        %v1223 = vunpack.c.l.b16 %v652
        %v1224 = vunpack.c.h.b16 %v652
        %v1225 = vunpack.c.l.b16 %v653
        %v1226 = vunpack.c.h.b16 %v653
        %v1227 = vunpack.c.l.b16 %v654
        %v1228 = vunpack.c.h.b16 %v654
        %v1229 = vunpack.c.l.b16 %v655
        %v1230 = vunpack.c.h.b16 %v655
        %v1231 = vunpack.c.l.b16 %v656
        %v1232 = vunpack.c.h.b16 %v656
        %v1233 = vunpack.c.l.b16 %v657
        %v1234 = vunpack.c.h.b16 %v657
        %v1235 = vunpack.c.l.b16 %v658
        %v1236 = vunpack.c.h.b16 %v658
        %v1237 = vunpack.c.l.b16 %v659
        %v1238 = vunpack.c.h.b16 %v659
        %v1239 = vunpack.c.l.b16 %v660
        %v1240 = vunpack.c.h.b16 %v660
        %v1241 = vunpack.c.l.b16 %v661
        %v1242 = vunpack.c.h.b16 %v661
        %v1243 = vunpack.c.l.b16 %v662
        %v1244 = vunpack.c.h.b16 %v662
        %v1245 = vunpack.c.l.b16 %v663
        %v1246 = vunpack.c.h.b16 %v663
        %v1247 = vunpack.c.l.b16 %v664
        %v1248 = vunpack.c.h.b16 %v664
        %v1249 = vunpack.c.l.b16 %v665
        %v1250 = vunpack.c.h.b16 %v665
        %v1251 = vunpack.c.l.b16 %v666
        %v1252 = vunpack.c.h.b16 %v666
        %v1253 = vunpack.c.l.b16 %v667
        %v1254 = vunpack.c.h.b16 %v667
        %v1255 = vunpack.c.l.b16 %v668
        %v1256 = vunpack.c.h.b16 %v668
        %v1257 = vunpack.c.l.b16 %v669
        %v1258 = vunpack.c.h.b16 %v669
        %v1259 = vunpack.c.l.b16 %v670
        %v1260 = vunpack.c.h.b16 %v670
        %v1261 = vunpack.c.l.b16 %v671
        %v1262 = vunpack.c.h.b16 %v671
        %v1263 = vunpack.c.l.b16 %v672
        %v1264 = vunpack.c.h.b16 %v672
        %v1265 = vunpack.c.l.b16 %v673
        %v1266 = vunpack.c.h.b16 %v673
        %v1267 = vunpack.c.l.b16 %v674
        %v1268 = vunpack.c.h.b16 %v674
        %v1269 = vunpack.c.l.b16 %v675
        %v1270 = vunpack.c.h.b16 %v675
        %v1271 = vunpack.c.l.b16 %v676
        %v1272 = vunpack.c.h.b16 %v676
        %v1273 = vunpack.c.l.b16 %v677
        %v1274 = vunpack.c.h.b16 %v677
        %v1275 = vunpack.c.l.b16 %v678
        %v1276 = vunpack.c.h.b16 %v678
        %v1277 = vunpack.c.l.b16 %v679
        %v1278 = vunpack.c.h.b16 %v679
        %v1279 = vunpack.c.l.b16 %v680
        %v1280 = vunpack.c.h.b16 %v680
        %v1281 = vpack.c.b16 %v891, %v889
        %v1282 = vpack.c.b16 %v892, %v890
        %v1283 = vpack.c.b16 %v895, %v893
        %v1284 = vpack.c.b16 %v896, %v894
        %v1285 = vpack.c.b16 %v899, %v897
        %v1286 = vpack.c.b16 %v900, %v898
        %v1287 = vpack.c.b16 %v903, %v901
        %v1288 = vpack.c.b16 %v904, %v902
        %v1289 = vpack.c.b16 %v907, %v905
        %v1290 = vpack.c.b16 %v908, %v906
        %v1291 = vpack.c.b16 %v911, %v909
        %v1292 = vpack.c.b16 %v912, %v910
        %v1293 = vpack.c.b16 %v915, %v913
        %v1294 = vpack.c.b16 %v916, %v914
        %v1295 = vpack.c.b16 %v919, %v917
        %v1296 = vpack.c.b16 %v920, %v918
        %v1297 = vpack.c.b16 %v923, %v921
        %v1298 = vpack.c.b16 %v924, %v922
        %v1299 = vpack.c.b16 %v927, %v925
        %v1300 = vpack.c.b16 %v928, %v926
        %v1301 = vpack.c.b16 %v931, %v929
        %v1302 = vpack.c.b16 %v932, %v930
        %v1303 = vpack.c.b16 %v935, %v933
        %v1304 = vpack.c.b16 %v936, %v934
        %v1305 = vpack.c.b16 %v939, %v937
        %v1306 = vpack.c.b16 %v940, %v938
        %v1307 = vpack.c.b16 %v943, %v941
        %v1308 = vpack.c.b16 %v944, %v942
        %v1309 = vpack.c.b16 %v947, %v945
        %v1310 = vpack.c.b16 %v948, %v946
        %v1311 = vpack.c.b16 %v951, %v949
        %v1312 = vpack.c.b16 %v952, %v950
        %v1313 = vpack.c.b16 %v955, %v953
        %v1314 = vpack.c.b16 %v956, %v954
        %v1315 = vpack.c.b16 %v959, %v957
        %v1316 = vpack.c.b16 %v960, %v958
        %v1317 = vpack.c.b16 %v963, %v961
        %v1318 = vpack.c.b16 %v964, %v962
        %v1319 = vpack.c.b16 %v967, %v965
        %v1320 = vpack.c.b16 %v968, %v966
        %v1321 = vpack.c.b16 %v971, %v969
        %v1322 = vpack.c.b16 %v972, %v970
        %v1323 = vpack.c.b16 %v975, %v973
        %v1324 = vpack.c.b16 %v976, %v974
        %v1325 = vpack.c.b16 %v979, %v977
        %v1326 = vpack.c.b16 %v980, %v978
        %v1327 = vpack.c.b16 %v983, %v981
        %v1328 = vpack.c.b16 %v984, %v982
        %v1329 = vpack.c.b16 %v987, %v985
        %v1330 = vpack.c.b16 %v988, %v986
        %v1331 = vpack.c.b16 %v991, %v989
        %v1332 = vpack.c.b16 %v992, %v990
        %v1333 = vpack.c.b16 %v995, %v993
        %v1334 = vpack.c.b16 %v996, %v994
        %v1335 = vpack.c.b16 %v999, %v997
        %v1336 = vpack.c.b16 %v1000, %v998
        %v1337 = vpack.c.b16 %v1003, %v1001
        %v1338 = vpack.c.b16 %v1004, %v1002
        %v1339 = vpack.c.b16 %v1007, %v1005
        %v1340 = vpack.c.b16 %v1008, %v1006
        %v1341 = vpack.c.b16 %v1011, %v1009
        %v1342 = vpack.c.b16 %v1012, %v1010
        %v1343 = vpack.c.b16 %v1015, %v1013
        %v1344 = vpack.c.b16 %v1016, %v1014
        %v1345 = vpack.c.b16 %v1019, %v1017
        %v1346 = vpack.c.b16 %v1020, %v1018
        %v1347 = vpack.c.b16 %v1023, %v1021
        %v1348 = vpack.c.b16 %v1024, %v1022
        %v1349 = vpack.c.b16 %v1027, %v1025
        %v1350 = vpack.c.b16 %v1028, %v1026
        %v1351 = vpack.c.b16 %v1031, %v1029
        %v1352 = vpack.c.b16 %v1032, %v1030
        %v1353 = vpack.c.b16 %v1035, %v1033
        %v1354 = vpack.c.b16 %v1036, %v1034
        %v1355 = vpack.c.b16 %v1039, %v1037
        %v1356 = vpack.c.b16 %v1040, %v1038
        %v1357 = vpack.c.b16 %v1043, %v1041
        %v1358 = vpack.c.b16 %v1044, %v1042
        %v1359 = vpack.c.b16 %v1047, %v1045
        %v1360 = vpack.c.b16 %v1048, %v1046
        %v1361 = vpack.c.b16 %v1051, %v1049
        %v1362 = vpack.c.b16 %v1052, %v1050
        %v1363 = vpack.c.b16 %v1055, %v1053
        %v1364 = vpack.c.b16 %v1056, %v1054
        %v1365 = vpack.c.b16 %v1059, %v1057
        %v1366 = vpack.c.b16 %v1060, %v1058
        %v1367 = vpack.c.b16 %v1063, %v1061
        %v1368 = vpack.c.b16 %v1064, %v1062
        %v1369 = vpack.c.b16 %v1067, %v1065
        %v1370 = vpack.c.b16 %v1068, %v1066
        %v1371 = vpack.c.b16 %v1071, %v1069
        %v1372 = vpack.c.b16 %v1072, %v1070
        %v1373 = vpack.c.b16 %v1075, %v1073
        %v1374 = vpack.c.b16 %v1076, %v1074
        %v1375 = vpack.c.b16 %v1079, %v1077
        %v1376 = vpack.c.b16 %v1080, %v1078
        %v1377 = vpack.c.b16 %v1083, %v1081
        %v1378 = vpack.c.b16 %v1084, %v1082
        %v1379 = vpack.c.b16 %v1087, %v1085
        %v1380 = vpack.c.b16 %v1088, %v1086
        %v1381 = vpack.c.b16 %v1091, %v1089
        %v1382 = vpack.c.b16 %v1092, %v1090
        %v1383 = vpack.c.b16 %v1095, %v1093
        %v1384 = vpack.c.b16 %v1096, %v1094
        %v1385 = vpack.c.b16 %v1099, %v1097
        %v1386 = vpack.c.b16 %v1100, %v1098
        %v1387 = vpack.c.b16 %v1103, %v1101
        %v1388 = vpack.c.b16 %v1104, %v1102
        %v1389 = vpack.c.b16 %v1107, %v1105
        %v1390 = vpack.c.b16 %v1108, %v1106
        %v1391 = vpack.c.b16 %v1111, %v1109
        %v1392 = vpack.c.b16 %v1112, %v1110
        %v1393 = vpack.c.b16 %v1115, %v1113
        %v1394 = vpack.c.b16 %v1116, %v1114
        %v1395 = vpack.c.b16 %v1119, %v1117
        %v1396 = vpack.c.b16 %v1120, %v1118
        %v1397 = vpack.c.b16 %v1123, %v1121
        %v1398 = vpack.c.b16 %v1124, %v1122
        %v1399 = vpack.c.b16 %v1127, %v1125
        %v1400 = vpack.c.b16 %v1128, %v1126
        %v1401 = vpack.c.b16 %v1131, %v1129
        %v1402 = vpack.c.b16 %v1132, %v1130
        %v1403 = vpack.c.b16 %v1135, %v1133
        %v1404 = vpack.c.b16 %v1136, %v1134
        %v1405 = vpack.c.b16 %v1139, %v1137
        %v1406 = vpack.c.b16 %v1140, %v1138
        %v1407 = vpack.c.b16 %v1143, %v1141
        %v1408 = vpack.c.b16 %v1144, %v1142
        %v1409 = vpack.c.b16 %v1147, %v1145
        %v1410 = vpack.c.b16 %v1148, %v1146
        %v1411 = vpack.c.b16 %v1151, %v1149
        %v1412 = vpack.c.b16 %v1152, %v1150
        %v1413 = vpack.c.b16 %v1155, %v1153
        %v1414 = vpack.c.b16 %v1156, %v1154
        %v1415 = vpack.c.b16 %v1159, %v1157
        %v1416 = vpack.c.b16 %v1160, %v1158
        %v1417 = vpack.c.b16 %v1163, %v1161
        %v1418 = vpack.c.b16 %v1164, %v1162
        %v1419 = vpack.c.b16 %v1167, %v1165
        %v1420 = vpack.c.b16 %v1168, %v1166
        %v1421 = vpack.c.b16 %v1171, %v1169
        %v1422 = vpack.c.b16 %v1172, %v1170
        %v1423 = vpack.c.b16 %v1175, %v1173
        %v1424 = vpack.c.b16 %v1176, %v1174
        %v1425 = vpack.c.b16 %v1179, %v1177
        %v1426 = vpack.c.b16 %v1180, %v1178
        %v1427 = vpack.c.b16 %v1183, %v1181
        %v1428 = vpack.c.b16 %v1184, %v1182
        %v1429 = vpack.c.b16 %v1187, %v1185
        %v1430 = vpack.c.b16 %v1188, %v1186
        %v1431 = vpack.c.b16 %v1191, %v1189
        %v1432 = vpack.c.b16 %v1192, %v1190
        %v1433 = vpack.c.b16 %v1195, %v1193
        %v1434 = vpack.c.b16 %v1196, %v1194
        %v1435 = vpack.c.b16 %v1199, %v1197
        %v1436 = vpack.c.b16 %v1200, %v1198
        %v1437 = vpack.c.b16 %v1203, %v1201
        %v1438 = vpack.c.b16 %v1204, %v1202
        %v1439 = vpack.c.b16 %v1207, %v1205
        %v1440 = vpack.c.b16 %v1208, %v1206
        %v1441 = vpack.c.b16 %v1211, %v1209
        %v1442 = vpack.c.b16 %v1212, %v1210
        %v1443 = vpack.c.b16 %v1215, %v1213
        %v1444 = vpack.c.b16 %v1216, %v1214
        %v1445 = vpack.c.b16 %v1219, %v1217
        %v1446 = vpack.c.b16 %v1220, %v1218
        %v1447 = vpack.c.b16 %v1223, %v1221
        %v1448 = vpack.c.b16 %v1224, %v1222
        %v1449 = vpack.c.b16 %v1227, %v1225
        %v1450 = vpack.c.b16 %v1228, %v1226
        %v1451 = vpack.c.b16 %v1231, %v1229
        %v1452 = vpack.c.b16 %v1232, %v1230
        %v1453 = vpack.c.b16 %v1235, %v1233
        %v1454 = vpack.c.b16 %v1236, %v1234
        %v1455 = vpack.c.b16 %v1239, %v1237
        %v1456 = vpack.c.b16 %v1240, %v1238
        %v1457 = vpack.c.b16 %v1243, %v1241
        %v1458 = vpack.c.b16 %v1244, %v1242
        %v1459 = vpack.c.b16 %v1247, %v1245
        %v1460 = vpack.c.b16 %v1248, %v1246
        %v1461 = vpack.c.b16 %v1251, %v1249
        %v1462 = vpack.c.b16 %v1252, %v1250
        %v1463 = vpack.c.b16 %v1255, %v1253
        %v1464 = vpack.c.b16 %v1256, %v1254
        %v1465 = vpack.c.b16 %v1259, %v1257
        %v1466 = vpack.c.b16 %v1260, %v1258
        %v1467 = vpack.c.b16 %v1263, %v1261
        %v1468 = vpack.c.b16 %v1264, %v1262
        %v1469 = vpack.c.b16 %v1267, %v1265
        %v1470 = vpack.c.b16 %v1268, %v1266
        %v1471 = vpack.c.b16 %v1271, %v1269
        %v1472 = vpack.c.b16 %v1272, %v1270
        %v1473 = vpack.c.b16 %v1275, %v1273
        %v1474 = vpack.c.b16 %v1276, %v1274
        %v1475 = vpack.c.b16 %v1279, %v1277
        %v1476 = vpack.c.b16 %v1280, %v1278
        %vm1673 = vcmask 261120
        %v1675 = vsel %vm1673, %v484, 0
        %1677 = vmatprep.subr.bf16.mxu0 %v1282
        %1678 = vmatpush1.bf16.msra.mxu0 %v1281
        %1679 = vmatprep.subr.bf16.mxu0 %v1284
        %1680 = vmatpush1.bf16.msra.mxu0 %v1283
        %1681 = vmatprep.subr.bf16.mxu0 %v1286
        %1682 = vmatpush1.bf16.msra.mxu0 %v1285
        %1683 = vmatprep.subr.bf16.mxu0 %v1288
        %1684 = vmatpush1.bf16.msra.mxu0 %v1287
        %1685 = vmatprep.subr.bf16.mxu0 %v1290
        %1686 = vmatpush1.bf16.msra.mxu0 %v1289
        %1687 = vmatprep.subr.bf16.mxu0 %v1292
        %1688 = vmatpush1.bf16.msra.mxu0 %v1291
        %1689 = vmatprep.subr.bf16.mxu0 %v1294
        %1690 = vmatpush1.bf16.msra.mxu0 %v1293
        %1691 = vmatprep.subr.bf16.mxu0 %v1296
        %1692 = vmatpush1.bf16.msra.mxu0 %v1295
        %1693 = vmatprep.subr.bf16.mxu0 %v1298
        %1694 = vmatpush1.bf16.msra.mxu0 %v1297
        %1695 = vmatprep.subr.bf16.mxu0 %v1300
        %1696 = vmatpush1.bf16.msra.mxu0 %v1299
        %1697 = vmatprep.subr.bf16.mxu0 %v1302
        %1698 = vmatpush1.bf16.msra.mxu0 %v1301
        %1699 = vmatprep.subr.bf16.mxu0 %v1304
        %1700 = vmatpush1.bf16.msra.mxu0 %v1303
        %1701 = vmatprep.subr.bf16.mxu0 %v1306
        %1702 = vmatpush1.bf16.msra.mxu0 %v1305
        %1703 = vmatprep.subr.bf16.mxu0 %v1308
        %1704 = vmatpush1.bf16.msra.mxu0 %v1307
        %1705 = vmatprep.subr.bf16.mxu0 %v1310
        %1706 = vmatpush1.bf16.msra.mxu0 %v1309
        %1707 = vmatprep.subr.bf16.mxu0 %v1312
        %1708 = vmatpush1.bf16.msra.mxu0 %v1311
        %1709 = vmatprep.mubr.bf16.mxu0 %v473
        %1710 = vmatmul.mubr.bf16.gmra.mrb[0].mxu0 %v472
        %v1711 = vpop.f32.mrb[0].mxu0
        %v1712 = vadd.f32 %v686, %v1711
        %v1713 = vpop.f32.mrb[0].mxu0
        %v1714 = vadd.f32 %v690, %v1713
        %v1715 = vpop.f32.mrb[0].mxu0
        %v1716 = vadd.f32 %v686, %v1715
        %v1717 = vpop.f32.mrb[0].mxu0
        %v1718 = vadd.f32 %v690, %v1717
        %1719 = vdwg.mxu0
        %1720 = vmatprep.subr.bf16.mxu0 %v1314
        %1721 = vmatpush1.bf16.msra.mxu0 %v1313
        %1722 = vmatprep.subr.bf16.mxu0 %v1316
        %1723 = vmatpush1.bf16.msra.mxu0 %v1315
        %1724 = vmatprep.subr.bf16.mxu0 %v1318
        %1725 = vmatpush1.bf16.msra.mxu0 %v1317
        %1726 = vmatprep.subr.bf16.mxu0 %v1320
        %1727 = vmatpush1.bf16.msra.mxu0 %v1319
        %1728 = vmatprep.subr.bf16.mxu0 %v1322
        %1729 = vmatpush1.bf16.msra.mxu0 %v1321
        %1730 = vmatprep.subr.bf16.mxu0 %v1324
        %1731 = vmatpush1.bf16.msra.mxu0 %v1323
        %1732 = vmatprep.subr.bf16.mxu0 %v1326
        %1733 = vmatpush1.bf16.msra.mxu0 %v1325
        %1734 = vmatprep.subr.bf16.mxu0 %v1328
        %1735 = vmatpush1.bf16.msra.mxu0 %v1327
        %1736 = vmatprep.subr.bf16.mxu0 %v1330
        %1737 = vmatpush1.bf16.msra.mxu0 %v1329
        %1738 = vmatprep.subr.bf16.mxu0 %v1332
        %1739 = vmatpush1.bf16.msra.mxu0 %v1331
        %1740 = vmatprep.subr.bf16.mxu0 %v1334
        %1741 = vmatpush1.bf16.msra.mxu0 %v1333
        %1742 = vmatprep.subr.bf16.mxu0 %v1336
        %1743 = vmatpush1.bf16.msra.mxu0 %v1335
        %1744 = vmatprep.subr.bf16.mxu0 %v1338
        %1745 = vmatpush1.bf16.msra.mxu0 %v1337
        %1746 = vmatprep.subr.bf16.mxu0 %v1340
        %1747 = vmatpush1.bf16.msra.mxu0 %v1339
        %1748 = vmatprep.subr.bf16.mxu0 %v1342
        %1749 = vmatpush1.bf16.msra.mxu0 %v1341
        %1750 = vmatprep.subr.bf16.mxu0 %v1344
        %1751 = vmatpush1.bf16.msra.mxu0 %v1343
        %1752 = vmatprep.mubr.bf16.mxu0 %v475
        %1753 = vmatmul.mubr.bf16.gmra.mrb[0].mxu0 %v474
        %v1754 = vpop.f32.mrb[0].mxu0
        %v1755 = vadd.f32 %v1712, %v1754
        %v1756 = vpop.f32.mrb[0].mxu0
        %v1757 = vadd.f32 %v1714, %v1756
        %v1758 = vpop.f32.mrb[0].mxu0
        %v1759 = vadd.f32 %v1716, %v1758
        %v1760 = vpop.f32.mrb[0].mxu0
        %v1761 = vadd.f32 %v1718, %v1760
        %1762 = vdwg.mxu0
        %1763 = vmatprep.subr.bf16.mxu0 %v1346
        %1764 = vmatpush1.bf16.msra.mxu0 %v1345
        %1765 = vmatprep.subr.bf16.mxu0 %v1348
        %1766 = vmatpush1.bf16.msra.mxu0 %v1347
        %1767 = vmatprep.subr.bf16.mxu0 %v1350
        %1768 = vmatpush1.bf16.msra.mxu0 %v1349
        %1769 = vmatprep.subr.bf16.mxu0 %v1352
        %1770 = vmatpush1.bf16.msra.mxu0 %v1351
        %1771 = vmatprep.subr.bf16.mxu0 %v1354
        %1772 = vmatpush1.bf16.msra.mxu0 %v1353
        %1773 = vmatprep.subr.bf16.mxu0 %v1356
        %1774 = vmatpush1.bf16.msra.mxu0 %v1355
        %1775 = vmatprep.subr.bf16.mxu0 %v1358
        %1776 = vmatpush1.bf16.msra.mxu0 %v1357
        %1777 = vmatprep.subr.bf16.mxu0 %v1360
        %1778 = vmatpush1.bf16.msra.mxu0 %v1359
        %1779 = vmatprep.subr.bf16.mxu0 %v1362
        %1780 = vmatpush1.bf16.msra.mxu0 %v1361
        %1781 = vmatprep.subr.bf16.mxu0 %v1364
        %1782 = vmatpush1.bf16.msra.mxu0 %v1363
        %1783 = vmatprep.subr.bf16.mxu0 %v1366
        %1784 = vmatpush1.bf16.msra.mxu0 %v1365
        %1785 = vmatprep.subr.bf16.mxu0 %v1368
        %1786 = vmatpush1.bf16.msra.mxu0 %v1367
        %1787 = vmatprep.subr.bf16.mxu0 %v1370
        %1788 = vmatpush1.bf16.msra.mxu0 %v1369
        %1789 = vmatprep.subr.bf16.mxu0 %v1372
        %1790 = vmatpush1.bf16.msra.mxu0 %v1371
        %1791 = vmatprep.subr.bf16.mxu0 %v1374
        %1792 = vmatpush1.bf16.msra.mxu0 %v1373
        %1793 = vmatprep.subr.bf16.mxu0 %v1376
        %1794 = vmatpush1.bf16.msra.mxu0 %v1375
        %1795 = vmatprep.mubr.bf16.mxu0 %v477
        %1796 = vmatmul.mubr.bf16.gmra.mrb[0].mxu0 %v476
        %v1797 = vpop.f32.mrb[0].mxu0
        %v1798 = vadd.f32 %v1755, %v1797
        %v1799 = vpop.f32.mrb[0].mxu0
        %v1800 = vadd.f32 %v1757, %v1799
        %v1801 = vpop.f32.mrb[0].mxu0
        %v1802 = vadd.f32 %v1759, %v1801
        %v1803 = vpop.f32.mrb[0].mxu0
        %v1804 = vadd.f32 %v1761, %v1803
        %1805 = vdwg.mxu0
        %1806 = vmatprep.subr.bf16.mxu0 %v1378
        %1807 = vmatpush1.bf16.msra.mxu0 %v1377
        %1808 = vmatprep.subr.bf16.mxu0 %v1380
        %1809 = vmatpush1.bf16.msra.mxu0 %v1379
        %1810 = vmatprep.subr.bf16.mxu0 %v1382
        %1811 = vmatpush1.bf16.msra.mxu0 %v1381
        %1812 = vmatprep.subr.bf16.mxu0 %v1384
        %1813 = vmatpush1.bf16.msra.mxu0 %v1383
        %1814 = vmatprep.subr.bf16.mxu0 %v1386
        %1815 = vmatpush1.bf16.msra.mxu0 %v1385
        %1816 = vmatprep.subr.bf16.mxu0 %v1388
        %1817 = vmatpush1.bf16.msra.mxu0 %v1387
        %1818 = vmatprep.subr.bf16.mxu0 %v1390
        %1819 = vmatpush1.bf16.msra.mxu0 %v1389
        %1820 = vmatprep.subr.bf16.mxu0 %v1392
        %1821 = vmatpush1.bf16.msra.mxu0 %v1391
        %1822 = vmatprep.subr.bf16.mxu0 %v1394
        %1823 = vmatpush1.bf16.msra.mxu0 %v1393
        %1824 = vmatprep.subr.bf16.mxu0 %v1396
        %1825 = vmatpush1.bf16.msra.mxu0 %v1395
        %1826 = vmatprep.subr.bf16.mxu0 %v1398
        %1827 = vmatpush1.bf16.msra.mxu0 %v1397
        %1828 = vmatprep.subr.bf16.mxu0 %v1400
        %1829 = vmatpush1.bf16.msra.mxu0 %v1399
        %1830 = vmatprep.subr.bf16.mxu0 %v1402
        %1831 = vmatpush1.bf16.msra.mxu0 %v1401
        %1832 = vmatprep.subr.bf16.mxu0 %v1404
        %1833 = vmatpush1.bf16.msra.mxu0 %v1403
        %1834 = vmatprep.subr.bf16.mxu0 %v1406
        %1835 = vmatpush1.bf16.msra.mxu0 %v1405
        %1836 = vmatprep.subr.bf16.mxu0 %v1408
        %1837 = vmatpush1.bf16.msra.mxu0 %v1407
        %1838 = vmatprep.mubr.bf16.mxu0 %v479
        %1839 = vmatmul.mubr.bf16.gmra.mrb[0].mxu0 %v478
        %v1840 = vpop.f32.mrb[0].mxu0
        %v1841 = vadd.f32 %v1798, %v1840
        %v1842 = vpop.f32.mrb[0].mxu0
        %v1843 = vadd.f32 %v1800, %v1842
        %v1844 = vpop.f32.mrb[0].mxu0
        %v1845 = vadd.f32 %v1802, %v1844
        %v1846 = vpop.f32.mrb[0].mxu0
        %v1847 = vadd.f32 %v1804, %v1846
        %1848 = vdwg.mxu0
        %1849 = vmatprep.subr.bf16.mxu0 %v1410
        %1850 = vmatpush1.bf16.msra.mxu0 %v1409
        %1851 = vmatprep.subr.bf16.mxu0 %v1412
        %1852 = vmatpush1.bf16.msra.mxu0 %v1411
        %1853 = vmatprep.subr.bf16.mxu0 %v1414
        %1854 = vmatpush1.bf16.msra.mxu0 %v1413
        %1855 = vmatprep.subr.bf16.mxu0 %v1416
        %1856 = vmatpush1.bf16.msra.mxu0 %v1415
        %1857 = vmatprep.subr.bf16.mxu0 %v1418
        %1858 = vmatpush1.bf16.msra.mxu0 %v1417
        %1859 = vmatprep.subr.bf16.mxu0 %v1420
        %1860 = vmatpush1.bf16.msra.mxu0 %v1419
        %1861 = vmatprep.subr.bf16.mxu0 %v1422
        %1862 = vmatpush1.bf16.msra.mxu0 %v1421
        %1863 = vmatprep.subr.bf16.mxu0 %v1424
        %1864 = vmatpush1.bf16.msra.mxu0 %v1423
        %1865 = vmatprep.subr.bf16.mxu0 %v1426
        %1866 = vmatpush1.bf16.msra.mxu0 %v1425
        %1867 = vmatprep.subr.bf16.mxu0 %v1428
        %1868 = vmatpush1.bf16.msra.mxu0 %v1427
        %1869 = vmatprep.subr.bf16.mxu0 %v1430
        %1870 = vmatpush1.bf16.msra.mxu0 %v1429
        %1871 = vmatprep.subr.bf16.mxu0 %v1432
        %1872 = vmatpush1.bf16.msra.mxu0 %v1431
        %1873 = vmatprep.subr.bf16.mxu0 %v1434
        %1874 = vmatpush1.bf16.msra.mxu0 %v1433
        %1875 = vmatprep.subr.bf16.mxu0 %v1436
        %1876 = vmatpush1.bf16.msra.mxu0 %v1435
        %1877 = vmatprep.subr.bf16.mxu0 %v1438
        %1878 = vmatpush1.bf16.msra.mxu0 %v1437
        %1879 = vmatprep.subr.bf16.mxu0 %v1440
        %1880 = vmatpush1.bf16.msra.mxu0 %v1439
        %1881 = vmatprep.mubr.bf16.mxu0 %v481
        %1882 = vmatmul.mubr.bf16.gmra.mrb[0].mxu0 %v480
        %v1883 = vpop.f32.mrb[0].mxu0
        %v1884 = vadd.f32 %v1841, %v1883
        %v1885 = vpop.f32.mrb[0].mxu0
        %v1886 = vadd.f32 %v1843, %v1885
        %v1887 = vpop.f32.mrb[0].mxu0
        %v1888 = vadd.f32 %v1845, %v1887
        %v1889 = vpop.f32.mrb[0].mxu0
        %v1890 = vadd.f32 %v1847, %v1889
        %1891 = vdwg.mxu0
        %1892 = vmatprep.subr.bf16.mxu0 %v1442
        %1893 = vmatpush1.bf16.msra.mxu0 %v1441
        %1894 = vmatprep.subr.bf16.mxu0 %v1444
        %1895 = vmatpush1.bf16.msra.mxu0 %v1443
        %1896 = vmatprep.subr.bf16.mxu0 %v1446
        %1897 = vmatpush1.bf16.msra.mxu0 %v1445
        %1898 = vmatprep.subr.bf16.mxu0 %v1448
        %1899 = vmatpush1.bf16.msra.mxu0 %v1447
        %1900 = vmatprep.subr.bf16.mxu0 %v1450
        %1901 = vmatpush1.bf16.msra.mxu0 %v1449
        %1902 = vmatprep.subr.bf16.mxu0 %v1452
        %1903 = vmatpush1.bf16.msra.mxu0 %v1451
        %1904 = vmatprep.subr.bf16.mxu0 %v1454
        %1905 = vmatpush1.bf16.msra.mxu0 %v1453
        %1906 = vmatprep.subr.bf16.mxu0 %v1456
        %1907 = vmatpush1.bf16.msra.mxu0 %v1455
        %1908 = vmatprep.subr.bf16.mxu0 %v1458
        %1909 = vmatpush1.bf16.msra.mxu0 %v1457
        %1910 = vmatprep.subr.bf16.mxu0 %v1460
        %1911 = vmatpush1.bf16.msra.mxu0 %v1459
        %1912 = vmatprep.subr.bf16.mxu0 %v1462
        %1913 = vmatpush1.bf16.msra.mxu0 %v1461
        %1914 = vmatprep.subr.bf16.mxu0 %v1464
        %1915 = vmatpush1.bf16.msra.mxu0 %v1463
        %1916 = vmatprep.subr.bf16.mxu0 %v1466
        %1917 = vmatpush1.bf16.msra.mxu0 %v1465
        %1918 = vmatprep.subr.bf16.mxu0 %v1468
        %1919 = vmatpush1.bf16.msra.mxu0 %v1467
        %1920 = vmatprep.subr.bf16.mxu0 %v1470
        %1921 = vmatpush1.bf16.msra.mxu0 %v1469
        %1922 = vmatprep.subr.bf16.mxu0 %v1472
        %1923 = vmatpush1.bf16.msra.mxu0 %v1471
        %1924 = vmatprep.mubr.bf16.mxu0 %v483
        %1925 = vmatmul.mubr.bf16.gmra.mrb[0].mxu0 %v482
        %v1926 = vpop.f32.mrb[0].mxu0
        %v1927 = vadd.f32 %v1884, %v1926
        %v1928 = vpop.f32.mrb[0].mxu0
        %v1929 = vadd.f32 %v1886, %v1928
        %v1930 = vpop.f32.mrb[0].mxu0
        %v1931 = vadd.f32 %v1888, %v1930
        %v1932 = vpop.f32.mrb[0].mxu0
        %v1933 = vadd.f32 %v1890, %v1932
        %1934 = vdwg.mxu0
        %1935 = vmatprep.subr.bf16.mxu0 %v1474
        %1936 = vmatpush1.bf16.msra.mxu0 %v1473
        %1937 = vmatprep.subr.bf16.mxu0 %v1476
        %1938 = vmatpush1.bf16.msra.mxu0 %v1475
        %1939 = vmatprep.subr.bf16.mxu0 0
        %1940 = vmatpush1.bf16.msra.mxu0 0
        %1941 = vmatprep.subr.bf16.mxu0 0
        %1942 = vmatpush1.bf16.msra.mxu0 0
        %1943 = vmatprep.subr.bf16.mxu0 0
        %1944 = vmatpush1.bf16.msra.mxu0 0
        %1945 = vmatprep.subr.bf16.mxu0 0
        %1946 = vmatpush1.bf16.msra.mxu0 0
        %1947 = vmatprep.subr.bf16.mxu0 0
        %1948 = vmatpush1.bf16.msra.mxu0 0
        %1949 = vmatprep.subr.bf16.mxu0 0
        %1950 = vmatpush1.bf16.msra.mxu0 0
        %1951 = vmatprep.subr.bf16.mxu0 0
        %1952 = vmatpush1.bf16.msra.mxu0 0
        %1953 = vmatprep.subr.bf16.mxu0 0
        %1954 = vmatpush1.bf16.msra.mxu0 0
        %1955 = vmatprep.subr.bf16.mxu0 0
        %1956 = vmatpush1.bf16.msra.mxu0 0
        %1957 = vmatprep.subr.bf16.mxu0 0
        %1958 = vmatpush1.bf16.msra.mxu0 0
        %1959 = vmatprep.subr.bf16.mxu0 0
        %1960 = vmatpush1.bf16.msra.mxu0 0
        %1961 = vmatprep.subr.bf16.mxu0 0
        %1962 = vmatpush1.bf16.msra.mxu0 0
        %1963 = vmatprep.subr.bf16.mxu0 0
        %1964 = vmatpush1.bf16.msra.mxu0 0
        %1965 = vmatprep.subr.bf16.mxu0 0
        %1966 = vmatpush1.bf16.msra.mxu0 0
        %1967 = vmatprep.mubr.bf16.mxu0 0
        %1968 = vmatmul.mubr.bf16.gmra.mrb[0].mxu0 %v1675
        %v1969 = vpop.f32.mrb[0].mxu0
        %v1970 = vadd.f32 %v1927, %v1969
        %v1971 = vpop.f32.mrb[0].mxu0
        %v1972 = vadd.f32 %v1929, %v1971
        %v1973 = vpop.f32.mrb[0].mxu0
        %v1974 = vadd.f32 %v1931, %v1973
        %v1975 = vpop.f32.mrb[0].mxu0
        %v1976 = vadd.f32 %v1933, %v1975
        %1977 = vdwg.mxu0
        %v1978 = vmax.f32 %v1970, 0.0
        %v1979 = vmax.f32 %v1972, 0.0
        %v1980 = vmax.f32 %v1974, 0.0
        %v1981 = vmax.f32 %v1976, 0.0
        %v1982 = vpack.c.bf16 %v1980, %v1978
        %v1983 = vpack.c.bf16 %v1981, %v1979
        %v1984 = vld [vmem:[%s3] sm:$0xf]
        %v1985 = vld [vmem:[%s3 + $0x4] sm:$0xf]
        %v1986 = vld [vmem:[%s3 + $0x8] sm:$0xf]
        %v1987 = vld [vmem:[%s3 + $0xc] sm:$0xf]
        %v1988 = vld [vmem:[%s3 + $0x10] sm:$0xf]
        %v1989 = vld [vmem:[%s3 + $0x14] sm:$0xf]
        %v1990 = vld [vmem:[%s3 + $0x18] sm:$0xf]
        %v1991 = vld [vmem:[%s3 + $0x1c] sm:$0xf]
        %v1992 = vld [vmem:[%s3 + $0x20] sm:$0xf]
        %v1993 = vld [vmem:[%s3 + $0x24] sm:$0xf]
        %v1994 = vld [vmem:[%s3 + $0x28] sm:$0xf]
        %v1995 = vld [vmem:[%s3 + $0x2c] sm:$0xf]
        %v1996 = vld [vmem:[%s3 + $0x30] sm:$0xf]
        %v1997 = vld [vmem:[%s3 + $0x34] sm:$0xf]
        %v1998 = vld [vmem:[%s3 + $0x38] sm:$0xf]
        %v1999 = vld [vmem:[%s3 + $0x3c] sm:$0xf]
        %v2000 = vld [vmem:[%s3 + $0x40] sm:$0xf]
        %v2001 = vld [vmem:[%s3 + $0x44] sm:$0xf]
        %v2002 = vld [vmem:[%s3 + $0x48] sm:$0xf]
        %v2003 = vld [vmem:[%s3 + $0x4c] sm:$0xf]
        %v2004 = vld [vmem:[%s3 + $0x50] sm:$0xf]
        %v2005 = vld [vmem:[%s3 + $0x54] sm:$0xf]
        %v2006 = vld [vmem:[%s3 + $0x58] sm:$0xf]
        %v2007 = vld [vmem:[%s3 + $0x5c] sm:$0xf]
        %v2008 = vld [vmem:[%s3 + $0x60] sm:$0xf]
        %v2009 = vld [vmem:[%s3 + $0x64] sm:$0xf]
        %v2010 = vld [vmem:[%s3 + $0x68] sm:$0xf]
        %v2011 = vld [vmem:[%s3 + $0x6c] sm:$0xf]
        %v2012 = vld [vmem:[%s3 + $0x70] sm:$0xf]
        %v2013 = vld [vmem:[%s3 + $0x74] sm:$0xf]
        %v2014 = vld [vmem:[%s3 + $0x78] sm:$0xf]
        %v2015 = vld [vmem:[%s3 + $0x7c] sm:$0xf]
        %v2016 = vld [vmem:[%s4] sm:$0x1]
        %v2018 = vlaneseq
        %v2019 = vshrl.u32 %v2018, 7
        %v2020 = vsub.s32 0, %v2019
        %v2021 = vrot.slane %v2016, %v2020
        %v2055 = vunpack.c.l.b16 %v1984
        %v2056 = vunpack.c.l.b16 %v1985
        %v2057 = vunpack.c.l.b16 %v1986
        %v2058 = vunpack.c.l.b16 %v1987
        %v2059 = vunpack.c.l.b16 %v1988
        %v2060 = vunpack.c.l.b16 %v1989
        %v2061 = vunpack.c.l.b16 %v1990
        %v2062 = vunpack.c.l.b16 %v1991
        %v2063 = vunpack.c.l.b16 %v1992
        %v2064 = vunpack.c.l.b16 %v1993
        %v2065 = vunpack.c.l.b16 %v1994
        %v2066 = vunpack.c.l.b16 %v1995
        %v2067 = vunpack.c.l.b16 %v1996
        %v2068 = vunpack.c.l.b16 %v1997
        %v2069 = vunpack.c.l.b16 %v1998
        %v2070 = vunpack.c.l.b16 %v1999
        %v2071 = vunpack.c.l.b16 %v2000
        %v2072 = vunpack.c.l.b16 %v2001
        %v2073 = vunpack.c.l.b16 %v2002
        %v2074 = vunpack.c.l.b16 %v2003
        %v2075 = vunpack.c.l.b16 %v2004
        %v2076 = vunpack.c.l.b16 %v2005
        %v2077 = vunpack.c.l.b16 %v2006
        %v2078 = vunpack.c.l.b16 %v2007
        %v2079 = vunpack.c.l.b16 %v2008
        %v2080 = vunpack.c.l.b16 %v2009
        %v2081 = vunpack.c.l.b16 %v2010
        %v2082 = vunpack.c.l.b16 %v2011
        %v2083 = vunpack.c.l.b16 %v2012
        %v2084 = vunpack.c.l.b16 %v2013
        %v2085 = vunpack.c.l.b16 %v2014
        %v2086 = vunpack.c.l.b16 %v2015
        %v2087 = vpack.c.b16 %v2056, %v2055
        %v2088 = vpack.c.b16 %v2058, %v2057
        %v2089 = vpack.c.b16 %v2060, %v2059
        %v2090 = vpack.c.b16 %v2062, %v2061
        %v2091 = vpack.c.b16 %v2064, %v2063
        %v2092 = vpack.c.b16 %v2066, %v2065
        %v2093 = vpack.c.b16 %v2068, %v2067
        %v2094 = vpack.c.b16 %v2070, %v2069
        %v2095 = vpack.c.b16 %v2072, %v2071
        %v2096 = vpack.c.b16 %v2074, %v2073
        %v2097 = vpack.c.b16 %v2076, %v2075
        %v2098 = vpack.c.b16 %v2078, %v2077
        %v2099 = vpack.c.b16 %v2080, %v2079
        %v2100 = vpack.c.b16 %v2082, %v2081
        %v2101 = vpack.c.b16 %v2084, %v2083
        %v2102 = vpack.c.b16 %v2086, %v2085
        %2119 = vmatprep.subr.bf16.mxu0 0
        %2120 = vmatpush1.bf16.msra.mxu0 %v2087
        %2121 = vmatprep.subr.bf16.mxu0 0
        %2122 = vmatpush1.bf16.msra.mxu0 %v2088
        %2123 = vmatprep.subr.bf16.mxu0 0
        %2124 = vmatpush1.bf16.msra.mxu0 %v2089
        %2125 = vmatprep.subr.bf16.mxu0 0
        %2126 = vmatpush1.bf16.msra.mxu0 %v2090
        %2127 = vmatprep.subr.bf16.mxu0 0
        %2128 = vmatpush1.bf16.msra.mxu0 %v2091
        %2129 = vmatprep.subr.bf16.mxu0 0
        %2130 = vmatpush1.bf16.msra.mxu0 %v2092
        %2131 = vmatprep.subr.bf16.mxu0 0
        %2132 = vmatpush1.bf16.msra.mxu0 %v2093
        %2133 = vmatprep.subr.bf16.mxu0 0
        %2134 = vmatpush1.bf16.msra.mxu0 %v2094
        %2135 = vmatprep.subr.bf16.mxu0 0
        %2136 = vmatpush1.bf16.msra.mxu0 %v2095
        %2137 = vmatprep.subr.bf16.mxu0 0
        %2138 = vmatpush1.bf16.msra.mxu0 %v2096
        %2139 = vmatprep.subr.bf16.mxu0 0
        %2140 = vmatpush1.bf16.msra.mxu0 %v2097
        %2141 = vmatprep.subr.bf16.mxu0 0
        %2142 = vmatpush1.bf16.msra.mxu0 %v2098
        %2143 = vmatprep.subr.bf16.mxu0 0
        %2144 = vmatpush1.bf16.msra.mxu0 %v2099
        %2145 = vmatprep.subr.bf16.mxu0 0
        %2146 = vmatpush1.bf16.msra.mxu0 %v2100
        %2147 = vmatprep.subr.bf16.mxu0 0
        %2148 = vmatpush1.bf16.msra.mxu0 %v2101
        %2149 = vmatprep.subr.bf16.mxu0 0
        %2150 = vmatpush1.bf16.msra.mxu0 %v2102
        %2151 = vmatprep.mubr.bf16.mxu0 %v1983
        %2152 = vmatmul.mubr.bf16.gmra.mrb[0].mxu0 %v1982
        %v2153 = vpop.f32.mrb[0].mxu0
        %v2154 = vadd.f32 %v2021, %v2153
        %v2155 = vpop.f32.mrb[0].mxu0
        %v2156 = vpop.f32.mrb[0].mxu0
        %v2157 = vadd.f32 %v2021, %v2156
        %v2158 = vpop.f32.mrb[0].mxu0
        %2159 = vdwg.mxu0
        %v2160 = vmax.f32 %v2154, 0.0
        %v2161 = vmax.f32 %v2157, 0.0
        %v2162 = vpack.c.bf16 %v2161, %v2160
        %v2163 = vld [vmem:[%s5] sm:$0xf]
        %v2164 = vld [vmem:[%s5 + $0x4] sm:$0xf]
        %v2165 = vld [vmem:[%s5 + $0x8] sm:$0xf]
        %v2166 = vld [vmem:[%s5 + $0xc] sm:$0xf]
        %v2167 = vld [vmem:[%s5 + $0x10] sm:$0xf]
        %v2168 = vld [vmem:[%s5 + $0x14] sm:$0xf]
        %v2169 = vld [vmem:[%s5 + $0x18] sm:$0xf]
        %v2170 = vld [vmem:[%s5 + $0x1c] sm:$0xf]
        %v2171 = vld [vmem:[%s5 + $0x20] sm:$0xf]
        %v2172 = vld [vmem:[%s5 + $0x24] sm:$0xf]
        %v2173 = vld [vmem:[%s5 + $0x28] sm:$0xf]
        %v2174 = vld [vmem:[%s5 + $0x2c] sm:$0xf]
        %v2175 = vld [vmem:[%s5 + $0x30] sm:$0xf]
        %v2176 = vld [vmem:[%s5 + $0x34] sm:$0xf]
        %v2177 = vld [vmem:[%s5 + $0x38] sm:$0xf]
        %v2178 = vld [vmem:[%s5 + $0x3c] sm:$0xf]
        %v2179 = vld [vmem:[%s6] sm:$0x1]
        %v2181 = vlaneseq
        %v2182 = vshrl.u32 %v2181, 7
        %v2183 = vsub.s32 0, %v2182
        %v2184 = vrot.slane %v2179, %v2183
        %v2202 = vunpack.c.l.b16 %v2163
        %v2203 = vunpack.c.l.b16 %v2164
        %v2204 = vunpack.c.l.b16 %v2165
        %v2205 = vunpack.c.l.b16 %v2166
        %v2206 = vunpack.c.l.b16 %v2167
        %v2207 = vunpack.c.l.b16 %v2168
        %v2208 = vunpack.c.l.b16 %v2169
        %v2209 = vunpack.c.l.b16 %v2170
        %v2210 = vunpack.c.l.b16 %v2171
        %v2211 = vunpack.c.l.b16 %v2172
        %v2212 = vunpack.c.l.b16 %v2173
        %v2213 = vunpack.c.l.b16 %v2174
        %v2214 = vunpack.c.l.b16 %v2175
        %v2215 = vunpack.c.l.b16 %v2176
        %v2216 = vunpack.c.l.b16 %v2177
        %v2217 = vunpack.c.l.b16 %v2178
        %v2218 = vpack.c.b16 %v2203, %v2202
        %v2219 = vpack.c.b16 %v2205, %v2204
        %v2220 = vpack.c.b16 %v2207, %v2206
        %v2221 = vpack.c.b16 %v2209, %v2208
        %v2222 = vpack.c.b16 %v2211, %v2210
        %v2223 = vpack.c.b16 %v2213, %v2212
        %v2224 = vpack.c.b16 %v2215, %v2214
        %v2225 = vpack.c.b16 %v2217, %v2216
        %2234 = vmatprep.subr.bf16.mxu0 0
        %2235 = vmatpush1.bf16.msra.mxu0 %v2218
        %2236 = vmatprep.subr.bf16.mxu0 0
        %2237 = vmatpush1.bf16.msra.mxu0 %v2219
        %2238 = vmatprep.subr.bf16.mxu0 0
        %2239 = vmatpush1.bf16.msra.mxu0 %v2220
        %2240 = vmatprep.subr.bf16.mxu0 0
        %2241 = vmatpush1.bf16.msra.mxu0 %v2221
        %2242 = vmatprep.subr.bf16.mxu0 0
        %2243 = vmatpush1.bf16.msra.mxu0 %v2222
        %2244 = vmatprep.subr.bf16.mxu0 0
        %2245 = vmatpush1.bf16.msra.mxu0 %v2223
        %2246 = vmatprep.subr.bf16.mxu0 0
        %2247 = vmatpush1.bf16.msra.mxu0 %v2224
        %2248 = vmatprep.subr.bf16.mxu0 0
        %2249 = vmatpush1.bf16.msra.mxu0 %v2225
        %2250 = vmatprep.subr.bf16.mxu0 0
        %2251 = vmatpush1.bf16.msra.mxu0 0
        %2252 = vmatprep.subr.bf16.mxu0 0
        %2253 = vmatpush1.bf16.msra.mxu0 0
        %2254 = vmatprep.subr.bf16.mxu0 0
        %2255 = vmatpush1.bf16.msra.mxu0 0
        %2256 = vmatprep.subr.bf16.mxu0 0
        %2257 = vmatpush1.bf16.msra.mxu0 0
        %2258 = vmatprep.subr.bf16.mxu0 0
        %2259 = vmatpush1.bf16.msra.mxu0 0
        %2260 = vmatprep.subr.bf16.mxu0 0
        %2261 = vmatpush1.bf16.msra.mxu0 0
        %2262 = vmatprep.subr.bf16.mxu0 0
        %2263 = vmatpush1.bf16.msra.mxu0 0
        %2264 = vmatprep.subr.bf16.mxu0 0
        %2265 = vmatpush1.bf16.msra.mxu0 0
        %2266 = vmatprep.mubr.bf16.mxu0 0
        %2267 = vmatmul.mubr.bf16.gmra.mrb[0].mxu0 %v2162
        %v2268 = vpop.f32.mrb[0].mxu0
        %v2269 = vadd.f32 %v2184, %v2268
        %v2270 = vpop.f32.mrb[0].mxu0
        %v2271 = vpop.f32.mrb[0].mxu0
        %v2272 = vadd.f32 %v2184, %v2271
        %v2273 = vpop.f32.mrb[0].mxu0
        %2274 = vdwg.mxu0
        %v2275 = vmax.f32 %v2269, 0.0
        %v2276 = vmax.f32 %v2272, 0.0
        %v2277 = vpack.c.bf16 %v2276, %v2275
        %v2278 = vld [vmem:[%s7] sm:$0xf]
        %v2279 = vld [vmem:[%s7 + $0x4] sm:$0xf]
        %v2280 = vld [vmem:[%s7 + $0x8] sm:$0xf]
        %v2281 = vld [vmem:[%s7 + $0xc] sm:$0xf]
        %v2282 = vld [vmem:[%s7 + $0x10] sm:$0xf]
        %v2283 = vld [vmem:[%s7 + $0x14] sm:$0xf]
        %v2284 = vld [vmem:[%s7 + $0x18] sm:$0xf]
        %v2285 = vld [vmem:[%s7 + $0x1c] sm:$0xf]
        %v2286 = vld [vmem:[%s8] sm:$0x1]
        %v2288 = vlaneseq
        %v2289 = vshrl.u32 %v2288, 7
        %v2290 = vsub.s32 0, %v2289
        %v2291 = vrot.slane %v2286, %v2290
        %v2301 = vunpack.c.l.b16 %v2278
        %v2302 = vunpack.c.l.b16 %v2279
        %v2303 = vunpack.c.l.b16 %v2280
        %v2304 = vunpack.c.l.b16 %v2281
        %v2305 = vunpack.c.l.b16 %v2282
        %v2306 = vunpack.c.l.b16 %v2283
        %v2307 = vunpack.c.l.b16 %v2284
        %v2308 = vunpack.c.l.b16 %v2285
        %v2309 = vpack.c.b16 %v2302, %v2301
        %v2310 = vpack.c.b16 %v2304, %v2303
        %v2311 = vpack.c.b16 %v2306, %v2305
        %v2312 = vpack.c.b16 %v2308, %v2307
        %vm2317 = vcmask 523264
        %v2319 = vsel %vm2317, %v2277, 0
        %2321 = vmatprep.subr.bf16.mxu0 0
        %2322 = vmatpush1.bf16.msra.mxu0 %v2309
        %2323 = vmatprep.subr.bf16.mxu0 0
        %2324 = vmatpush1.bf16.msra.mxu0 %v2310
        %2325 = vmatprep.subr.bf16.mxu0 0
        %2326 = vmatpush1.bf16.msra.mxu0 %v2311
        %2327 = vmatprep.subr.bf16.mxu0 0
        %2328 = vmatpush1.bf16.msra.mxu0 %v2312
        %2329 = vmatprep.subr.bf16.mxu0 0
        %2330 = vmatpush1.bf16.msra.mxu0 0
        %2331 = vmatprep.subr.bf16.mxu0 0
        %2332 = vmatpush1.bf16.msra.mxu0 0
        %2333 = vmatprep.subr.bf16.mxu0 0
        %2334 = vmatpush1.bf16.msra.mxu0 0
        %2335 = vmatprep.subr.bf16.mxu0 0
        %2336 = vmatpush1.bf16.msra.mxu0 0
        %2337 = vmatprep.subr.bf16.mxu0 0
        %2338 = vmatpush1.bf16.msra.mxu0 0
        %2339 = vmatprep.subr.bf16.mxu0 0
        %2340 = vmatpush1.bf16.msra.mxu0 0
        %2341 = vmatprep.subr.bf16.mxu0 0
        %2342 = vmatpush1.bf16.msra.mxu0 0
        %2343 = vmatprep.subr.bf16.mxu0 0
        %2344 = vmatpush1.bf16.msra.mxu0 0
        %2345 = vmatprep.subr.bf16.mxu0 0
        %2346 = vmatpush1.bf16.msra.mxu0 0
        %2347 = vmatprep.subr.bf16.mxu0 0
        %2348 = vmatpush1.bf16.msra.mxu0 0
        %2349 = vmatprep.subr.bf16.mxu0 0
        %2350 = vmatpush1.bf16.msra.mxu0 0
        %2351 = vmatprep.subr.bf16.mxu0 0
        %2352 = vmatpush1.bf16.msra.mxu0 0
        %2353 = vmatprep.mubr.bf16.mxu0 0
        %2354 = vmatmul.mubr.bf16.gmra.mrb[0].mxu0 %v2319
        %v2355 = vpop.f32.mrb[0].mxu0
        %v2356 = vadd.f32 %v2291, %v2355
        %v2357 = vpop.f32.mrb[0].mxu0
        %v2358 = vpop.f32.mrb[0].mxu0
        %v2359 = vadd.f32 %v2291, %v2358
        %v2360 = vpop.f32.mrb[0].mxu0
        %2361 = vdwg.mxu0
        %v2362 = vmax.f32 %v2356, 0.0
        %v2363 = vmax.f32 %v2359, 0.0
        %v2364 = vpack.c.bf16 %v2363, %v2362
        %v2365 = vld [vmem:[%s9] sm:$0xff]
        %v2366 = vld [vmem:[%s9 + $0x8] sm:$0xff]
        %v2367 = vld [vmem:[%s9 + $0x10] sm:$0xff]
        %v2368 = vld [vmem:[%s9 + $0x18] sm:$0xff]
        %v2369 = vld [vmem:[%s9 + $0x20] sm:$0xff]
        %v2370 = vld [vmem:[%s9 + $0x28] sm:$0xff]
        %v2371 = vld [vmem:[%s9 + $0x30] sm:$0xff]
        %v2372 = vld [vmem:[%s9 + $0x38] sm:$0xff]
        %v2373 = vld [vmem:[%s9 + $0x40] sm:$0xff]
        %v2374 = vld [vmem:[%s9 + $0x48] sm:$0xff]
        %v2375 = vld [vmem:[%s9 + $0x50] sm:$0xff]
        %v2376 = vld [vmem:[%s9 + $0x58] sm:$0xff]
        %v2377 = vld [vmem:[%s9 + $0x60] sm:$0xff]
        %v2378 = vld [vmem:[%s9 + $0x68] sm:$0xff]
        %v2379 = vld [vmem:[%s9 + $0x70] sm:$0xff]
        %v2380 = vld [vmem:[%s9 + $0x78] sm:$0xff]
        %v2381 = vld [vmem:[%s10] sm:$0x3]
        %v2383 = vlaneseq
        %v2384 = vshrl.u32 %v2383, 7
        %v2385 = vsub.s32 0, %v2384
        %v2386 = vrot.slane %v2381, %v2385
        %v2387 = vlaneseq
        %v2388 = vshrl.u32 %v2387, 7
        %v2389 = vsub.s32 1, %v2388
        %v2390 = vrot.slane %v2381, %v2389
        %v2409 = vunpack.c.l.b16 %v2365
        %v2410 = vunpack.c.h.b16 %v2365
        %v2411 = vunpack.c.l.b16 %v2366
        %v2412 = vunpack.c.h.b16 %v2366
        %v2413 = vunpack.c.l.b16 %v2367
        %v2414 = vunpack.c.h.b16 %v2367
        %v2415 = vunpack.c.l.b16 %v2368
        %v2416 = vunpack.c.h.b16 %v2368
        %v2417 = vunpack.c.l.b16 %v2369
        %v2418 = vunpack.c.h.b16 %v2369
        %v2419 = vunpack.c.l.b16 %v2370
        %v2420 = vunpack.c.h.b16 %v2370
        %v2421 = vunpack.c.l.b16 %v2371
        %v2422 = vunpack.c.h.b16 %v2371
        %v2423 = vunpack.c.l.b16 %v2372
        %v2424 = vunpack.c.h.b16 %v2372
        %v2425 = vunpack.c.l.b16 %v2373
        %v2426 = vunpack.c.h.b16 %v2373
        %v2427 = vunpack.c.l.b16 %v2374
        %v2428 = vunpack.c.h.b16 %v2374
        %v2429 = vunpack.c.l.b16 %v2375
        %v2430 = vunpack.c.h.b16 %v2375
        %v2431 = vunpack.c.l.b16 %v2376
        %v2432 = vunpack.c.h.b16 %v2376
        %v2433 = vunpack.c.l.b16 %v2377
        %v2434 = vunpack.c.h.b16 %v2377
        %v2435 = vunpack.c.l.b16 %v2378
        %v2436 = vunpack.c.h.b16 %v2378
        %v2437 = vunpack.c.l.b16 %v2379
        %v2438 = vunpack.c.h.b16 %v2379
        %v2439 = vunpack.c.l.b16 %v2380
        %v2440 = vunpack.c.h.b16 %v2380
        %v2441 = vpack.c.b16 %v2411, %v2409
        %v2442 = vpack.c.b16 %v2412, %v2410
        %v2443 = vpack.c.b16 %v2415, %v2413
        %v2444 = vpack.c.b16 %v2416, %v2414
        %v2445 = vpack.c.b16 %v2419, %v2417
        %v2446 = vpack.c.b16 %v2420, %v2418
        %v2447 = vpack.c.b16 %v2423, %v2421
        %v2448 = vpack.c.b16 %v2424, %v2422
        %v2449 = vpack.c.b16 %v2427, %v2425
        %v2450 = vpack.c.b16 %v2428, %v2426
        %v2451 = vpack.c.b16 %v2431, %v2429
        %v2452 = vpack.c.b16 %v2432, %v2430
        %v2453 = vpack.c.b16 %v2435, %v2433
        %v2454 = vpack.c.b16 %v2436, %v2434
        %v2455 = vpack.c.b16 %v2439, %v2437
        %v2456 = vpack.c.b16 %v2440, %v2438
        %2473 = vmatprep.subr.bf16.mxu0 %v2442
        %2474 = vmatpush1.bf16.msra.mxu0 %v2441
        %2475 = vmatprep.subr.bf16.mxu0 %v2444
        %2476 = vmatpush1.bf16.msra.mxu0 %v2443
        %2477 = vmatprep.subr.bf16.mxu0 %v2446
        %2478 = vmatpush1.bf16.msra.mxu0 %v2445
        %2479 = vmatprep.subr.bf16.mxu0 %v2448
        %2480 = vmatpush1.bf16.msra.mxu0 %v2447
        %2481 = vmatprep.subr.bf16.mxu0 %v2450
        %2482 = vmatpush1.bf16.msra.mxu0 %v2449
        %2483 = vmatprep.subr.bf16.mxu0 %v2452
        %2484 = vmatpush1.bf16.msra.mxu0 %v2451
        %2485 = vmatprep.subr.bf16.mxu0 %v2454
        %2486 = vmatpush1.bf16.msra.mxu0 %v2453
        %2487 = vmatprep.subr.bf16.mxu0 %v2456
        %2488 = vmatpush1.bf16.msra.mxu0 %v2455
        %2489 = vmatprep.subr.bf16.mxu0 0
        %2490 = vmatpush1.bf16.msra.mxu0 0
        %2491 = vmatprep.subr.bf16.mxu0 0
        %2492 = vmatpush1.bf16.msra.mxu0 0
        %2493 = vmatprep.subr.bf16.mxu0 0
        %2494 = vmatpush1.bf16.msra.mxu0 0
        %2495 = vmatprep.subr.bf16.mxu0 0
        %2496 = vmatpush1.bf16.msra.mxu0 0
        %2497 = vmatprep.subr.bf16.mxu0 0
        %2498 = vmatpush1.bf16.msra.mxu0 0
        %2499 = vmatprep.subr.bf16.mxu0 0
        %2500 = vmatpush1.bf16.msra.mxu0 0
        %2501 = vmatprep.subr.bf16.mxu0 0
        %2502 = vmatpush1.bf16.msra.mxu0 0
        %2503 = vmatprep.subr.bf16.mxu0 0
        %2504 = vmatpush1.bf16.msra.mxu0 0
        %2505 = vmatprep.mubr.bf16.mxu0 0
        %2506 = vmatmul.mubr.bf16.gmra.mrb[0].mxu0 %v2364
        %v2507 = vpop.f32.mrb[0].mxu0
        %v2508 = vadd.f32 %v2386, %v2507
        %v2509 = vpop.f32.mrb[0].mxu0
        %v2510 = vadd.f32 %v2390, %v2509
        %v2511 = vpop.f32.mrb[0].mxu0
        %v2512 = vadd.f32 %v2386, %v2511
        %v2513 = vpop.f32.mrb[0].mxu0
        %v2514 = vadd.f32 %v2390, %v2513
        %2515 = vdwg.mxu0
        %v2516 = vmax.f32 %v2508, 0.0
        %v2517 = vmax.f32 %v2510, 0.0
        %v2518 = vmax.f32 %v2512, 0.0
        %v2519 = vmax.f32 %v2514, 0.0
        %v2520 = vpack.c.bf16 %v2518, %v2516
        %v2521 = vpack.c.bf16 %v2519, %v2517
        %v2522 = vld [vmem:[%s11] sm:$0xff]
        %v2523 = vld [vmem:[%s11 + $0x8] sm:$0xff]
        %v2524 = vld [vmem:[%s11 + $0x10] sm:$0xff]
        %v2525 = vld [vmem:[%s11 + $0x18] sm:$0xff]
        %v2526 = vld [vmem:[%s11 + $0x20] sm:$0xff]
        %v2527 = vld [vmem:[%s11 + $0x28] sm:$0xff]
        %v2528 = vld [vmem:[%s11 + $0x30] sm:$0xf]
        %v2529 = vld [vmem:[%s11 + $0x34] sm:$0xff]
        %v2530 = vld [vmem:[%s11 + $0x3c] sm:$0xff]
        %v2531 = vld [vmem:[%s11 + $0x44] sm:$0xff]
        %v2532 = vld [vmem:[%s11 + $0x4c] sm:$0xff]
        %v2533 = vld [vmem:[%s11 + $0x54] sm:$0xff]
        %v2534 = vld [vmem:[%s11 + $0x5c] sm:$0xff]
        %v2535 = vld [vmem:[%s11 + $0x64] sm:$0xf]
        %v2536 = vld [vmem:[%s11 + $0x68] sm:$0xff]
        %v2537 = vld [vmem:[%s11 + $0x70] sm:$0xff]
        %v2538 = vld [vmem:[%s11 + $0x78] sm:$0xff]
        %v2539 = vld [vmem:[%s11 + $0x80] sm:$0xff]
        %v2540 = vld [vmem:[%s11 + $0x88] sm:$0xff]
        %v2541 = vld [vmem:[%s11 + $0x90] sm:$0xff]
        %v2542 = vld [vmem:[%s11 + $0x98] sm:$0xf]
        %v2543 = vld [vmem:[%s11 + $0x9c] sm:$0xff]
        %v2544 = vld [vmem:[%s11 + $0xa4] sm:$0xff]
        %v2545 = vld [vmem:[%s11 + $0xac] sm:$0xff]
        %v2546 = vld [vmem:[%s11 + $0xb4] sm:$0xff]
        %v2547 = vld [vmem:[%s11 + $0xbc] sm:$0xff]
        %v2548 = vld [vmem:[%s11 + $0xc4] sm:$0xff]
        %v2549 = vld [vmem:[%s11 + $0xcc] sm:$0xf]
        %v2550 = vld [vmem:[%s11 + $0xd0] sm:$0xff]
        %v2551 = vld [vmem:[%s11 + $0xd8] sm:$0xff]
        %v2552 = vld [vmem:[%s11 + $0xe0] sm:$0xff]
        %v2553 = vld [vmem:[%s11 + $0xe8] sm:$0xff]
        %v2554 = vld [vmem:[%s11 + $0xf0] sm:$0xff]
        %v2555 = vld [vmem:[%s11 + $0xf8] sm:$0xff]
        %v2556 = vld [vmem:[%s11 + $0x100] sm:$0xf]
        %v2557 = vld [vmem:[%s11 + $0x104] sm:$0xff]
        %v2558 = vld [vmem:[%s11 + $0x10c] sm:$0xff]
        %v2559 = vld [vmem:[%s11 + $0x114] sm:$0xff]
        %v2560 = vld [vmem:[%s11 + $0x11c] sm:$0xff]
        %v2561 = vld [vmem:[%s11 + $0x124] sm:$0xff]
        %v2562 = vld [vmem:[%s11 + $0x12c] sm:$0xff]
        %v2563 = vld [vmem:[%s11 + $0x134] sm:$0xf]
        %v2564 = vld [vmem:[%s11 + $0x138] sm:$0xff]
        %v2565 = vld [vmem:[%s11 + $0x140] sm:$0xff]
        %v2566 = vld [vmem:[%s11 + $0x148] sm:$0xff]
        %v2567 = vld [vmem:[%s11 + $0x150] sm:$0xff]
        %v2568 = vld [vmem:[%s11 + $0x158] sm:$0xff]
        %v2569 = vld [vmem:[%s11 + $0x160] sm:$0xff]
        %v2570 = vld [vmem:[%s11 + $0x168] sm:$0xf]
        %v2571 = vld [vmem:[%s11 + $0x16c] sm:$0xff]
        %v2572 = vld [vmem:[%s11 + $0x174] sm:$0xff]
        %v2573 = vld [vmem:[%s11 + $0x17c] sm:$0xff]
        %v2574 = vld [vmem:[%s11 + $0x184] sm:$0xff]
        %v2575 = vld [vmem:[%s11 + $0x18c] sm:$0xff]
        %v2576 = vld [vmem:[%s11 + $0x194] sm:$0xff]
        %v2577 = vld [vmem:[%s11 + $0x19c] sm:$0xf]
        %v2578 = vld [vmem:[%s11 + $0x1a0] sm:$0xff]
        %v2579 = vld [vmem:[%s11 + $0x1a8] sm:$0xff]
        %v2580 = vld [vmem:[%s11 + $0x1b0] sm:$0xff]
        %v2581 = vld [vmem:[%s11 + $0x1b8] sm:$0xff]
        %v2582 = vld [vmem:[%s11 + $0x1c0] sm:$0xff]
        %v2583 = vld [vmem:[%s11 + $0x1c8] sm:$0xff]
        %v2584 = vld [vmem:[%s11 + $0x1d0] sm:$0xf]
        %v2585 = vld [vmem:[%s11 + $0x1d4] sm:$0xff]
        %v2586 = vld [vmem:[%s11 + $0x1dc] sm:$0xff]
        %v2587 = vld [vmem:[%s11 + $0x1e4] sm:$0xff]
        %v2588 = vld [vmem:[%s11 + $0x1ec] sm:$0xff]
        %v2589 = vld [vmem:[%s11 + $0x1f4] sm:$0xff]
        %v2590 = vld [vmem:[%s11 + $0x1fc] sm:$0xff]
        %v2591 = vld [vmem:[%s11 + $0x204] sm:$0xf]
        %v2592 = vld [vmem:[%s11 + $0x208] sm:$0xff]
        %v2593 = vld [vmem:[%s11 + $0x210] sm:$0xff]
        %v2594 = vld [vmem:[%s11 + $0x218] sm:$0xff]
        %v2595 = vld [vmem:[%s11 + $0x220] sm:$0xff]
        %v2596 = vld [vmem:[%s11 + $0x228] sm:$0xff]
        %v2597 = vld [vmem:[%s11 + $0x230] sm:$0xff]
        %v2598 = vld [vmem:[%s11 + $0x238] sm:$0xf]
        %v2599 = vld [vmem:[%s11 + $0x23c] sm:$0xff]
        %v2600 = vld [vmem:[%s11 + $0x244] sm:$0xff]
        %v2601 = vld [vmem:[%s11 + $0x24c] sm:$0xff]
        %v2602 = vld [vmem:[%s11 + $0x254] sm:$0xff]
        %v2603 = vld [vmem:[%s11 + $0x25c] sm:$0xff]
        %v2604 = vld [vmem:[%s11 + $0x264] sm:$0xff]
        %v2605 = vld [vmem:[%s11 + $0x26c] sm:$0xf]
        %v2606 = vld [vmem:[%s11 + $0x270] sm:$0xff]
        %v2607 = vld [vmem:[%s11 + $0x278] sm:$0xff]
        %v2608 = vld [vmem:[%s11 + $0x280] sm:$0xff]
        %v2609 = vld [vmem:[%s11 + $0x288] sm:$0xff]
        %v2610 = vld [vmem:[%s11 + $0x290] sm:$0xff]
        %v2611 = vld [vmem:[%s11 + $0x298] sm:$0xff]
        %v2612 = vld [vmem:[%s11 + $0x2a0] sm:$0xf]
        %v2613 = vld [vmem:[%s11 + $0x2a4] sm:$0xff]
        %v2614 = vld [vmem:[%s11 + $0x2ac] sm:$0xff]
        %v2615 = vld [vmem:[%s11 + $0x2b4] sm:$0xff]
        %v2616 = vld [vmem:[%s11 + $0x2bc] sm:$0xff]
        %v2617 = vld [vmem:[%s11 + $0x2c4] sm:$0xff]
        %v2618 = vld [vmem:[%s11 + $0x2cc] sm:$0xff]
        %v2619 = vld [vmem:[%s11 + $0x2d4] sm:$0xf]
        %v2620 = vld [vmem:[%s11 + $0x2d8] sm:$0xff]
        %v2621 = vld [vmem:[%s11 + $0x2e0] sm:$0xff]
        %v2622 = vld [vmem:[%s11 + $0x2e8] sm:$0xff]
        %v2623 = vld [vmem:[%s11 + $0x2f0] sm:$0xff]
        %v2624 = vld [vmem:[%s11 + $0x2f8] sm:$0xff]
        %v2625 = vld [vmem:[%s11 + $0x300] sm:$0xff]
        %v2626 = vld [vmem:[%s11 + $0x308] sm:$0xf]
        %v2627 = vld [vmem:[%s11 + $0x30c] sm:$0xff]
        %v2628 = vld [vmem:[%s11 + $0x314] sm:$0xff]
        %v2629 = vld [vmem:[%s11 + $0x31c] sm:$0xff]
        %v2630 = vld [vmem:[%s11 + $0x324] sm:$0xff]
        %v2631 = vld [vmem:[%s11 + $0x32c] sm:$0xff]
        %v2632 = vld [vmem:[%s11 + $0x334] sm:$0xff]
        %v2633 = vld [vmem:[%s11 + $0x33c] sm:$0xf]
        %v2634 = vld [vmem:[%s11 + $0x340] sm:$0xff]
        %v2635 = vld [vmem:[%s11 + $0x348] sm:$0xff]
        %v2636 = vld [vmem:[%s11 + $0x350] sm:$0xff]
        %v2637 = vld [vmem:[%s11 + $0x358] sm:$0xff]
        %v2638 = vld [vmem:[%s11 + $0x360] sm:$0xff]
        %v2639 = vld [vmem:[%s11 + $0x368] sm:$0xff]
        %v2640 = vld [vmem:[%s11 + $0x370] sm:$0xf]
        %v2641 = vld [vmem:[%s11 + $0x374] sm:$0xff]
        %v2642 = vld [vmem:[%s11 + $0x37c] sm:$0xff]
        %v2643 = vld [vmem:[%s11 + $0x384] sm:$0xff]
        %v2644 = vld [vmem:[%s11 + $0x38c] sm:$0xff]
        %v2645 = vld [vmem:[%s11 + $0x394] sm:$0xff]
        %v2646 = vld [vmem:[%s11 + $0x39c] sm:$0xff]
        %v2647 = vld [vmem:[%s11 + $0x3a4] sm:$0xf]
        %v2648 = vld [vmem:[%s11 + $0x3a8] sm:$0xff]
        %v2649 = vld [vmem:[%s11 + $0x3b0] sm:$0xff]
        %v2650 = vld [vmem:[%s11 + $0x3b8] sm:$0xff]
        %v2651 = vld [vmem:[%s11 + $0x3c0] sm:$0xff]
        %v2652 = vld [vmem:[%s11 + $0x3c8] sm:$0xff]
        %v2653 = vld [vmem:[%s11 + $0x3d0] sm:$0xff]
        %v2654 = vld [vmem:[%s11 + $0x3d8] sm:$0xf]
        %v2655 = vld [vmem:[%s11 + $0x3dc] sm:$0xff]
        %v2656 = vld [vmem:[%s11 + $0x3e4] sm:$0xff]
        %v2657 = vld [vmem:[%s11 + $0x3ec] sm:$0xff]
        %v2658 = vld [vmem:[%s11 + $0x3f4] sm:$0xff]
        %v2659 = vld [vmem:[%s11 + $0x3fc] sm:$0xff]
        %v2660 = vld [vmem:[%s11 + $0x404] sm:$0xff]
        %v2661 = vld [vmem:[%s11 + $0x40c] sm:$0xf]
        %v2662 = vld [vmem:[%s11 + $0x410] sm:$0xff]
        %v2663 = vld [vmem:[%s11 + $0x418] sm:$0xff]
        %v2664 = vld [vmem:[%s11 + $0x420] sm:$0xff]
        %v2665 = vld [vmem:[%s11 + $0x428] sm:$0xff]
        %v2666 = vld [vmem:[%s11 + $0x430] sm:$0xff]
        %v2667 = vld [vmem:[%s11 + $0x438] sm:$0xff]
        %v2668 = vld [vmem:[%s11 + $0x440] sm:$0xf]
        %v2669 = vld [vmem:[%s11 + $0x444] sm:$0xff]
        %v2670 = vld [vmem:[%s11 + $0x44c] sm:$0xff]
        %v2671 = vld [vmem:[%s11 + $0x454] sm:$0xff]
        %v2672 = vld [vmem:[%s11 + $0x45c] sm:$0xff]
        %v2673 = vld [vmem:[%s11 + $0x464] sm:$0xff]
        %v2674 = vld [vmem:[%s11 + $0x46c] sm:$0xff]
        %v2675 = vld [vmem:[%s11 + $0x474] sm:$0xf]
        %v2676 = vld [vmem:[%s11 + $0x478] sm:$0xff]
        %v2677 = vld [vmem:[%s11 + $0x480] sm:$0xff]
        %v2678 = vld [vmem:[%s11 + $0x488] sm:$0xff]
        %v2679 = vld [vmem:[%s11 + $0x490] sm:$0xff]
        %v2680 = vld [vmem:[%s11 + $0x498] sm:$0xff]
        %v2681 = vld [vmem:[%s11 + $0x4a0] sm:$0xff]
        %v2682 = vld [vmem:[%s11 + $0x4a8] sm:$0xf]
        %v2683 = vld [vmem:[%s11 + $0x4ac] sm:$0xff]
        %v2684 = vld [vmem:[%s11 + $0x4b4] sm:$0xff]
        %v2685 = vld [vmem:[%s11 + $0x4bc] sm:$0xff]
        %v2686 = vld [vmem:[%s11 + $0x4c4] sm:$0xff]
        %v2687 = vld [vmem:[%s11 + $0x4cc] sm:$0xff]
        %v2688 = vld [vmem:[%s11 + $0x4d4] sm:$0xff]
        %v2689 = vld [vmem:[%s11 + $0x4dc] sm:$0xf]
        %v2690 = vld [vmem:[%s11 + $0x4e0] sm:$0xff]
        %v2691 = vld [vmem:[%s11 + $0x4e8] sm:$0xff]
        %v2692 = vld [vmem:[%s11 + $0x4f0] sm:$0xff]
        %v2693 = vld [vmem:[%s11 + $0x4f8] sm:$0xff]
        %v2694 = vld [vmem:[%s11 + $0x500] sm:$0xff]
        %v2695 = vld [vmem:[%s11 + $0x508] sm:$0xff]
        %v2696 = vld [vmem:[%s11 + $0x510] sm:$0xf]
        %v2697 = vld [vmem:[%s11 + $0x514] sm:$0xff]
        %v2698 = vld [vmem:[%s11 + $0x51c] sm:$0xff]
        %v2699 = vld [vmem:[%s11 + $0x524] sm:$0xff]
        %v2700 = vld [vmem:[%s11 + $0x52c] sm:$0xff]
        %v2701 = vld [vmem:[%s11 + $0x534] sm:$0xff]
        %v2702 = vld [vmem:[%s11 + $0x53c] sm:$0xff]
        %v2703 = vld [vmem:[%s11 + $0x544] sm:$0xf]
        %v2704 = vld [vmem:[%s11 + $0x548] sm:$0xff]
        %v2705 = vld [vmem:[%s11 + $0x550] sm:$0xff]
        %v2706 = vld [vmem:[%s11 + $0x558] sm:$0xff]
        %v2707 = vld [vmem:[%s11 + $0x560] sm:$0xff]
        %v2708 = vld [vmem:[%s11 + $0x568] sm:$0xff]
        %v2709 = vld [vmem:[%s11 + $0x570] sm:$0xff]
        %v2710 = vld [vmem:[%s11 + $0x578] sm:$0xf]
        %v2711 = vld [vmem:[%s11 + $0x57c] sm:$0xff]
        %v2712 = vld [vmem:[%s11 + $0x584] sm:$0xff]
        %v2713 = vld [vmem:[%s11 + $0x58c] sm:$0xff]
        %v2714 = vld [vmem:[%s11 + $0x594] sm:$0xff]
        %v2715 = vld [vmem:[%s11 + $0x59c] sm:$0xff]
        %v2716 = vld [vmem:[%s11 + $0x5a4] sm:$0xff]
        %v2717 = vld [vmem:[%s11 + $0x5ac] sm:$0xf]
        %v2718 = vld [vmem:[%s11 + $0x5b0] sm:$0xff]
        %v2719 = vld [vmem:[%s11 + $0x5b8] sm:$0xff]
        %v2720 = vld [vmem:[%s11 + $0x5c0] sm:$0xff]
        %v2721 = vld [vmem:[%s11 + $0x5c8] sm:$0xff]
        %v2722 = vld [vmem:[%s11 + $0x5d0] sm:$0xff]
        %v2723 = vld [vmem:[%s11 + $0x5d8] sm:$0xff]
        %v2724 = vld [vmem:[%s11 + $0x5e0] sm:$0xf]
        %v2725 = vld [vmem:[%s11 + $0x5e4] sm:$0xff]
        %v2726 = vld [vmem:[%s11 + $0x5ec] sm:$0xff]
        %v2727 = vld [vmem:[%s11 + $0x5f4] sm:$0xff]
        %v2728 = vld [vmem:[%s11 + $0x5fc] sm:$0xff]
        %v2729 = vld [vmem:[%s11 + $0x604] sm:$0xff]
        %v2730 = vld [vmem:[%s11 + $0x60c] sm:$0xff]
        %v2731 = vld [vmem:[%s11 + $0x614] sm:$0xf]
        %v2732 = vld [vmem:[%s11 + $0x618] sm:$0xff]
        %v2733 = vld [vmem:[%s11 + $0x620] sm:$0xff]
        %v2734 = vld [vmem:[%s11 + $0x628] sm:$0xff]
        %v2735 = vld [vmem:[%s11 + $0x630] sm:$0xff]
        %v2736 = vld [vmem:[%s11 + $0x638] sm:$0xff]
        %v2737 = vld [vmem:[%s11 + $0x640] sm:$0xff]
        %v2738 = vld [vmem:[%s11 + $0x648] sm:$0xf]
        %v2739 = vld [vmem:[%s11 + $0x64c] sm:$0xff]
        %v2740 = vld [vmem:[%s11 + $0x654] sm:$0xff]
        %v2741 = vld [vmem:[%s11 + $0x65c] sm:$0xff]
        %v2742 = vld [vmem:[%s11 + $0x664] sm:$0xff]
        %v2743 = vld [vmem:[%s11 + $0x66c] sm:$0xff]
        %v2744 = vld [vmem:[%s11 + $0x674] sm:$0xff]
        %v2745 = vld [vmem:[%s11 + $0x67c] sm:$0xf]
        %v2746 = vld [vmem:[%s12] sm:$0xff]
        %v2747 = vld [vmem:[%s12 + $0x8] sm:$0x1f]
        %v2750 = vlaneseq
        %v2751 = vshrl.u32 %v2750, 7
        %v2752 = vsub.s32 0, %v2751
        %v2753 = vrot.slane %v2746, %v2752
        %v2754 = vlaneseq
        %v2755 = vshrl.u32 %v2754, 7
        %v2756 = vsub.s32 1, %v2755
        %v2757 = vrot.slane %v2746, %v2756
        %v2758 = vlaneseq
        %v2759 = vshrl.u32 %v2758, 7
        %v2760 = vsub.s32 2, %v2759
        %v2761 = vrot.slane %v2746, %v2760
        %v2762 = vlaneseq
        %v2763 = vshrl.u32 %v2762, 7
        %v2764 = vsub.s32 3, %v2763
        %v2765 = vrot.slane %v2746, %v2764
        %v2766 = vlaneseq
        %v2767 = vshrl.u32 %v2766, 7
        %v2768 = vsub.s32 4, %v2767
        %v2769 = vrot.slane %v2746, %v2768
        %v2770 = vlaneseq
        %v2771 = vshrl.u32 %v2770, 7
        %v2772 = vsub.s32 5, %v2771
        %v2773 = vrot.slane %v2746, %v2772
        %v2774 = vlaneseq
        %v2775 = vshrl.u32 %v2774, 7
        %v2776 = vsub.s32 6, %v2775
        %v2777 = vrot.slane %v2746, %v2776
        %v2778 = vlaneseq
        %v2779 = vshrl.u32 %v2778, 7
        %v2780 = vsub.s32 7, %v2779
        %v2781 = vrot.slane %v2746, %v2780
        %v2782 = vlaneseq
        %v2783 = vshrl.u32 %v2782, 7
        %v2784 = vsub.s32 0, %v2783
        %v2785 = vrot.slane %v2747, %v2784
        %v2786 = vlaneseq
        %v2787 = vshrl.u32 %v2786, 7
        %v2788 = vsub.s32 1, %v2787
        %v2789 = vrot.slane %v2747, %v2788
        %v2790 = vlaneseq
        %v2791 = vshrl.u32 %v2790, 7
        %v2792 = vsub.s32 2, %v2791
        %v2793 = vrot.slane %v2747, %v2792
        %v2794 = vlaneseq
        %v2795 = vshrl.u32 %v2794, 7
        %v2796 = vsub.s32 3, %v2795
        %v2797 = vrot.slane %v2747, %v2796
        %v2798 = vlaneseq
        %v2799 = vshrl.u32 %v2798, 7
        %v2800 = vsub.s32 4, %v2799
        %v2801 = vrot.slane %v2747, %v2800
        %v3039 = vunpack.c.l.b16 %v2522
        %v3040 = vunpack.c.h.b16 %v2522
        %v3041 = vunpack.c.l.b16 %v2523
        %v3042 = vunpack.c.h.b16 %v2523
        %v3043 = vunpack.c.l.b16 %v2524
        %v3044 = vunpack.c.h.b16 %v2524
        %v3045 = vunpack.c.l.b16 %v2525
        %v3046 = vunpack.c.h.b16 %v2525
        %v3047 = vunpack.c.l.b16 %v2526
        %v3048 = vunpack.c.h.b16 %v2526
        %v3049 = vunpack.c.l.b16 %v2527
        %v3050 = vunpack.c.h.b16 %v2527
        %v3051 = vunpack.c.l.b16 %v2528
        %v3052 = vunpack.c.l.b16 %v2529
        %v3053 = vunpack.c.h.b16 %v2529
        %v3054 = vunpack.c.l.b16 %v2530
        %v3055 = vunpack.c.h.b16 %v2530
        %v3056 = vunpack.c.l.b16 %v2531
        %v3057 = vunpack.c.h.b16 %v2531
        %v3058 = vunpack.c.l.b16 %v2532
        %v3059 = vunpack.c.h.b16 %v2532
        %v3060 = vunpack.c.l.b16 %v2533
        %v3061 = vunpack.c.h.b16 %v2533
        %v3062 = vunpack.c.l.b16 %v2534
        %v3063 = vunpack.c.h.b16 %v2534
        %v3064 = vunpack.c.l.b16 %v2535
        %v3065 = vunpack.c.l.b16 %v2536
        %v3066 = vunpack.c.h.b16 %v2536
        %v3067 = vunpack.c.l.b16 %v2537
        %v3068 = vunpack.c.h.b16 %v2537
        %v3069 = vunpack.c.l.b16 %v2538
        %v3070 = vunpack.c.h.b16 %v2538
        %v3071 = vunpack.c.l.b16 %v2539
        %v3072 = vunpack.c.h.b16 %v2539
        %v3073 = vunpack.c.l.b16 %v2540
        %v3074 = vunpack.c.h.b16 %v2540
        %v3075 = vunpack.c.l.b16 %v2541
        %v3076 = vunpack.c.h.b16 %v2541
        %v3077 = vunpack.c.l.b16 %v2542
        %v3078 = vunpack.c.l.b16 %v2543
        %v3079 = vunpack.c.h.b16 %v2543
        %v3080 = vunpack.c.l.b16 %v2544
        %v3081 = vunpack.c.h.b16 %v2544
        %v3082 = vunpack.c.l.b16 %v2545
        %v3083 = vunpack.c.h.b16 %v2545
        %v3084 = vunpack.c.l.b16 %v2546
        %v3085 = vunpack.c.h.b16 %v2546
        %v3086 = vunpack.c.l.b16 %v2547
        %v3087 = vunpack.c.h.b16 %v2547
        %v3088 = vunpack.c.l.b16 %v2548
        %v3089 = vunpack.c.h.b16 %v2548
        %v3090 = vunpack.c.l.b16 %v2549
        %v3091 = vunpack.c.l.b16 %v2550
        %v3092 = vunpack.c.h.b16 %v2550
        %v3093 = vunpack.c.l.b16 %v2551
        %v3094 = vunpack.c.h.b16 %v2551
        %v3095 = vunpack.c.l.b16 %v2552
        %v3096 = vunpack.c.h.b16 %v2552
        %v3097 = vunpack.c.l.b16 %v2553
        %v3098 = vunpack.c.h.b16 %v2553
        %v3099 = vunpack.c.l.b16 %v2554
        %v3100 = vunpack.c.h.b16 %v2554
        %v3101 = vunpack.c.l.b16 %v2555
        %v3102 = vunpack.c.h.b16 %v2555
        %v3103 = vunpack.c.l.b16 %v2556
        %v3104 = vunpack.c.l.b16 %v2557
        %v3105 = vunpack.c.h.b16 %v2557
        %v3106 = vunpack.c.l.b16 %v2558
        %v3107 = vunpack.c.h.b16 %v2558
        %v3108 = vunpack.c.l.b16 %v2559
        %v3109 = vunpack.c.h.b16 %v2559
        %v3110 = vunpack.c.l.b16 %v2560
        %v3111 = vunpack.c.h.b16 %v2560
        %v3112 = vunpack.c.l.b16 %v2561
        %v3113 = vunpack.c.h.b16 %v2561
        %v3114 = vunpack.c.l.b16 %v2562
        %v3115 = vunpack.c.h.b16 %v2562
        %v3116 = vunpack.c.l.b16 %v2563
        %v3117 = vunpack.c.l.b16 %v2564
        %v3118 = vunpack.c.h.b16 %v2564
        %v3119 = vunpack.c.l.b16 %v2565
        %v3120 = vunpack.c.h.b16 %v2565
        %v3121 = vunpack.c.l.b16 %v2566
        %v3122 = vunpack.c.h.b16 %v2566
        %v3123 = vunpack.c.l.b16 %v2567
        %v3124 = vunpack.c.h.b16 %v2567
        %v3125 = vunpack.c.l.b16 %v2568
        %v3126 = vunpack.c.h.b16 %v2568
        %v3127 = vunpack.c.l.b16 %v2569
        %v3128 = vunpack.c.h.b16 %v2569
        %v3129 = vunpack.c.l.b16 %v2570
        %v3130 = vunpack.c.l.b16 %v2571
        %v3131 = vunpack.c.h.b16 %v2571
        %v3132 = vunpack.c.l.b16 %v2572
        %v3133 = vunpack.c.h.b16 %v2572
        %v3134 = vunpack.c.l.b16 %v2573
        %v3135 = vunpack.c.h.b16 %v2573
        %v3136 = vunpack.c.l.b16 %v2574
        %v3137 = vunpack.c.h.b16 %v2574
        %v3138 = vunpack.c.l.b16 %v2575
        %v3139 = vunpack.c.h.b16 %v2575
        %v3140 = vunpack.c.l.b16 %v2576
        %v3141 = vunpack.c.h.b16 %v2576
        %v3142 = vunpack.c.l.b16 %v2577
        %v3143 = vunpack.c.l.b16 %v2578
        %v3144 = vunpack.c.h.b16 %v2578
        %v3145 = vunpack.c.l.b16 %v2579
        %v3146 = vunpack.c.h.b16 %v2579
        %v3147 = vunpack.c.l.b16 %v2580
        %v3148 = vunpack.c.h.b16 %v2580
        %v3149 = vunpack.c.l.b16 %v2581
        %v3150 = vunpack.c.h.b16 %v2581
        %v3151 = vunpack.c.l.b16 %v2582
        %v3152 = vunpack.c.h.b16 %v2582
        %v3153 = vunpack.c.l.b16 %v2583
        %v3154 = vunpack.c.h.b16 %v2583
        %v3155 = vunpack.c.l.b16 %v2584
        %v3156 = vunpack.c.l.b16 %v2585
        %v3157 = vunpack.c.h.b16 %v2585
        %v3158 = vunpack.c.l.b16 %v2586
        %v3159 = vunpack.c.h.b16 %v2586
        %v3160 = vunpack.c.l.b16 %v2587
        %v3161 = vunpack.c.h.b16 %v2587
        %v3162 = vunpack.c.l.b16 %v2588
        %v3163 = vunpack.c.h.b16 %v2588
        %v3164 = vunpack.c.l.b16 %v2589
        %v3165 = vunpack.c.h.b16 %v2589
        %v3166 = vunpack.c.l.b16 %v2590
        %v3167 = vunpack.c.h.b16 %v2590
        %v3168 = vunpack.c.l.b16 %v2591
        %v3169 = vunpack.c.l.b16 %v2592
        %v3170 = vunpack.c.h.b16 %v2592
        %v3171 = vunpack.c.l.b16 %v2593
        %v3172 = vunpack.c.h.b16 %v2593
        %v3173 = vunpack.c.l.b16 %v2594
        %v3174 = vunpack.c.h.b16 %v2594
        %v3175 = vunpack.c.l.b16 %v2595
        %v3176 = vunpack.c.h.b16 %v2595
        %v3177 = vunpack.c.l.b16 %v2596
        %v3178 = vunpack.c.h.b16 %v2596
        %v3179 = vunpack.c.l.b16 %v2597
        %v3180 = vunpack.c.h.b16 %v2597
        %v3181 = vunpack.c.l.b16 %v2598
        %v3182 = vunpack.c.l.b16 %v2599
        %v3183 = vunpack.c.h.b16 %v2599
        %v3184 = vunpack.c.l.b16 %v2600
        %v3185 = vunpack.c.h.b16 %v2600
        %v3186 = vunpack.c.l.b16 %v2601
        %v3187 = vunpack.c.h.b16 %v2601
        %v3188 = vunpack.c.l.b16 %v2602
        %v3189 = vunpack.c.h.b16 %v2602
        %v3190 = vunpack.c.l.b16 %v2603
        %v3191 = vunpack.c.h.b16 %v2603
        %v3192 = vunpack.c.l.b16 %v2604
        %v3193 = vunpack.c.h.b16 %v2604
        %v3194 = vunpack.c.l.b16 %v2605
        %v3195 = vunpack.c.l.b16 %v2606
        %v3196 = vunpack.c.h.b16 %v2606
        %v3197 = vunpack.c.l.b16 %v2607
        %v3198 = vunpack.c.h.b16 %v2607
        %v3199 = vunpack.c.l.b16 %v2608
        %v3200 = vunpack.c.h.b16 %v2608
        %v3201 = vunpack.c.l.b16 %v2609
        %v3202 = vunpack.c.h.b16 %v2609
        %v3203 = vunpack.c.l.b16 %v2610
        %v3204 = vunpack.c.h.b16 %v2610
        %v3205 = vunpack.c.l.b16 %v2611
        %v3206 = vunpack.c.h.b16 %v2611
        %v3207 = vunpack.c.l.b16 %v2612
        %v3208 = vunpack.c.l.b16 %v2613
        %v3209 = vunpack.c.h.b16 %v2613
        %v3210 = vunpack.c.l.b16 %v2614
        %v3211 = vunpack.c.h.b16 %v2614
        %v3212 = vunpack.c.l.b16 %v2615
        %v3213 = vunpack.c.h.b16 %v2615
        %v3214 = vunpack.c.l.b16 %v2616
        %v3215 = vunpack.c.h.b16 %v2616
        %v3216 = vunpack.c.l.b16 %v2617
        %v3217 = vunpack.c.h.b16 %v2617
        %v3218 = vunpack.c.l.b16 %v2618
        %v3219 = vunpack.c.h.b16 %v2618
        %v3220 = vunpack.c.l.b16 %v2619
        %v3221 = vunpack.c.l.b16 %v2620
        %v3222 = vunpack.c.h.b16 %v2620
        %v3223 = vunpack.c.l.b16 %v2621
        %v3224 = vunpack.c.h.b16 %v2621
        %v3225 = vunpack.c.l.b16 %v2622
        %v3226 = vunpack.c.h.b16 %v2622
        %v3227 = vunpack.c.l.b16 %v2623
        %v3228 = vunpack.c.h.b16 %v2623
        %v3229 = vunpack.c.l.b16 %v2624
        %v3230 = vunpack.c.h.b16 %v2624
        %v3231 = vunpack.c.l.b16 %v2625
        %v3232 = vunpack.c.h.b16 %v2625
        %v3233 = vunpack.c.l.b16 %v2626
        %v3234 = vunpack.c.l.b16 %v2627
        %v3235 = vunpack.c.h.b16 %v2627
        %v3236 = vunpack.c.l.b16 %v2628
        %v3237 = vunpack.c.h.b16 %v2628
        %v3238 = vunpack.c.l.b16 %v2629
        %v3239 = vunpack.c.h.b16 %v2629
        %v3240 = vunpack.c.l.b16 %v2630
        %v3241 = vunpack.c.h.b16 %v2630
        %v3242 = vunpack.c.l.b16 %v2631
        %v3243 = vunpack.c.h.b16 %v2631
        %v3244 = vunpack.c.l.b16 %v2632
        %v3245 = vunpack.c.h.b16 %v2632
        %v3246 = vunpack.c.l.b16 %v2633
        %v3247 = vunpack.c.l.b16 %v2634
        %v3248 = vunpack.c.h.b16 %v2634
        %v3249 = vunpack.c.l.b16 %v2635
        %v3250 = vunpack.c.h.b16 %v2635
        %v3251 = vunpack.c.l.b16 %v2636
        %v3252 = vunpack.c.h.b16 %v2636
        %v3253 = vunpack.c.l.b16 %v2637
        %v3254 = vunpack.c.h.b16 %v2637
        %v3255 = vunpack.c.l.b16 %v2638
        %v3256 = vunpack.c.h.b16 %v2638
        %v3257 = vunpack.c.l.b16 %v2639
        %v3258 = vunpack.c.h.b16 %v2639
        %v3259 = vunpack.c.l.b16 %v2640
        %v3260 = vunpack.c.l.b16 %v2641
        %v3261 = vunpack.c.h.b16 %v2641
        %v3262 = vunpack.c.l.b16 %v2642
        %v3263 = vunpack.c.h.b16 %v2642
        %v3264 = vunpack.c.l.b16 %v2643
        %v3265 = vunpack.c.h.b16 %v2643
        %v3266 = vunpack.c.l.b16 %v2644
        %v3267 = vunpack.c.h.b16 %v2644
        %v3268 = vunpack.c.l.b16 %v2645
        %v3269 = vunpack.c.h.b16 %v2645
        %v3270 = vunpack.c.l.b16 %v2646
        %v3271 = vunpack.c.h.b16 %v2646
        %v3272 = vunpack.c.l.b16 %v2647
        %v3273 = vunpack.c.l.b16 %v2648
        %v3274 = vunpack.c.h.b16 %v2648
        %v3275 = vunpack.c.l.b16 %v2649
        %v3276 = vunpack.c.h.b16 %v2649
        %v3277 = vunpack.c.l.b16 %v2650
        %v3278 = vunpack.c.h.b16 %v2650
        %v3279 = vunpack.c.l.b16 %v2651
        %v3280 = vunpack.c.h.b16 %v2651
        %v3281 = vunpack.c.l.b16 %v2652
        %v3282 = vunpack.c.h.b16 %v2652
        %v3283 = vunpack.c.l.b16 %v2653
        %v3284 = vunpack.c.h.b16 %v2653
        %v3285 = vunpack.c.l.b16 %v2654
        %v3286 = vunpack.c.l.b16 %v2655
        %v3287 = vunpack.c.h.b16 %v2655
        %v3288 = vunpack.c.l.b16 %v2656
        %v3289 = vunpack.c.h.b16 %v2656
        %v3290 = vunpack.c.l.b16 %v2657
        %v3291 = vunpack.c.h.b16 %v2657
        %v3292 = vunpack.c.l.b16 %v2658
        %v3293 = vunpack.c.h.b16 %v2658
        %v3294 = vunpack.c.l.b16 %v2659
        %v3295 = vunpack.c.h.b16 %v2659
        %v3296 = vunpack.c.l.b16 %v2660
        %v3297 = vunpack.c.h.b16 %v2660
        %v3298 = vunpack.c.l.b16 %v2661
        %v3299 = vunpack.c.l.b16 %v2662
        %v3300 = vunpack.c.h.b16 %v2662
        %v3301 = vunpack.c.l.b16 %v2663
        %v3302 = vunpack.c.h.b16 %v2663
        %v3303 = vunpack.c.l.b16 %v2664
        %v3304 = vunpack.c.h.b16 %v2664
        %v3305 = vunpack.c.l.b16 %v2665
        %v3306 = vunpack.c.h.b16 %v2665
        %v3307 = vunpack.c.l.b16 %v2666
        %v3308 = vunpack.c.h.b16 %v2666
        %v3309 = vunpack.c.l.b16 %v2667
        %v3310 = vunpack.c.h.b16 %v2667
        %v3311 = vunpack.c.l.b16 %v2668
        %v3312 = vunpack.c.l.b16 %v2669
        %v3313 = vunpack.c.h.b16 %v2669
        %v3314 = vunpack.c.l.b16 %v2670
        %v3315 = vunpack.c.h.b16 %v2670
        %v3316 = vunpack.c.l.b16 %v2671
        %v3317 = vunpack.c.h.b16 %v2671
        %v3318 = vunpack.c.l.b16 %v2672
        %v3319 = vunpack.c.h.b16 %v2672
        %v3320 = vunpack.c.l.b16 %v2673
        %v3321 = vunpack.c.h.b16 %v2673
        %v3322 = vunpack.c.l.b16 %v2674
        %v3323 = vunpack.c.h.b16 %v2674
        %v3324 = vunpack.c.l.b16 %v2675
        %v3325 = vunpack.c.l.b16 %v2676
        %v3326 = vunpack.c.h.b16 %v2676
        %v3327 = vunpack.c.l.b16 %v2677
        %v3328 = vunpack.c.h.b16 %v2677
        %v3329 = vunpack.c.l.b16 %v2678
        %v3330 = vunpack.c.h.b16 %v2678
        %v3331 = vunpack.c.l.b16 %v2679
        %v3332 = vunpack.c.h.b16 %v2679
        %v3333 = vunpack.c.l.b16 %v2680
        %v3334 = vunpack.c.h.b16 %v2680
        %v3335 = vunpack.c.l.b16 %v2681
        %v3336 = vunpack.c.h.b16 %v2681
        %v3337 = vunpack.c.l.b16 %v2682
        %v3338 = vunpack.c.l.b16 %v2683
        %v3339 = vunpack.c.h.b16 %v2683
        %v3340 = vunpack.c.l.b16 %v2684
        %v3341 = vunpack.c.h.b16 %v2684
        %v3342 = vunpack.c.l.b16 %v2685
        %v3343 = vunpack.c.h.b16 %v2685
        %v3344 = vunpack.c.l.b16 %v2686
        %v3345 = vunpack.c.h.b16 %v2686
        %v3346 = vunpack.c.l.b16 %v2687
        %v3347 = vunpack.c.h.b16 %v2687
        %v3348 = vunpack.c.l.b16 %v2688
        %v3349 = vunpack.c.h.b16 %v2688
        %v3350 = vunpack.c.l.b16 %v2689
        %v3351 = vunpack.c.l.b16 %v2690
        %v3352 = vunpack.c.h.b16 %v2690
        %v3353 = vunpack.c.l.b16 %v2691
        %v3354 = vunpack.c.h.b16 %v2691
        %v3355 = vunpack.c.l.b16 %v2692
        %v3356 = vunpack.c.h.b16 %v2692
        %v3357 = vunpack.c.l.b16 %v2693
        %v3358 = vunpack.c.h.b16 %v2693
        %v3359 = vunpack.c.l.b16 %v2694
        %v3360 = vunpack.c.h.b16 %v2694
        %v3361 = vunpack.c.l.b16 %v2695
        %v3362 = vunpack.c.h.b16 %v2695
        %v3363 = vunpack.c.l.b16 %v2696
        %v3364 = vunpack.c.l.b16 %v2697
        %v3365 = vunpack.c.h.b16 %v2697
        %v3366 = vunpack.c.l.b16 %v2698
        %v3367 = vunpack.c.h.b16 %v2698
        %v3368 = vunpack.c.l.b16 %v2699
        %v3369 = vunpack.c.h.b16 %v2699
        %v3370 = vunpack.c.l.b16 %v2700
        %v3371 = vunpack.c.h.b16 %v2700
        %v3372 = vunpack.c.l.b16 %v2701
        %v3373 = vunpack.c.h.b16 %v2701
        %v3374 = vunpack.c.l.b16 %v2702
        %v3375 = vunpack.c.h.b16 %v2702
        %v3376 = vunpack.c.l.b16 %v2703
        %v3377 = vunpack.c.l.b16 %v2704
        %v3378 = vunpack.c.h.b16 %v2704
        %v3379 = vunpack.c.l.b16 %v2705
        %v3380 = vunpack.c.h.b16 %v2705
        %v3381 = vunpack.c.l.b16 %v2706
        %v3382 = vunpack.c.h.b16 %v2706
        %v3383 = vunpack.c.l.b16 %v2707
        %v3384 = vunpack.c.h.b16 %v2707
        %v3385 = vunpack.c.l.b16 %v2708
        %v3386 = vunpack.c.h.b16 %v2708
        %v3387 = vunpack.c.l.b16 %v2709
        %v3388 = vunpack.c.h.b16 %v2709
        %v3389 = vunpack.c.l.b16 %v2710
        %v3390 = vunpack.c.l.b16 %v2711
        %v3391 = vunpack.c.h.b16 %v2711
        %v3392 = vunpack.c.l.b16 %v2712
        %v3393 = vunpack.c.h.b16 %v2712
        %v3394 = vunpack.c.l.b16 %v2713
        %v3395 = vunpack.c.h.b16 %v2713
        %v3396 = vunpack.c.l.b16 %v2714
        %v3397 = vunpack.c.h.b16 %v2714
        %v3398 = vunpack.c.l.b16 %v2715
        %v3399 = vunpack.c.h.b16 %v2715
        %v3400 = vunpack.c.l.b16 %v2716
        %v3401 = vunpack.c.h.b16 %v2716
        %v3402 = vunpack.c.l.b16 %v2717
        %v3403 = vunpack.c.l.b16 %v2718
        %v3404 = vunpack.c.h.b16 %v2718
        %v3405 = vunpack.c.l.b16 %v2719
        %v3406 = vunpack.c.h.b16 %v2719
        %v3407 = vunpack.c.l.b16 %v2720
        %v3408 = vunpack.c.h.b16 %v2720
        %v3409 = vunpack.c.l.b16 %v2721
        %v3410 = vunpack.c.h.b16 %v2721
        %v3411 = vunpack.c.l.b16 %v2722
        %v3412 = vunpack.c.h.b16 %v2722
        %v3413 = vunpack.c.l.b16 %v2723
        %v3414 = vunpack.c.h.b16 %v2723
        %v3415 = vunpack.c.l.b16 %v2724
        %v3416 = vunpack.c.l.b16 %v2725
        %v3417 = vunpack.c.h.b16 %v2725
        %v3418 = vunpack.c.l.b16 %v2726
        %v3419 = vunpack.c.h.b16 %v2726
        %v3420 = vunpack.c.l.b16 %v2727
        %v3421 = vunpack.c.h.b16 %v2727
        %v3422 = vunpack.c.l.b16 %v2728
        %v3423 = vunpack.c.h.b16 %v2728
        %v3424 = vunpack.c.l.b16 %v2729
        %v3425 = vunpack.c.h.b16 %v2729
        %v3426 = vunpack.c.l.b16 %v2730
        %v3427 = vunpack.c.h.b16 %v2730
        %v3428 = vunpack.c.l.b16 %v2731
        %v3429 = vunpack.c.l.b16 %v2732
        %v3430 = vunpack.c.h.b16 %v2732
        %v3431 = vunpack.c.l.b16 %v2733
        %v3432 = vunpack.c.h.b16 %v2733
        %v3433 = vunpack.c.l.b16 %v2734
        %v3434 = vunpack.c.h.b16 %v2734
        %v3435 = vunpack.c.l.b16 %v2735
        %v3436 = vunpack.c.h.b16 %v2735
        %v3437 = vunpack.c.l.b16 %v2736
        %v3438 = vunpack.c.h.b16 %v2736
        %v3439 = vunpack.c.l.b16 %v2737
        %v3440 = vunpack.c.h.b16 %v2737
        %v3441 = vunpack.c.l.b16 %v2738
        %v3442 = vunpack.c.l.b16 %v2739
        %v3443 = vunpack.c.h.b16 %v2739
        %v3444 = vunpack.c.l.b16 %v2740
        %v3445 = vunpack.c.h.b16 %v2740
        %v3446 = vunpack.c.l.b16 %v2741
        %v3447 = vunpack.c.h.b16 %v2741
        %v3448 = vunpack.c.l.b16 %v2742
        %v3449 = vunpack.c.h.b16 %v2742
        %v3450 = vunpack.c.l.b16 %v2743
        %v3451 = vunpack.c.h.b16 %v2743
        %v3452 = vunpack.c.l.b16 %v2744
        %v3453 = vunpack.c.h.b16 %v2744
        %v3454 = vunpack.c.l.b16 %v2745
        %v3455 = vpack.c.b16 %v3052, %v3039
        %v3456 = vpack.c.b16 %v3053, %v3040
        %v3457 = vpack.c.b16 %v3054, %v3041
        %v3458 = vpack.c.b16 %v3055, %v3042
        %v3459 = vpack.c.b16 %v3056, %v3043
        %v3460 = vpack.c.b16 %v3057, %v3044
        %v3461 = vpack.c.b16 %v3058, %v3045
        %v3462 = vpack.c.b16 %v3059, %v3046
        %v3463 = vpack.c.b16 %v3060, %v3047
        %v3464 = vpack.c.b16 %v3061, %v3048
        %v3465 = vpack.c.b16 %v3062, %v3049
        %v3466 = vpack.c.b16 %v3063, %v3050
        %v3467 = vpack.c.b16 %v3064, %v3051
        %v3468 = vpack.c.b16 %v3078, %v3065
        %v3469 = vpack.c.b16 %v3079, %v3066
        %v3470 = vpack.c.b16 %v3080, %v3067
        %v3471 = vpack.c.b16 %v3081, %v3068
        %v3472 = vpack.c.b16 %v3082, %v3069
        %v3473 = vpack.c.b16 %v3083, %v3070
        %v3474 = vpack.c.b16 %v3084, %v3071
        %v3475 = vpack.c.b16 %v3085, %v3072
        %v3476 = vpack.c.b16 %v3086, %v3073
        %v3477 = vpack.c.b16 %v3087, %v3074
        %v3478 = vpack.c.b16 %v3088, %v3075
        %v3479 = vpack.c.b16 %v3089, %v3076
        %v3480 = vpack.c.b16 %v3090, %v3077
        %v3481 = vpack.c.b16 %v3104, %v3091
        %v3482 = vpack.c.b16 %v3105, %v3092
        %v3483 = vpack.c.b16 %v3106, %v3093
        %v3484 = vpack.c.b16 %v3107, %v3094
        %v3485 = vpack.c.b16 %v3108, %v3095
        %v3486 = vpack.c.b16 %v3109, %v3096
        %v3487 = vpack.c.b16 %v3110, %v3097
        %v3488 = vpack.c.b16 %v3111, %v3098
        %v3489 = vpack.c.b16 %v3112, %v3099
        %v3490 = vpack.c.b16 %v3113, %v3100
        %v3491 = vpack.c.b16 %v3114, %v3101
        %v3492 = vpack.c.b16 %v3115, %v3102
        %v3493 = vpack.c.b16 %v3116, %v3103
        %v3494 = vpack.c.b16 %v3130, %v3117
        %v3495 = vpack.c.b16 %v3131, %v3118
        %v3496 = vpack.c.b16 %v3132, %v3119
        %v3497 = vpack.c.b16 %v3133, %v3120
        %v3498 = vpack.c.b16 %v3134, %v3121
        %v3499 = vpack.c.b16 %v3135, %v3122
        %v3500 = vpack.c.b16 %v3136, %v3123
        %v3501 = vpack.c.b16 %v3137, %v3124
        %v3502 = vpack.c.b16 %v3138, %v3125
        %v3503 = vpack.c.b16 %v3139, %v3126
        %v3504 = vpack.c.b16 %v3140, %v3127
        %v3505 = vpack.c.b16 %v3141, %v3128
        %v3506 = vpack.c.b16 %v3142, %v3129
        %v3507 = vpack.c.b16 %v3156, %v3143
        %v3508 = vpack.c.b16 %v3157, %v3144
        %v3509 = vpack.c.b16 %v3158, %v3145
        %v3510 = vpack.c.b16 %v3159, %v3146
        %v3511 = vpack.c.b16 %v3160, %v3147
        %v3512 = vpack.c.b16 %v3161, %v3148
        %v3513 = vpack.c.b16 %v3162, %v3149
        %v3514 = vpack.c.b16 %v3163, %v3150
        %v3515 = vpack.c.b16 %v3164, %v3151
        %v3516 = vpack.c.b16 %v3165, %v3152
        %v3517 = vpack.c.b16 %v3166, %v3153
        %v3518 = vpack.c.b16 %v3167, %v3154
        %v3519 = vpack.c.b16 %v3168, %v3155
        %v3520 = vpack.c.b16 %v3182, %v3169
        %v3521 = vpack.c.b16 %v3183, %v3170
        %v3522 = vpack.c.b16 %v3184, %v3171
        %v3523 = vpack.c.b16 %v3185, %v3172
        %v3524 = vpack.c.b16 %v3186, %v3173
        %v3525 = vpack.c.b16 %v3187, %v3174
        %v3526 = vpack.c.b16 %v3188, %v3175
        %v3527 = vpack.c.b16 %v3189, %v3176
        %v3528 = vpack.c.b16 %v3190, %v3177
        %v3529 = vpack.c.b16 %v3191, %v3178
        %v3530 = vpack.c.b16 %v3192, %v3179
        %v3531 = vpack.c.b16 %v3193, %v3180
        %v3532 = vpack.c.b16 %v3194, %v3181
        %v3533 = vpack.c.b16 %v3208, %v3195
        %v3534 = vpack.c.b16 %v3209, %v3196
        %v3535 = vpack.c.b16 %v3210, %v3197
        %v3536 = vpack.c.b16 %v3211, %v3198
        %v3537 = vpack.c.b16 %v3212, %v3199
        %v3538 = vpack.c.b16 %v3213, %v3200
        %v3539 = vpack.c.b16 %v3214, %v3201
        %v3540 = vpack.c.b16 %v3215, %v3202
        %v3541 = vpack.c.b16 %v3216, %v3203
        %v3542 = vpack.c.b16 %v3217, %v3204
        %v3543 = vpack.c.b16 %v3218, %v3205
        %v3544 = vpack.c.b16 %v3219, %v3206
        %v3545 = vpack.c.b16 %v3220, %v3207
        %v3546 = vpack.c.b16 %v3234, %v3221
        %v3547 = vpack.c.b16 %v3235, %v3222
        %v3548 = vpack.c.b16 %v3236, %v3223
        %v3549 = vpack.c.b16 %v3237, %v3224
        %v3550 = vpack.c.b16 %v3238, %v3225
        %v3551 = vpack.c.b16 %v3239, %v3226
        %v3552 = vpack.c.b16 %v3240, %v3227
        %v3553 = vpack.c.b16 %v3241, %v3228
        %v3554 = vpack.c.b16 %v3242, %v3229
        %v3555 = vpack.c.b16 %v3243, %v3230
        %v3556 = vpack.c.b16 %v3244, %v3231
        %v3557 = vpack.c.b16 %v3245, %v3232
        %v3558 = vpack.c.b16 %v3246, %v3233
        %v3559 = vpack.c.b16 %v3260, %v3247
        %v3560 = vpack.c.b16 %v3261, %v3248
        %v3561 = vpack.c.b16 %v3262, %v3249
        %v3562 = vpack.c.b16 %v3263, %v3250
        %v3563 = vpack.c.b16 %v3264, %v3251
        %v3564 = vpack.c.b16 %v3265, %v3252
        %v3565 = vpack.c.b16 %v3266, %v3253
        %v3566 = vpack.c.b16 %v3267, %v3254
        %v3567 = vpack.c.b16 %v3268, %v3255
        %v3568 = vpack.c.b16 %v3269, %v3256
        %v3569 = vpack.c.b16 %v3270, %v3257
        %v3570 = vpack.c.b16 %v3271, %v3258
        %v3571 = vpack.c.b16 %v3272, %v3259
        %v3572 = vpack.c.b16 %v3286, %v3273
        %v3573 = vpack.c.b16 %v3287, %v3274
        %v3574 = vpack.c.b16 %v3288, %v3275
        %v3575 = vpack.c.b16 %v3289, %v3276
        %v3576 = vpack.c.b16 %v3290, %v3277
        %v3577 = vpack.c.b16 %v3291, %v3278
        %v3578 = vpack.c.b16 %v3292, %v3279
        %v3579 = vpack.c.b16 %v3293, %v3280
        %v3580 = vpack.c.b16 %v3294, %v3281
        %v3581 = vpack.c.b16 %v3295, %v3282
        %v3582 = vpack.c.b16 %v3296, %v3283
        %v3583 = vpack.c.b16 %v3297, %v3284
        %v3584 = vpack.c.b16 %v3298, %v3285
        %v3585 = vpack.c.b16 %v3312, %v3299
        %v3586 = vpack.c.b16 %v3313, %v3300
        %v3587 = vpack.c.b16 %v3314, %v3301
        %v3588 = vpack.c.b16 %v3315, %v3302
        %v3589 = vpack.c.b16 %v3316, %v3303
        %v3590 = vpack.c.b16 %v3317, %v3304
        %v3591 = vpack.c.b16 %v3318, %v3305
        %v3592 = vpack.c.b16 %v3319, %v3306
        %v3593 = vpack.c.b16 %v3320, %v3307
        %v3594 = vpack.c.b16 %v3321, %v3308
        %v3595 = vpack.c.b16 %v3322, %v3309
        %v3596 = vpack.c.b16 %v3323, %v3310
        %v3597 = vpack.c.b16 %v3324, %v3311
        %v3598 = vpack.c.b16 %v3338, %v3325
        %v3599 = vpack.c.b16 %v3339, %v3326
        %v3600 = vpack.c.b16 %v3340, %v3327
        %v3601 = vpack.c.b16 %v3341, %v3328
        %v3602 = vpack.c.b16 %v3342, %v3329
        %v3603 = vpack.c.b16 %v3343, %v3330
        %v3604 = vpack.c.b16 %v3344, %v3331
        %v3605 = vpack.c.b16 %v3345, %v3332
        %v3606 = vpack.c.b16 %v3346, %v3333
        %v3607 = vpack.c.b16 %v3347, %v3334
        %v3608 = vpack.c.b16 %v3348, %v3335
        %v3609 = vpack.c.b16 %v3349, %v3336
        %v3610 = vpack.c.b16 %v3350, %v3337
        %v3611 = vpack.c.b16 %v3364, %v3351
        %v3612 = vpack.c.b16 %v3365, %v3352
        %v3613 = vpack.c.b16 %v3366, %v3353
        %v3614 = vpack.c.b16 %v3367, %v3354
        %v3615 = vpack.c.b16 %v3368, %v3355
        %v3616 = vpack.c.b16 %v3369, %v3356
        %v3617 = vpack.c.b16 %v3370, %v3357
        %v3618 = vpack.c.b16 %v3371, %v3358
        %v3619 = vpack.c.b16 %v3372, %v3359
        %v3620 = vpack.c.b16 %v3373, %v3360
        %v3621 = vpack.c.b16 %v3374, %v3361
        %v3622 = vpack.c.b16 %v3375, %v3362
        %v3623 = vpack.c.b16 %v3376, %v3363
        %v3624 = vpack.c.b16 %v3390, %v3377
        %v3625 = vpack.c.b16 %v3391, %v3378
        %v3626 = vpack.c.b16 %v3392, %v3379
        %v3627 = vpack.c.b16 %v3393, %v3380
        %v3628 = vpack.c.b16 %v3394, %v3381
        %v3629 = vpack.c.b16 %v3395, %v3382
        %v3630 = vpack.c.b16 %v3396, %v3383
        %v3631 = vpack.c.b16 %v3397, %v3384
        %v3632 = vpack.c.b16 %v3398, %v3385
        %v3633 = vpack.c.b16 %v3399, %v3386
        %v3634 = vpack.c.b16 %v3400, %v3387
        %v3635 = vpack.c.b16 %v3401, %v3388
        %v3636 = vpack.c.b16 %v3402, %v3389
        %v3637 = vpack.c.b16 %v3416, %v3403
        %v3638 = vpack.c.b16 %v3417, %v3404
        %v3639 = vpack.c.b16 %v3418, %v3405
        %v3640 = vpack.c.b16 %v3419, %v3406
        %v3641 = vpack.c.b16 %v3420, %v3407
        %v3642 = vpack.c.b16 %v3421, %v3408
        %v3643 = vpack.c.b16 %v3422, %v3409
        %v3644 = vpack.c.b16 %v3423, %v3410
        %v3645 = vpack.c.b16 %v3424, %v3411
        %v3646 = vpack.c.b16 %v3425, %v3412
        %v3647 = vpack.c.b16 %v3426, %v3413
        %v3648 = vpack.c.b16 %v3427, %v3414
        %v3649 = vpack.c.b16 %v3428, %v3415
        %v3650 = vpack.c.b16 %v3442, %v3429
        %v3651 = vpack.c.b16 %v3443, %v3430
        %v3652 = vpack.c.b16 %v3444, %v3431
        %v3653 = vpack.c.b16 %v3445, %v3432
        %v3654 = vpack.c.b16 %v3446, %v3433
        %v3655 = vpack.c.b16 %v3447, %v3434
        %v3656 = vpack.c.b16 %v3448, %v3435
        %v3657 = vpack.c.b16 %v3449, %v3436
        %v3658 = vpack.c.b16 %v3450, %v3437
        %v3659 = vpack.c.b16 %v3451, %v3438
        %v3660 = vpack.c.b16 %v3452, %v3439
        %v3661 = vpack.c.b16 %v3453, %v3440
        %v3662 = vpack.c.b16 %v3454, %v3441
        %3871 = vmatprep.subr.bf16.mxu0 %v3456
        %3872 = vmatpush1.bf16.msra.mxu0 %v3455
        %3873 = vmatprep.subr.bf16.mxu0 %v3469
        %3874 = vmatpush1.bf16.msra.mxu0 %v3468
        %3875 = vmatprep.subr.bf16.mxu0 %v3482
        %3876 = vmatpush1.bf16.msra.mxu0 %v3481
        %3877 = vmatprep.subr.bf16.mxu0 %v3495
        %3878 = vmatpush1.bf16.msra.mxu0 %v3494
        %3879 = vmatprep.subr.bf16.mxu0 %v3508
        %3880 = vmatpush1.bf16.msra.mxu0 %v3507
        %3881 = vmatprep.subr.bf16.mxu0 %v3521
        %3882 = vmatpush1.bf16.msra.mxu0 %v3520
        %3883 = vmatprep.subr.bf16.mxu0 %v3534
        %3884 = vmatpush1.bf16.msra.mxu0 %v3533
        %3885 = vmatprep.subr.bf16.mxu0 %v3547
        %3886 = vmatpush1.bf16.msra.mxu0 %v3546
        %3887 = vmatprep.subr.bf16.mxu0 %v3560
        %3888 = vmatpush1.bf16.msra.mxu0 %v3559
        %3889 = vmatprep.subr.bf16.mxu0 %v3573
        %3890 = vmatpush1.bf16.msra.mxu0 %v3572
        %3891 = vmatprep.subr.bf16.mxu0 %v3586
        %3892 = vmatpush1.bf16.msra.mxu0 %v3585
        %3893 = vmatprep.subr.bf16.mxu0 %v3599
        %3894 = vmatpush1.bf16.msra.mxu0 %v3598
        %3895 = vmatprep.subr.bf16.mxu0 %v3612
        %3896 = vmatpush1.bf16.msra.mxu0 %v3611
        %3897 = vmatprep.subr.bf16.mxu0 %v3625
        %3898 = vmatpush1.bf16.msra.mxu0 %v3624
        %3899 = vmatprep.subr.bf16.mxu0 %v3638
        %3900 = vmatpush1.bf16.msra.mxu0 %v3637
        %3901 = vmatprep.subr.bf16.mxu0 %v3651
        %3902 = vmatpush1.bf16.msra.mxu0 %v3650
        %3903 = vmatprep.mubr.bf16.mxu0 %v2521
        %3904 = vmatmul.mubr.bf16.gmra.mrb[0].mxu0 %v2520
        %v3905 = vpop.f32.mrb[0].mxu0
        %v3906 = vadd.f32 %v2753, %v3905
        %v3907 = vpop.f32.mrb[0].mxu0
        %v3908 = vadd.f32 %v2757, %v3907
        %v3909 = vpop.f32.mrb[0].mxu0
        %v3910 = vadd.f32 %v2753, %v3909
        %v3911 = vpop.f32.mrb[0].mxu0
        %v3912 = vadd.f32 %v2757, %v3911
        %3913 = vdwg.mxu0
        %3914 = vmatprep.subr.bf16.mxu0 %v3458
        %3915 = vmatpush1.bf16.msra.mxu0 %v3457
        %3916 = vmatprep.subr.bf16.mxu0 %v3471
        %3917 = vmatpush1.bf16.msra.mxu0 %v3470
        %3918 = vmatprep.subr.bf16.mxu0 %v3484
        %3919 = vmatpush1.bf16.msra.mxu0 %v3483
        %3920 = vmatprep.subr.bf16.mxu0 %v3497
        %3921 = vmatpush1.bf16.msra.mxu0 %v3496
        %3922 = vmatprep.subr.bf16.mxu0 %v3510
        %3923 = vmatpush1.bf16.msra.mxu0 %v3509
        %3924 = vmatprep.subr.bf16.mxu0 %v3523
        %3925 = vmatpush1.bf16.msra.mxu0 %v3522
        %3926 = vmatprep.subr.bf16.mxu0 %v3536
        %3927 = vmatpush1.bf16.msra.mxu0 %v3535
        %3928 = vmatprep.subr.bf16.mxu0 %v3549
        %3929 = vmatpush1.bf16.msra.mxu0 %v3548
        %3930 = vmatprep.subr.bf16.mxu0 %v3562
        %3931 = vmatpush1.bf16.msra.mxu0 %v3561
        %3932 = vmatprep.subr.bf16.mxu0 %v3575
        %3933 = vmatpush1.bf16.msra.mxu0 %v3574
        %3934 = vmatprep.subr.bf16.mxu0 %v3588
        %3935 = vmatpush1.bf16.msra.mxu0 %v3587
        %3936 = vmatprep.subr.bf16.mxu0 %v3601
        %3937 = vmatpush1.bf16.msra.mxu0 %v3600
        %3938 = vmatprep.subr.bf16.mxu0 %v3614
        %3939 = vmatpush1.bf16.msra.mxu0 %v3613
        %3940 = vmatprep.subr.bf16.mxu0 %v3627
        %3941 = vmatpush1.bf16.msra.mxu0 %v3626
        %3942 = vmatprep.subr.bf16.mxu0 %v3640
        %3943 = vmatpush1.bf16.msra.mxu0 %v3639
        %3944 = vmatprep.subr.bf16.mxu0 %v3653
        %3945 = vmatpush1.bf16.msra.mxu0 %v3652
        %3946 = vmatprep.mubr.bf16.mxu0 %v2521
        %3947 = vmatmul.mubr.bf16.gmra.mrb[0].mxu0 %v2520
        %v3948 = vpop.f32.mrb[0].mxu0
        %v3949 = vadd.f32 %v2761, %v3948
        %v3950 = vpop.f32.mrb[0].mxu0
        %v3951 = vadd.f32 %v2765, %v3950
        %v3952 = vpop.f32.mrb[0].mxu0
        %v3953 = vadd.f32 %v2761, %v3952
        %v3954 = vpop.f32.mrb[0].mxu0
        %v3955 = vadd.f32 %v2765, %v3954
        %3956 = vdwg.mxu0
        %3957 = vmatprep.subr.bf16.mxu0 %v3460
        %3958 = vmatpush1.bf16.msra.mxu0 %v3459
        %3959 = vmatprep.subr.bf16.mxu0 %v3473
        %3960 = vmatpush1.bf16.msra.mxu0 %v3472
        %3961 = vmatprep.subr.bf16.mxu0 %v3486
        %3962 = vmatpush1.bf16.msra.mxu0 %v3485
        %3963 = vmatprep.subr.bf16.mxu0 %v3499
        %3964 = vmatpush1.bf16.msra.mxu0 %v3498
        %3965 = vmatprep.subr.bf16.mxu0 %v3512
        %3966 = vmatpush1.bf16.msra.mxu0 %v3511
        %3967 = vmatprep.subr.bf16.mxu0 %v3525
        %3968 = vmatpush1.bf16.msra.mxu0 %v3524
        %3969 = vmatprep.subr.bf16.mxu0 %v3538
        %3970 = vmatpush1.bf16.msra.mxu0 %v3537
        %3971 = vmatprep.subr.bf16.mxu0 %v3551
        %3972 = vmatpush1.bf16.msra.mxu0 %v3550
        %3973 = vmatprep.subr.bf16.mxu0 %v3564
        %3974 = vmatpush1.bf16.msra.mxu0 %v3563
        %3975 = vmatprep.subr.bf16.mxu0 %v3577
        %3976 = vmatpush1.bf16.msra.mxu0 %v3576
        %3977 = vmatprep.subr.bf16.mxu0 %v3590
        %3978 = vmatpush1.bf16.msra.mxu0 %v3589
        %3979 = vmatprep.subr.bf16.mxu0 %v3603
        %3980 = vmatpush1.bf16.msra.mxu0 %v3602
        %3981 = vmatprep.subr.bf16.mxu0 %v3616
        %3982 = vmatpush1.bf16.msra.mxu0 %v3615
        %3983 = vmatprep.subr.bf16.mxu0 %v3629
        %3984 = vmatpush1.bf16.msra.mxu0 %v3628
        %3985 = vmatprep.subr.bf16.mxu0 %v3642
        %3986 = vmatpush1.bf16.msra.mxu0 %v3641
        %3987 = vmatprep.subr.bf16.mxu0 %v3655
        %3988 = vmatpush1.bf16.msra.mxu0 %v3654
        %3989 = vmatprep.mubr.bf16.mxu0 %v2521
        %3990 = vmatmul.mubr.bf16.gmra.mrb[0].mxu0 %v2520
        %v3991 = vpop.f32.mrb[0].mxu0
        %v3992 = vadd.f32 %v2769, %v3991
        %v3993 = vpop.f32.mrb[0].mxu0
        %v3994 = vadd.f32 %v2773, %v3993
        %v3995 = vpop.f32.mrb[0].mxu0
        %v3996 = vadd.f32 %v2769, %v3995
        %v3997 = vpop.f32.mrb[0].mxu0
        %v3998 = vadd.f32 %v2773, %v3997
        %3999 = vdwg.mxu0
        %4000 = vmatprep.subr.bf16.mxu0 %v3462
        %4001 = vmatpush1.bf16.msra.mxu0 %v3461
        %4002 = vmatprep.subr.bf16.mxu0 %v3475
        %4003 = vmatpush1.bf16.msra.mxu0 %v3474
        %4004 = vmatprep.subr.bf16.mxu0 %v3488
        %4005 = vmatpush1.bf16.msra.mxu0 %v3487
        %4006 = vmatprep.subr.bf16.mxu0 %v3501
        %4007 = vmatpush1.bf16.msra.mxu0 %v3500
        %4008 = vmatprep.subr.bf16.mxu0 %v3514
        %4009 = vmatpush1.bf16.msra.mxu0 %v3513
        %4010 = vmatprep.subr.bf16.mxu0 %v3527
        %4011 = vmatpush1.bf16.msra.mxu0 %v3526
        %4012 = vmatprep.subr.bf16.mxu0 %v3540
        %4013 = vmatpush1.bf16.msra.mxu0 %v3539
        %4014 = vmatprep.subr.bf16.mxu0 %v3553
        %4015 = vmatpush1.bf16.msra.mxu0 %v3552
        %4016 = vmatprep.subr.bf16.mxu0 %v3566
        %4017 = vmatpush1.bf16.msra.mxu0 %v3565
        %4018 = vmatprep.subr.bf16.mxu0 %v3579
        %4019 = vmatpush1.bf16.msra.mxu0 %v3578
        %4020 = vmatprep.subr.bf16.mxu0 %v3592
        %4021 = vmatpush1.bf16.msra.mxu0 %v3591
        %4022 = vmatprep.subr.bf16.mxu0 %v3605
        %4023 = vmatpush1.bf16.msra.mxu0 %v3604
        %4024 = vmatprep.subr.bf16.mxu0 %v3618
        %4025 = vmatpush1.bf16.msra.mxu0 %v3617
        %4026 = vmatprep.subr.bf16.mxu0 %v3631
        %4027 = vmatpush1.bf16.msra.mxu0 %v3630
        %4028 = vmatprep.subr.bf16.mxu0 %v3644
        %4029 = vmatpush1.bf16.msra.mxu0 %v3643
        %4030 = vmatprep.subr.bf16.mxu0 %v3657
        %4031 = vmatpush1.bf16.msra.mxu0 %v3656
        %4032 = vmatprep.mubr.bf16.mxu0 %v2521
        %4033 = vmatmul.mubr.bf16.gmra.mrb[0].mxu0 %v2520
        %v4034 = vpop.f32.mrb[0].mxu0
        %v4035 = vadd.f32 %v2777, %v4034
        %v4036 = vpop.f32.mrb[0].mxu0
        %v4037 = vadd.f32 %v2781, %v4036
        %v4038 = vpop.f32.mrb[0].mxu0
        %v4039 = vadd.f32 %v2777, %v4038
        %v4040 = vpop.f32.mrb[0].mxu0
        %v4041 = vadd.f32 %v2781, %v4040
        %4042 = vdwg.mxu0
        %4043 = vmatprep.subr.bf16.mxu0 %v3464
        %4044 = vmatpush1.bf16.msra.mxu0 %v3463
        %4045 = vmatprep.subr.bf16.mxu0 %v3477
        %4046 = vmatpush1.bf16.msra.mxu0 %v3476
        %4047 = vmatprep.subr.bf16.mxu0 %v3490
        %4048 = vmatpush1.bf16.msra.mxu0 %v3489
        %4049 = vmatprep.subr.bf16.mxu0 %v3503
        %4050 = vmatpush1.bf16.msra.mxu0 %v3502
        %4051 = vmatprep.subr.bf16.mxu0 %v3516
        %4052 = vmatpush1.bf16.msra.mxu0 %v3515
        %4053 = vmatprep.subr.bf16.mxu0 %v3529
        %4054 = vmatpush1.bf16.msra.mxu0 %v3528
        %4055 = vmatprep.subr.bf16.mxu0 %v3542
        %4056 = vmatpush1.bf16.msra.mxu0 %v3541
        %4057 = vmatprep.subr.bf16.mxu0 %v3555
        %4058 = vmatpush1.bf16.msra.mxu0 %v3554
        %4059 = vmatprep.subr.bf16.mxu0 %v3568
        %4060 = vmatpush1.bf16.msra.mxu0 %v3567
        %4061 = vmatprep.subr.bf16.mxu0 %v3581
        %4062 = vmatpush1.bf16.msra.mxu0 %v3580
        %4063 = vmatprep.subr.bf16.mxu0 %v3594
        %4064 = vmatpush1.bf16.msra.mxu0 %v3593
        %4065 = vmatprep.subr.bf16.mxu0 %v3607
        %4066 = vmatpush1.bf16.msra.mxu0 %v3606
        %4067 = vmatprep.subr.bf16.mxu0 %v3620
        %4068 = vmatpush1.bf16.msra.mxu0 %v3619
        %4069 = vmatprep.subr.bf16.mxu0 %v3633
        %4070 = vmatpush1.bf16.msra.mxu0 %v3632
        %4071 = vmatprep.subr.bf16.mxu0 %v3646
        %4072 = vmatpush1.bf16.msra.mxu0 %v3645
        %4073 = vmatprep.subr.bf16.mxu0 %v3659
        %4074 = vmatpush1.bf16.msra.mxu0 %v3658
        %4075 = vmatprep.mubr.bf16.mxu0 %v2521
        %4076 = vmatmul.mubr.bf16.gmra.mrb[0].mxu0 %v2520
        %v4077 = vpop.f32.mrb[0].mxu0
        %v4078 = vadd.f32 %v2785, %v4077
        %v4079 = vpop.f32.mrb[0].mxu0
        %v4080 = vadd.f32 %v2789, %v4079
        %v4081 = vpop.f32.mrb[0].mxu0
        %v4082 = vadd.f32 %v2785, %v4081
        %v4083 = vpop.f32.mrb[0].mxu0
        %v4084 = vadd.f32 %v2789, %v4083
        %4085 = vdwg.mxu0
        %4086 = vmatprep.subr.bf16.mxu0 %v3466
        %4087 = vmatpush1.bf16.msra.mxu0 %v3465
        %4088 = vmatprep.subr.bf16.mxu0 %v3479
        %4089 = vmatpush1.bf16.msra.mxu0 %v3478
        %4090 = vmatprep.subr.bf16.mxu0 %v3492
        %4091 = vmatpush1.bf16.msra.mxu0 %v3491
        %4092 = vmatprep.subr.bf16.mxu0 %v3505
        %4093 = vmatpush1.bf16.msra.mxu0 %v3504
        %4094 = vmatprep.subr.bf16.mxu0 %v3518
        %4095 = vmatpush1.bf16.msra.mxu0 %v3517
        %4096 = vmatprep.subr.bf16.mxu0 %v3531
        %4097 = vmatpush1.bf16.msra.mxu0 %v3530
        %4098 = vmatprep.subr.bf16.mxu0 %v3544
        %4099 = vmatpush1.bf16.msra.mxu0 %v3543
        %4100 = vmatprep.subr.bf16.mxu0 %v3557
        %4101 = vmatpush1.bf16.msra.mxu0 %v3556
        %4102 = vmatprep.subr.bf16.mxu0 %v3570
        %4103 = vmatpush1.bf16.msra.mxu0 %v3569
        %4104 = vmatprep.subr.bf16.mxu0 %v3583
        %4105 = vmatpush1.bf16.msra.mxu0 %v3582
        %4106 = vmatprep.subr.bf16.mxu0 %v3596
        %4107 = vmatpush1.bf16.msra.mxu0 %v3595
        %4108 = vmatprep.subr.bf16.mxu0 %v3609
        %4109 = vmatpush1.bf16.msra.mxu0 %v3608
        %4110 = vmatprep.subr.bf16.mxu0 %v3622
        %4111 = vmatpush1.bf16.msra.mxu0 %v3621
        %4112 = vmatprep.subr.bf16.mxu0 %v3635
        %4113 = vmatpush1.bf16.msra.mxu0 %v3634
        %4114 = vmatprep.subr.bf16.mxu0 %v3648
        %4115 = vmatpush1.bf16.msra.mxu0 %v3647
        %4116 = vmatprep.subr.bf16.mxu0 %v3661
        %4117 = vmatpush1.bf16.msra.mxu0 %v3660
        %4118 = vmatprep.mubr.bf16.mxu0 %v2521
        %4119 = vmatmul.mubr.bf16.gmra.mrb[0].mxu0 %v2520
        %v4120 = vpop.f32.mrb[0].mxu0
        %v4121 = vadd.f32 %v2793, %v4120
        %v4122 = vpop.f32.mrb[0].mxu0
        %v4123 = vadd.f32 %v2797, %v4122
        %v4124 = vpop.f32.mrb[0].mxu0
        %v4125 = vadd.f32 %v2793, %v4124
        %v4126 = vpop.f32.mrb[0].mxu0
        %v4127 = vadd.f32 %v2797, %v4126
        %4128 = vdwg.mxu0
        %4129 = vmatprep.subr.bf16.mxu0 0
        %4130 = vmatpush1.bf16.msra.mxu0 %v3467
        %4131 = vmatprep.subr.bf16.mxu0 0
        %4132 = vmatpush1.bf16.msra.mxu0 %v3480
        %4133 = vmatprep.subr.bf16.mxu0 0
        %4134 = vmatpush1.bf16.msra.mxu0 %v3493
        %4135 = vmatprep.subr.bf16.mxu0 0
        %4136 = vmatpush1.bf16.msra.mxu0 %v3506
        %4137 = vmatprep.subr.bf16.mxu0 0
        %4138 = vmatpush1.bf16.msra.mxu0 %v3519
        %4139 = vmatprep.subr.bf16.mxu0 0
        %4140 = vmatpush1.bf16.msra.mxu0 %v3532
        %4141 = vmatprep.subr.bf16.mxu0 0
        %4142 = vmatpush1.bf16.msra.mxu0 %v3545
        %4143 = vmatprep.subr.bf16.mxu0 0
        %4144 = vmatpush1.bf16.msra.mxu0 %v3558
        %4145 = vmatprep.subr.bf16.mxu0 0
        %4146 = vmatpush1.bf16.msra.mxu0 %v3571
        %4147 = vmatprep.subr.bf16.mxu0 0
        %4148 = vmatpush1.bf16.msra.mxu0 %v3584
        %4149 = vmatprep.subr.bf16.mxu0 0
        %4150 = vmatpush1.bf16.msra.mxu0 %v3597
        %4151 = vmatprep.subr.bf16.mxu0 0
        %4152 = vmatpush1.bf16.msra.mxu0 %v3610
        %4153 = vmatprep.subr.bf16.mxu0 0
        %4154 = vmatpush1.bf16.msra.mxu0 %v3623
        %4155 = vmatprep.subr.bf16.mxu0 0
        %4156 = vmatpush1.bf16.msra.mxu0 %v3636
        %4157 = vmatprep.subr.bf16.mxu0 0
        %4158 = vmatpush1.bf16.msra.mxu0 %v3649
        %4159 = vmatprep.subr.bf16.mxu0 0
        %4160 = vmatpush1.bf16.msra.mxu0 %v3662
        %4161 = vmatprep.mubr.bf16.mxu0 %v2521
        %4162 = vmatmul.mubr.bf16.gmra.mrb[0].mxu0 %v2520
        %v4163 = vpop.f32.mrb[0].mxu0
        %v4164 = vadd.f32 %v2801, %v4163
        %v4165 = vpop.f32.mrb[0].mxu0
        %v4166 = vpop.f32.mrb[0].mxu0
        %v4167 = vadd.f32 %v2801, %v4166
        %v4168 = vpop.f32.mrb[0].mxu0
        %4169 = vdwg.mxu0
        %v4170 = vmul.f32 %v3906, 0.5
        %v4171 = vmul.f32 %v3908, 0.5
        %v4172 = vmul.f32 %v3949, 0.5
        %v4173 = vmul.f32 %v3951, 0.5
        %v4174 = vmul.f32 %v3992, 0.5
        %v4175 = vmul.f32 %v3994, 0.5
        %v4176 = vmul.f32 %v4035, 0.5
        %v4177 = vmul.f32 %v4037, 0.5
        %v4178 = vmul.f32 %v4078, 0.5
        %v4179 = vmul.f32 %v4080, 0.5
        %v4180 = vmul.f32 %v4121, 0.5
        %v4181 = vmul.f32 %v4123, 0.5
        %v4182 = vmul.f32 %v4164, 0.5
        %v4183 = vmul.f32 %v3910, 0.5
        %v4184 = vmul.f32 %v3912, 0.5
        %v4185 = vmul.f32 %v3953, 0.5
        %v4186 = vmul.f32 %v3955, 0.5
        %v4187 = vmul.f32 %v3996, 0.5
        %v4188 = vmul.f32 %v3998, 0.5
        %v4189 = vmul.f32 %v4039, 0.5
        %v4190 = vmul.f32 %v4041, 0.5
        %v4191 = vmul.f32 %v4082, 0.5
        %v4192 = vmul.f32 %v4084, 0.5
        %v4193 = vmul.f32 %v4125, 0.5
        %v4194 = vmul.f32 %v4127, 0.5
        %v4195 = vmul.f32 %v4167, 0.5
        %v4196 = vtanh.pop %v4170
        %v4197 = vtanh.pop %v4171
        %v4198 = vtanh.pop %v4172
        %v4199 = vtanh.pop %v4173
        %v4200 = vtanh.pop %v4174
        %v4201 = vtanh.pop %v4175
        %v4202 = vtanh.pop %v4176
        %v4203 = vtanh.pop %v4177
        %v4204 = vtanh.pop %v4178
        %v4205 = vtanh.pop %v4179
        %v4206 = vtanh.pop %v4180
        %v4207 = vtanh.pop %v4181
        %v4208 = vtanh.pop %v4182
        %v4209 = vtanh.pop %v4183
        %v4210 = vtanh.pop %v4184
        %v4211 = vtanh.pop %v4185
        %v4212 = vtanh.pop %v4186
        %v4213 = vtanh.pop %v4187
        %v4214 = vtanh.pop %v4188
        %v4215 = vtanh.pop %v4189
        %v4216 = vtanh.pop %v4190
        %v4217 = vtanh.pop %v4191
        %v4218 = vtanh.pop %v4192
        %v4219 = vtanh.pop %v4193
        %v4220 = vtanh.pop %v4194
        %v4221 = vtanh.pop %v4195
        %v4222 = vmul.f32 %v4196, 0.5
        %v4223 = vmul.f32 %v4197, 0.5
        %v4224 = vmul.f32 %v4198, 0.5
        %v4225 = vmul.f32 %v4199, 0.5
        %v4226 = vmul.f32 %v4200, 0.5
        %v4227 = vmul.f32 %v4201, 0.5
        %v4228 = vmul.f32 %v4202, 0.5
        %v4229 = vmul.f32 %v4203, 0.5
        %v4230 = vmul.f32 %v4204, 0.5
        %v4231 = vmul.f32 %v4205, 0.5
        %v4232 = vmul.f32 %v4206, 0.5
        %v4233 = vmul.f32 %v4207, 0.5
        %v4234 = vmul.f32 %v4208, 0.5
        %v4235 = vmul.f32 %v4209, 0.5
        %v4236 = vmul.f32 %v4210, 0.5
        %v4237 = vmul.f32 %v4211, 0.5
        %v4238 = vmul.f32 %v4212, 0.5
        %v4239 = vmul.f32 %v4213, 0.5
        %v4240 = vmul.f32 %v4214, 0.5
        %v4241 = vmul.f32 %v4215, 0.5
        %v4242 = vmul.f32 %v4216, 0.5
        %v4243 = vmul.f32 %v4217, 0.5
        %v4244 = vmul.f32 %v4218, 0.5
        %v4245 = vmul.f32 %v4219, 0.5
        %v4246 = vmul.f32 %v4220, 0.5
        %v4247 = vmul.f32 %v4221, 0.5
        %v4248 = vadd.f32 %v4222, 0.5
        %v4249 = vadd.f32 %v4223, 0.5
        %v4250 = vadd.f32 %v4224, 0.5
        %v4251 = vadd.f32 %v4225, 0.5
        %v4252 = vadd.f32 %v4226, 0.5
        %v4253 = vadd.f32 %v4227, 0.5
        %v4254 = vadd.f32 %v4228, 0.5
        %v4255 = vadd.f32 %v4229, 0.5
        %v4256 = vadd.f32 %v4230, 0.5
        %v4257 = vadd.f32 %v4231, 0.5
        %v4258 = vadd.f32 %v4232, 0.5
        %v4259 = vadd.f32 %v4233, 0.5
        %v4260 = vadd.f32 %v4234, 0.5
        %v4261 = vadd.f32 %v4235, 0.5
        %v4262 = vadd.f32 %v4236, 0.5
        %v4263 = vadd.f32 %v4237, 0.5
        %v4264 = vadd.f32 %v4238, 0.5
        %v4265 = vadd.f32 %v4239, 0.5
        %v4266 = vadd.f32 %v4240, 0.5
        %v4267 = vadd.f32 %v4241, 0.5
        %v4268 = vadd.f32 %v4242, 0.5
        %v4269 = vadd.f32 %v4243, 0.5
        %v4270 = vadd.f32 %v4244, 0.5
        %v4271 = vadd.f32 %v4245, 0.5
        %v4272 = vadd.f32 %v4246, 0.5
        %v4273 = vadd.f32 %v4247, 0.5
        %4274 = vst [vmem:[%s436] sm:$0xff] %v4248
        %4275 = vst [vmem:[%s436 + $0x8] sm:$0xff] %v4249
        %4276 = vst [vmem:[%s436 + $0x10] sm:$0xff] %v4250
        %4277 = vst [vmem:[%s436 + $0x18] sm:$0xff] %v4251
        %4278 = vst [vmem:[%s436 + $0x20] sm:$0xff] %v4252
        %4279 = vst [vmem:[%s436 + $0x28] sm:$0xff] %v4253
        %4280 = vst [vmem:[%s436 + $0x30] sm:$0xff] %v4254
        %4281 = vst [vmem:[%s436 + $0x38] sm:$0xff] %v4255
        %4282 = vst [vmem:[%s436 + $0x40] sm:$0xff] %v4256
        %4283 = vst [vmem:[%s436 + $0x48] sm:$0xff] %v4257
        %4284 = vst [vmem:[%s436 + $0x50] sm:$0xff] %v4258
        %4285 = vst [vmem:[%s436 + $0x58] sm:$0xff] %v4259
        %4286 = vst.msk [vmem:[%s436 + $0x60] sm:$0xff] %vm1673, %v4260
        %4287 = vst [vmem:[%s436 + $0x68] sm:$0xff] %v4261
        %4288 = vst [vmem:[%s436 + $0x70] sm:$0xff] %v4262
        %4289 = vst [vmem:[%s436 + $0x78] sm:$0xff] %v4263
        %4290 = vst [vmem:[%s436 + $0x80] sm:$0xff] %v4264
        %4291 = vst [vmem:[%s436 + $0x88] sm:$0xff] %v4265
        %4292 = vst [vmem:[%s436 + $0x90] sm:$0xff] %v4266
        %4293 = vst [vmem:[%s436 + $0x98] sm:$0xff] %v4267
        %4294 = vst [vmem:[%s436 + $0xa0] sm:$0xff] %v4268
        %4295 = vst [vmem:[%s436 + $0xa8] sm:$0xff] %v4269
        %4296 = vst [vmem:[%s436 + $0xb0] sm:$0xff] %v4270
        %4297 = vst [vmem:[%s436 + $0xb8] sm:$0xff] %v4271
        %4298 = vst [vmem:[%s436 + $0xc0] sm:$0xff] %v4272
        %4299 = vst.msk [vmem:[%s436 + $0xc8] sm:$0xff] %vm1673, %v4273
        %s4300 = sand.u32 %s313, 1
        %s4301 = scalar_lea.sflag [#allocation3], %s4300
        %s4302 = sand.u32 %s313, 1
        %s4303 = smul.addr %s4302, 208
        %s4304 = scalar_lea.vmem [#allocation2], %s4303
        // Predicated region
        $region73: #{denoiser_forward.1} parent=71 // pred_check
          %p4305 = pneg %p323
        $region74: #{denoiser_forward.1} parent=71 // pred_check_branch
          %4307 = sbr.rel (%p4305) target = $region76
        $region75: #{denoiser_forward.1} parent=71 // pred_region
          %s4308 = smul.u32 2, %s27
          %s4310 = ssub.s32 3328, 3328
          %4311 = vsyncadd %s4301, %s4310
          %s4312 = smul.addr %s4308, 13
          %s4313 = smul.addr %s4312, 128
          %s4314 = scalar_lea.hbm %s13, %s4313
          %s4315 = sshll.u32 %s4304, 4
          %s4316 = int_to_ptr.vmem [resolvable:$true] %s4315
          %4321 = dma.vmem_to_hbm [thread:$0]  %s4316, 3328, %s4314, %s4301, 1664, 1664, 104
        $region76: #{denoiser_forward.1} parent=71 // pred_fallthru
          _
      $region72: #{denoiser_forward.1} parent=5 // pred_fallthru
        _
      %p4322 = scmp.le.s32.totalorder 2, %s22
      // Predicated region
      $region77: #{denoiser_forward.1} parent=5 // pred_check
        %p4323 = pneg %p4322
      $region78: #{denoiser_forward.1} parent=5 // pred_check_branch
        %4325 = sbr.rel (%p4323) target = $region80
      $region79: #{denoiser_forward.1} parent=5 // pred_region
        %s4326 = ssub.s32 %s22, 2
        // Predicated region
        $region81: #{denoiser_forward.1} parent=79 // pred_check
          %p4327 = pneg %p329
        $region82: #{denoiser_forward.1} parent=79 // pred_check_branch
          %4329 = sbr.rel (%p4327) target = $region84
        $region83: #{denoiser_forward.1} parent=79 // pred_region
          %s4330 = sand.u32 %s314, 1
          %s4331 = scalar_lea.sflag [#allocation3], %s4330
          %s4332 = sand.u32 %s314, 1
          %s4333 = smul.addr %s4332, 208
          %s4334 = scalar_lea.vmem [#allocation2], %s4333
          %4335 = dma.done %s4331, 3328
        $region84: #{denoiser_forward.1} parent=79 // pred_fallthru
          _
      $region80: #{denoiser_forward.1} parent=5 // pred_fallthru
        _
    $region6: #{denoiser_forward.1} parent=1 // loop_footer
      %s26 = sadd.s32 1, %s22
    $region7: #{denoiser_forward.1} parent=1 // loop_footer_branch
      %21 = sbr.rel target = $region3
    $region8: #{denoiser_forward.1} parent=1 // loop_exit
      _
    %4336 = vsyncpa [#allocation3], 1
    %s4337 = scalar_lea.sflag [#allocation3], 1
    %4338 = vsyncpa %s4337, 1

</llo_original>
